<compile_context>
chip_gen: v7x
topology: tpu7x:2x2x1
jax: 0.10.0
libtpu: 0.0.40
codegen_flags: <defaults>
</compile_context>

<pallas_src>
import functools

import jax
import jax.numpy as jnp
from jax import lax
from jax.experimental import pallas as pl
from jax.experimental.pallas import tpu as pltpu


def resblock_kernel(main_ref, halo_ref, w1_ref, w2_ref, o_ref, strip_ref,
                    *, mm_dtype, fuse_dx):
    # main_ref : (1, TH, W+2, C)   padded rows [t*TH, t*TH+TH)
    # halo_ref : (1, 2,  W+2, C)   padded rows [t*TH+TH, t*TH+TH+2)
    # w1_ref   : (9, C, Cout)           tap-major (ky*3+kx), (Cin, Cout)
    #            or (3, 3C, Cout)       row-major ky, rows ordered kx*C+cin (fused)
    # w2_ref   : (Cout, Cout)           (Cin, Cout)
    # o_ref    : (1, TH*W, Cout)        flattened output rows of this tile
    # strip_ref: (4, W+2, C)            VMEM scratch: bottom boundary strip
    TH = main_ref.shape[1]
    Wp = main_ref.shape[2]
    C = main_ref.shape[3]
    W = Wp - 2

    def conv_block(tap):
        # tap(dy, dx) -> (rows, W, C) slab of the padded window for that tap.
        acc = None
        if fuse_dx:
            # One K=3C dot per row-tap (requires C % 128 == 0 for lane-aligned
            # concatenation); 3 MXU pops / accumulator adds instead of 9.
            for dy in range(3):
                slabs = [tap(dy, dx) for dx in range(3)]
                rows = slabs[0].shape[0]
                op = jnp.concatenate(slabs, axis=-1).reshape(rows * W, 3 * C)
                d = jnp.dot(op.astype(mm_dtype), w1_ref[dy],
                            preferred_element_type=jnp.float32)
                acc = d if acc is None else acc + d
        else:
            for k in range(9):
                dy, dx = divmod(k, 3)
                slab = tap(dy, dx)
                rows = slab.shape[0]
                op = slab.reshape(rows * W, C)
                d = jnp.dot(op.astype(mm_dtype), w1_ref[k],
                            preferred_element_type=jnp.float32)
                acc = d if acc is None else acc + d
        h = jnp.maximum(acc, 0.0)                       # ReLU in f32
        return jnp.dot(h.astype(mm_dtype), w2_ref[...],  # 1x1 conv
                       preferred_element_type=jnp.float32)

    # Bottom boundary strip: last 2 main rows + the 2 halo rows (tiny copy —
    # 4*(W+2)*C elements — replaces the previous full-tile window copy).
    strip_ref[0:2] = main_ref[0, TH - 2:TH]
    strip_ref[2:4] = halo_ref[0]

    # ---- top TH-2 output rows: taps read straight from the input block ----
    if TH > 2:
        y_top = conv_block(lambda dy, dx: main_ref[0, dy:dy + TH - 2, dx:dx + W, :])
        # Residual (exact, in the activation dtype) re-read right before use.
        res_top = main_ref[0, 1:TH - 1, 1:1 + W, :].reshape((TH - 2) * W, C)
        o_ref[0, 0:(TH - 2) * W] = (res_top.astype(jnp.float32) + y_top
                                    ).astype(o_ref.dtype)

    # ---- bottom 2 output rows: taps read from the boundary strip ----------
    y_bot = conv_block(lambda dy, dx: strip_ref[dy:dy + 2, dx:dx + W, :])
    res_bot = strip_ref[1:3, 1:1 + W, :].reshape(2 * W, C)
    o_ref[0, (TH - 2) * W:TH * W] = (res_bot.astype(jnp.float32) + y_bot
                                     ).astype(o_ref.dtype)


def _pick_tile_h(H, W, C, Cout, act_bytes, mm_bytes, out_bytes, budget_bytes,
                 min_tiles=1):
    """Largest even divisor TH of H whose per-step VMEM footprint fits the budget."""
    Wp = W + 2

    def footprint(th):
        main_buf = 2 * th * Wp * C * act_bytes          # double-buffered main rows
        halo_buf = 2 * 2 * Wp * C * act_bytes           # double-buffered halo rows
        out_buf = 2 * th * W * Cout * out_bytes         # double-buffered output
        strip = 4 * Wp * C * act_bytes                  # boundary-strip scratch
        weights = 2 * (9 * C * Cout + Cout * Cout) * mm_bytes  # Pallas double-buffers
        temps = th * W * (3 * Cout * 4 + 4 * C * mm_bytes)     # acc/h/y + patch copies
        return main_buf + halo_buf + out_buf + strip + weights + temps

    divisors = [th for th in range(H, 1, -1) if H % th == 0 and th % 2 == 0]
    if not divisors:
        raise ValueError("H must be even (halo stream uses 2-row blocks)")
    preferred = [th for th in divisors if H // th >= min_tiles] or divisors
    for th in preferred:
        if footprint(th) <= budget_bytes:
            return th, footprint(th)
    th = preferred[-1]            # smallest tile; caller bumps vmem_limit to fit
    return th, footprint(th)


def residual_layer_pallas(x_nchw, w1, w2, *, mm_dtype=jnp.bfloat16,
                          activation_dtype=None):
    """x_nchw: (B, C, H, W); w1: (Cout, Cin, 3, 3); w2: (Cout, Cout, 1, 1).

    mm_dtype controls the matmul-operand dtype (bf16 default; f32 MXU
    accumulation either way).  activation_dtype=None keeps activations (and
    thus the skip connection) in the caller's dtype.
    """
    B, C, H, W = x_nchw.shape
    Cout = w1.shape[0]
    assert C == Cout, "residual add requires in_channels == out_channels"
    assert H % 2 == 0, "halo tiling uses 2-row blocks; H must be even"

    act_dtype = x_nchw.dtype if activation_dtype is None else activation_dtype
    out_dtype = x_nchw.dtype
    act_bytes = jnp.dtype(act_dtype).itemsize
    mm_bytes = jnp.dtype(mm_dtype).itemsize
    out_bytes = jnp.dtype(out_dtype).itemsize

    # ---- generation-aware VMEM budget: ~96 MiB on v5e/v6e, ~48 MiB on v7x --
    try:
        vmem_cap = int(pltpu.get_tpu_info().vmem_capacity_bytes)
    except Exception:
        vmem_cap = 64 * 1024 * 1024
    vmem_limit = min(vmem_cap * 3 // 4, 100 * 1024 * 1024)
    budget = max(vmem_limit - (4 << 20), 8 << 20)

    # Prefer >= 2 row-tiles when B == 1 so both v7x TensorCores get work.
    min_tiles = 2 if B < 2 else 1
    TH, est = _pick_tile_h(H, W, C, Cout, act_bytes, mm_bytes, out_bytes,
                           budget, min_tiles=min_tiles)
    if est > vmem_limit:          # smallest tile still over budget: raise the limit
        vmem_limit = min(vmem_cap, int(est * 1.25))
    vmem_limit = min(vmem_limit, 128 * 1024 * 1024)
    n_t = H // TH
    th_half = TH // 2             # TH is even by construction
    Wp = W + 2

    fuse_dx = (C % 128 == 0)      # lane-aligned dx-tap fusion at production widths

    # ---- plain-JAX glue: layout + a single zero-pad --------------------------
    x_nhwc = jnp.transpose(x_nchw, (0, 2, 3, 1)).astype(act_dtype)   # (B,H,W,C)
    xpad = jnp.pad(x_nhwc, ((0, 0), (1, 1), (1, 1), (0, 0)))         # (B,H+2,W+2,C)

    # OIHW -> (ky, kx, Cin, Cout)
    w1_t = jnp.transpose(w1, (2, 3, 1, 0))
    if fuse_dx:
        w1r = w1_t.reshape(3, 3 * C, Cout).astype(mm_dtype)   # rows: kx*C + cin
    else:
        w1r = w1_t.reshape(9, C, Cout).astype(mm_dtype)       # tap k = ky*3 + kx
    w2r = jnp.transpose(w2.reshape(Cout, Cout)).astype(mm_dtype)     # (Cin, Cout)

    flops = 2 * B * H * W * (9 * C * Cout + Cout * Cout)
    bytes_accessed = (B * (H + 2) * Wp * C * act_bytes
                      + B * H * W * Cout * out_bytes
                      + (9 * C * Cout + Cout * Cout) * mm_bytes)

    kernel = functools.partial(resblock_kernel, mm_dtype=mm_dtype, fuse_dx=fuse_dx)

    out = pl.pallas_call(
        kernel,
        out_shape=jax.ShapeDtypeStruct((B, H * W, Cout), out_dtype),
        grid_spec=pltpu.PrefetchScalarGridSpec(
            num_scalar_prefetch=0,
            grid=(B, n_t),
            in_specs=[
                # main rows of the padded image for this tile
                pl.BlockSpec((1, TH, Wp, C), lambda b, t: (b, t, 0, 0)),
                # 2-row bottom halo — same padded array, different window
                pl.BlockSpec((1, 2, Wp, C),
                             lambda b, t: (b, (t + 1) * th_half, 0, 0)),
                # weights: constant index_map => DMA'd once, stay resident
                pl.BlockSpec(w1r.shape, lambda b, t: (0, 0, 0)),
                pl.BlockSpec(w2r.shape, lambda b, t: (0, 0)),
            ],
            out_specs=pl.BlockSpec((1, TH * W, Cout), lambda b, t: (b, t, 0)),
            scratch_shapes=[pltpu.VMEM((4, Wp, C), act_dtype)],
        ),
        compiler_params=pltpu.CompilerParams(
            dimension_semantics=("parallel", "parallel"),   # megacore on v7x
            vmem_limit_bytes=int(vmem_limit),
        ),
        cost_estimate=pl.CostEstimate(flops=flops, transcendentals=0,
                                      bytes_accessed=bytes_accessed),
    )(xpad, xpad, w1r, w2r)

    return jnp.transpose(out.reshape(B, H, W, Cout), (0, 3, 1, 2))


def residual_layer_ref(x_nchw, w1, w2):
    """Pure-JAX reference matching PyTorch semantics (for verification)."""
    h = lax.conv_general_dilated(
        x_nchw, w1, window_strides=(1, 1), padding=((1, 1), (1, 1)),
        dimension_numbers=("NCHW", "OIHW", "NCHW"),
        precision=lax.Precision.HIGHEST)
    h = jnp.maximum(h, 0.0)
    y = lax.conv_general_dilated(
        h, w2, window_strides=(1, 1), padding=((0, 0), (0, 0)),
        dimension_numbers=("NCHW", "OIHW", "NCHW"),
        precision=lax.Precision.HIGHEST)
    return x_nchw + y


if __name__ == "__main__":
    B, C, H, W = 2, 4, 16, 16
    key = jax.random.PRNGKey(0)
    kx, kw1, kw2, ki1, ki2, ki3 = jax.random.split(key, 6)

    # --- Check 1: exact structural check with small-integer data ------------
    # Every operand/product/sum is exactly representable in bf16/f32, so the
    # default bf16-matmul kernel must match the f32 reference exactly
    # (verifies halo indexing, tap->weight mapping and the residual).
    xi = jax.random.randint(ki1, (B, C, H, W), -3, 4).astype(jnp.float32)
    w1i = jax.random.randint(ki2, (C, C, 3, 3), -2, 3).astype(jnp.float32)
    w2i = jax.random.randint(ki3, (C, C, 1, 1), -2, 3).astype(jnp.float32)
    out_i = jax.block_until_ready(residual_layer_pallas(xi, w1i, w2i))
    ref_i = residual_layer_ref(xi, w1i, w2i)
    assert out_i.shape == (B, C, H, W)
    assert jnp.allclose(out_i, ref_i, atol=1e-5, rtol=0.0)

    # --- Check 2: realistic float data, default (bf16-matmul) config --------
    x = jax.random.normal(kx, (B, C, H, W), dtype=jnp.float32)
    w1 = jax.random.normal(kw1, (C, C, 3, 3), dtype=jnp.float32) * (2.0 / (C * 9)) ** 0.5
    w2 = jax.random.normal(kw2, (C, C, 1, 1), dtype=jnp.float32) * (2.0 / C) ** 0.5
    ref = residual_layer_ref(x, w1, w2)
    out_bf = jax.block_until_ready(residual_layer_pallas(x, w1, w2))
    rel_l2_bf = jnp.linalg.norm(out_bf - ref) / jnp.linalg.norm(ref)
    assert rel_l2_bf < 1e-2, rel_l2_bf

    # --- Check 3: f32-matmul path (same kernel code, f32 operands) ----------
    out_f32 = jax.block_until_ready(
        residual_layer_pallas(x, w1, w2, mm_dtype=jnp.float32))
    rel_l2_f32 = jnp.linalg.norm(out_f32 - ref) / jnp.linalg.norm(ref)
    assert rel_l2_f32 < 1e-2, rel_l2_f32

    print("KERNEL_OK")
</pallas_src>

<mosaic_0001>
module attributes {stable_mosaic.version = 11 : i64} {
  func.func @resblock_kernel(%arg0: i32, %arg1: i32, %arg2: memref<1x16x18x4xf32, #tpu.memory_space<vmem>>, %arg3: memref<1x2x18x4xf32, #tpu.memory_space<vmem>>, %arg4: memref<9x4x4xbf16, #tpu.memory_space<vmem>>, %arg5: memref<4x4xbf16, #tpu.memory_space<vmem>>, %arg6: memref<1x256x4xf32, #tpu.memory_space<vmem>>, %arg7: memref<4x18x4xf32, #tpu.memory_space<vmem>>) attributes {dimension_semantics = [#tpu.dimension_semantics<parallel>, #tpu.dimension_semantics<parallel>], iteration_bounds = array<i64: 2, 1>, scalar_prefetch = 0 : i64, scratch_operands = 1 : i64, tpu.core_type = #tpu.core_type<tc>, window_params = [{transform_indices = @transform_0, window_bounds = array<i64: 1, 16, 18, 4>}, {transform_indices = @transform_1, window_bounds = array<i64: 1, 2, 18, 4>}, {pipeline_mode = #tpu.pipeline_mode<synchronous>, transform_indices = @transform_2, window_bounds = array<i64: 9, 4, 4>}, {pipeline_mode = #tpu.pipeline_mode<synchronous>, transform_indices = @transform_3, window_bounds = array<i64: 4, 4>}, {transform_indices = @transform_4, window_bounds = array<i64: 1, 256, 4>}]} {
    %c0 = arith.constant 0 : index
    %c14 = arith.constant 14 : index
    %c0_0 = arith.constant 0 : index
    %c0_1 = arith.constant 0 : index
    %0 = vector.load %arg2[%c0, %c14, %c0_0, %c0_1] : memref<1x16x18x4xf32, #tpu.memory_space<vmem>>, vector<1x2x18x4xf32>
    %1 = vector.shape_cast %0 : vector<1x2x18x4xf32> to vector<2x18x4xf32>
    %c0_2 = arith.constant 0 : index
    %c0_3 = arith.constant 0 : index
    %c0_4 = arith.constant 0 : index
    %2 = vector.load %arg7[%c0_2, %c0_3, %c0_4] : memref<4x18x4xf32, #tpu.memory_space<vmem>>, vector<2x18x4xf32>
    tpu.vector_store %arg7[%c0_2, %c0_3, %c0_4], %1 {strides = array<i32>} : memref<4x18x4xf32, #tpu.memory_space<vmem>>, vector<2x18x4xf32>,
    %c0_5 = arith.constant 0 : index
    %c0_6 = arith.constant 0 : index
    %c0_7 = arith.constant 0 : index
    %c0_8 = arith.constant 0 : index
    %3 = vector.load %arg3[%c0_5, %c0_6, %c0_7, %c0_8] : memref<1x2x18x4xf32, #tpu.memory_space<vmem>>, vector<1x2x18x4xf32>
    %4 = vector.shape_cast %3 : vector<1x2x18x4xf32> to vector<2x18x4xf32>
    %c2 = arith.constant 2 : index
    %c0_9 = arith.constant 0 : index
    %c0_10 = arith.constant 0 : index
    %5 = vector.load %arg7[%c2, %c0_9, %c0_10] : memref<4x18x4xf32, #tpu.memory_space<vmem>>, vector<2x18x4xf32>
    tpu.vector_store %arg7[%c2, %c0_9, %c0_10], %4 {strides = array<i32>} : memref<4x18x4xf32, #tpu.memory_space<vmem>>, vector<2x18x4xf32>,
    %c0_11 = arith.constant 0 : index
    %c0_12 = arith.constant 0 : index
    %c0_13 = arith.constant 0 : index
    %c0_14 = arith.constant 0 : index
    %6 = vector.load %arg2[%c0_11, %c0_12, %c0_13, %c0_14] : memref<1x16x18x4xf32, #tpu.memory_space<vmem>>, vector<1x14x16x4xf32>
    %7 = vector.shape_cast %6 : vector<1x14x16x4xf32> to vector<14x16x4xf32>
    %8 = vector.shape_cast %7 : vector<14x16x4xf32> to vector<224x4xf32>
    %9 = arith.truncf %8 : vector<224x4xf32> to vector<224x4xbf16>
    %c0_15 = arith.constant 0 : index
    %c0_16 = arith.constant 0 : index
    %c0_17 = arith.constant 0 : index
    %10 = vector.load %arg4[%c0_15, %c0_16, %c0_17] : memref<9x4x4xbf16, #tpu.memory_space<vmem>>, vector<1x4x4xbf16>
    %11 = vector.shape_cast %10 : vector<1x4x4xbf16> to vector<4x4xbf16>
    %cst = arith.constant dense<0.000000e+00> : vector<224x4xf32>
    %12 = tpu.matmul %9, %11, %cst {dimension_numbers = #tpu.dot_dimension_numbers<[1], [0], [0], [1], [0, 0, 1, 1], [], []>} : vector<224x4xbf16>, vector<4x4xbf16>, vector<224x4xf32> -> vector<224x4xf32>
    %c0_18 = arith.constant 0 : index
    %c0_19 = arith.constant 0 : index
    %c1 = arith.constant 1 : index
    %c0_20 = arith.constant 0 : index
    %13 = vector.load %arg2[%c0_18, %c0_19, %c1, %c0_20] : memref<1x16x18x4xf32, #tpu.memory_space<vmem>>, vector<1x14x16x4xf32>
    %14 = vector.shape_cast %13 : vector<1x14x16x4xf32> to vector<14x16x4xf32>
    %15 = vector.shape_cast %14 : vector<14x16x4xf32> to vector<224x4xf32>
    %16 = arith.truncf %15 : vector<224x4xf32> to vector<224x4xbf16>
    %c1_21 = arith.constant 1 : index
    %c0_22 = arith.constant 0 : index
    %c0_23 = arith.constant 0 : index
    %17 = vector.load %arg4[%c1_21, %c0_22, %c0_23] : memref<9x4x4xbf16, #tpu.memory_space<vmem>>, vector<1x4x4xbf16>
    %18 = vector.shape_cast %17 : vector<1x4x4xbf16> to vector<4x4xbf16>
    %cst_24 = arith.constant dense<0.000000e+00> : vector<224x4xf32>
    %19 = tpu.matmul %16, %18, %cst_24 {dimension_numbers = #tpu.dot_dimension_numbers<[1], [0], [0], [1], [0, 0, 1, 1], [], []>} : vector<224x4xbf16>, vector<4x4xbf16>, vector<224x4xf32> -> vector<224x4xf32>
    %20 = arith.addf %12, %19 : vector<224x4xf32>
    %c0_25 = arith.constant 0 : index
    %c0_26 = arith.constant 0 : index
    %c2_27 = arith.constant 2 : index
    %c0_28 = arith.constant 0 : index
    %21 = vector.load %arg2[%c0_25, %c0_26, %c2_27, %c0_28] : memref<1x16x18x4xf32, #tpu.memory_space<vmem>>, vector<1x14x16x4xf32>
    %22 = vector.shape_cast %21 : vector<1x14x16x4xf32> to vector<14x16x4xf32>
    %23 = vector.shape_cast %22 : vector<14x16x4xf32> to vector<224x4xf32>
    %24 = arith.truncf %23 : vector<224x4xf32> to vector<224x4xbf16>
    %c2_29 = arith.constant 2 : index
    %c0_30 = arith.constant 0 : index
    %c0_31 = arith.constant 0 : index
    %25 = vector.load %arg4[%c2_29, %c0_30, %c0_31] : memref<9x4x4xbf16, #tpu.memory_space<vmem>>, vector<1x4x4xbf16>
    %26 = vector.shape_cast %25 : vector<1x4x4xbf16> to vector<4x4xbf16>
    %cst_32 = arith.constant dense<0.000000e+00> : vector<224x4xf32>
    %27 = tpu.matmul %24, %26, %cst_32 {dimension_numbers = #tpu.dot_dimension_numbers<[1], [0], [0], [1], [0, 0, 1, 1], [], []>} : vector<224x4xbf16>, vector<4x4xbf16>, vector<224x4xf32> -> vector<224x4xf32>
    %28 = arith.addf %20, %27 : vector<224x4xf32>
    %c0_33 = arith.constant 0 : index
    %c1_34 = arith.constant 1 : index
    %c0_35 = arith.constant 0 : index
    %c0_36 = arith.constant 0 : index
    %29 = vector.load %arg2[%c0_33, %c1_34, %c0_35, %c0_36] : memref<1x16x18x4xf32, #tpu.memory_space<vmem>>, vector<1x14x16x4xf32>
    %30 = vector.shape_cast %29 : vector<1x14x16x4xf32> to vector<14x16x4xf32>
    %31 = vector.shape_cast %30 : vector<14x16x4xf32> to vector<224x4xf32>
    %32 = arith.truncf %31 : vector<224x4xf32> to vector<224x4xbf16>
    %c3 = arith.constant 3 : index
    %c0_37 = arith.constant 0 : index
    %c0_38 = arith.constant 0 : index
    %33 = vector.load %arg4[%c3, %c0_37, %c0_38] : memref<9x4x4xbf16, #tpu.memory_space<vmem>>, vector<1x4x4xbf16>
    %34 = vector.shape_cast %33 : vector<1x4x4xbf16> to vector<4x4xbf16>
    %cst_39 = arith.constant dense<0.000000e+00> : vector<224x4xf32>
    %35 = tpu.matmul %32, %34, %cst_39 {dimension_numbers = #tpu.dot_dimension_numbers<[1], [0], [0], [1], [0, 0, 1, 1], [], []>} : vector<224x4xbf16>, vector<4x4xbf16>, vector<224x4xf32> -> vector<224x4xf32>
    %36 = arith.addf %28, %35 : vector<224x4xf32>
    %c0_40 = arith.constant 0 : index
    %c1_41 = arith.constant 1 : index
    %c1_42 = arith.constant 1 : index
    %c0_43 = arith.constant 0 : index
    %37 = vector.load %arg2[%c0_40, %c1_41, %c1_42, %c0_43] : memref<1x16x18x4xf32, #tpu.memory_space<vmem>>, vector<1x14x16x4xf32>
    %38 = vector.shape_cast %37 : vector<1x14x16x4xf32> to vector<14x16x4xf32>
    %39 = vector.shape_cast %38 : vector<14x16x4xf32> to vector<224x4xf32>
    %40 = arith.truncf %39 : vector<224x4xf32> to vector<224x4xbf16>
    %c4 = arith.constant 4 : index
    %c0_44 = arith.constant 0 : index
    %c0_45 = arith.constant 0 : index
    %41 = vector.load %arg4[%c4, %c0_44, %c0_45] : memref<9x4x4xbf16, #tpu.memory_space<vmem>>, vector<1x4x4xbf16>
    %42 = vector.shape_cast %41 : vector<1x4x4xbf16> to vector<4x4xbf16>
    %cst_46 = arith.constant dense<0.000000e+00> : vector<224x4xf32>
    %43 = tpu.matmul %40, %42, %cst_46 {dimension_numbers = #tpu.dot_dimension_numbers<[1], [0], [0], [1], [0, 0, 1, 1], [], []>} : vector<224x4xbf16>, vector<4x4xbf16>, vector<224x4xf32> -> vector<224x4xf32>
    %44 = arith.addf %36, %43 : vector<224x4xf32>
    %c0_47 = arith.constant 0 : index
    %c1_48 = arith.constant 1 : index
    %c2_49 = arith.constant 2 : index
    %c0_50 = arith.constant 0 : index
    %45 = vector.load %arg2[%c0_47, %c1_48, %c2_49, %c0_50] : memref<1x16x18x4xf32, #tpu.memory_space<vmem>>, vector<1x14x16x4xf32>
    %46 = vector.shape_cast %45 : vector<1x14x16x4xf32> to vector<14x16x4xf32>
    %47 = vector.shape_cast %46 : vector<14x16x4xf32> to vector<224x4xf32>
    %48 = arith.truncf %47 : vector<224x4xf32> to vector<224x4xbf16>
    %c5 = arith.constant 5 : index
    %c0_51 = arith.constant 0 : index
    %c0_52 = arith.constant 0 : index
    %49 = vector.load %arg4[%c5, %c0_51, %c0_52] : memref<9x4x4xbf16, #tpu.memory_space<vmem>>, vector<1x4x4xbf16>
    %50 = vector.shape_cast %49 : vector<1x4x4xbf16> to vector<4x4xbf16>
    %cst_53 = arith.constant dense<0.000000e+00> : vector<224x4xf32>
    %51 = tpu.matmul %48, %50, %cst_53 {dimension_numbers = #tpu.dot_dimension_numbers<[1], [0], [0], [1], [0, 0, 1, 1], [], []>} : vector<224x4xbf16>, vector<4x4xbf16>, vector<224x4xf32> -> vector<224x4xf32>
    %52 = arith.addf %44, %51 : vector<224x4xf32>
    %c0_54 = arith.constant 0 : index
    %c2_55 = arith.constant 2 : index
    %c0_56 = arith.constant 0 : index
    %c0_57 = arith.constant 0 : index
    %53 = vector.load %arg2[%c0_54, %c2_55, %c0_56, %c0_57] : memref<1x16x18x4xf32, #tpu.memory_space<vmem>>, vector<1x14x16x4xf32>
    %54 = vector.shape_cast %53 : vector<1x14x16x4xf32> to vector<14x16x4xf32>
    %55 = vector.shape_cast %54 : vector<14x16x4xf32> to vector<224x4xf32>
    %56 = arith.truncf %55 : vector<224x4xf32> to vector<224x4xbf16>
    %c6 = arith.constant 6 : index
    %c0_58 = arith.constant 0 : index
    %c0_59 = arith.constant 0 : index
    %57 = vector.load %arg4[%c6, %c0_58, %c0_59] : memref<9x4x4xbf16, #tpu.memory_space<vmem>>, vector<1x4x4xbf16>
    %58 = vector.shape_cast %57 : vector<1x4x4xbf16> to vector<4x4xbf16>
    %cst_60 = arith.constant dense<0.000000e+00> : vector<224x4xf32>
    %59 = tpu.matmul %56, %58, %cst_60 {dimension_numbers = #tpu.dot_dimension_numbers<[1], [0], [0], [1], [0, 0, 1, 1], [], []>} : vector<224x4xbf16>, vector<4x4xbf16>, vector<224x4xf32> -> vector<224x4xf32>
    %60 = arith.addf %52, %59 : vector<224x4xf32>
    %c0_61 = arith.constant 0 : index
    %c2_62 = arith.constant 2 : index
    %c1_63 = arith.constant 1 : index
    %c0_64 = arith.constant 0 : index
    %61 = vector.load %arg2[%c0_61, %c2_62, %c1_63, %c0_64] : memref<1x16x18x4xf32, #tpu.memory_space<vmem>>, vector<1x14x16x4xf32>
    %62 = vector.shape_cast %61 : vector<1x14x16x4xf32> to vector<14x16x4xf32>
    %63 = vector.shape_cast %62 : vector<14x16x4xf32> to vector<224x4xf32>
    %64 = arith.truncf %63 : vector<224x4xf32> to vector<224x4xbf16>
    %c7 = arith.constant 7 : index
    %c0_65 = arith.constant 0 : index
    %c0_66 = arith.constant 0 : index
    %65 = vector.load %arg4[%c7, %c0_65, %c0_66] : memref<9x4x4xbf16, #tpu.memory_space<vmem>>, vector<1x4x4xbf16>
    %66 = vector.shape_cast %65 : vector<1x4x4xbf16> to vector<4x4xbf16>
    %cst_67 = arith.constant dense<0.000000e+00> : vector<224x4xf32>
    %67 = tpu.matmul %64, %66, %cst_67 {dimension_numbers = #tpu.dot_dimension_numbers<[1], [0], [0], [1], [0, 0, 1, 1], [], []>} : vector<224x4xbf16>, vector<4x4xbf16>, vector<224x4xf32> -> vector<224x4xf32>
    %68 = arith.addf %60, %67 : vector<224x4xf32>
    %c0_68 = arith.constant 0 : index
    %c2_69 = arith.constant 2 : index
    %c2_70 = arith.constant 2 : index
    %c0_71 = arith.constant 0 : index
    %69 = vector.load %arg2[%c0_68, %c2_69, %c2_70, %c0_71] : memref<1x16x18x4xf32, #tpu.memory_space<vmem>>, vector<1x14x16x4xf32>
    %70 = vector.shape_cast %69 : vector<1x14x16x4xf32> to vector<14x16x4xf32>
    %71 = vector.shape_cast %70 : vector<14x16x4xf32> to vector<224x4xf32>
    %72 = arith.truncf %71 : vector<224x4xf32> to vector<224x4xbf16>
    %c8 = arith.constant 8 : index
    %c0_72 = arith.constant 0 : index
    %c0_73 = arith.constant 0 : index
    %73 = vector.load %arg4[%c8, %c0_72, %c0_73] : memref<9x4x4xbf16, #tpu.memory_space<vmem>>, vector<1x4x4xbf16>
    %74 = vector.shape_cast %73 : vector<1x4x4xbf16> to vector<4x4xbf16>
    %cst_74 = arith.constant dense<0.000000e+00> : vector<224x4xf32>
    %75 = tpu.matmul %72, %74, %cst_74 {dimension_numbers = #tpu.dot_dimension_numbers<[1], [0], [0], [1], [0, 0, 1, 1], [], []>} : vector<224x4xbf16>, vector<4x4xbf16>, vector<224x4xf32> -> vector<224x4xf32>
    %76 = arith.addf %68, %75 : vector<224x4xf32>
    %cst_75 = arith.constant 0.000000e+00 : f32
    %77 = vector.broadcast %cst_75 : f32 to vector<224x4xf32>
    %78 = arith.maximumf %76, %77 : vector<224x4xf32>
    %79 = arith.truncf %78 : vector<224x4xf32> to vector<224x4xbf16>
    %c0_76 = arith.constant 0 : index
    %c0_77 = arith.constant 0 : index
    %80 = vector.load %arg5[%c0_76, %c0_77] : memref<4x4xbf16, #tpu.memory_space<vmem>>, vector<4x4xbf16>
    %cst_78 = arith.constant dense<0.000000e+00> : vector<224x4xf32>
    %81 = tpu.matmul %79, %80, %cst_78 {dimension_numbers = #tpu.dot_dimension_numbers<[1], [0], [0], [1], [0, 0, 1, 1], [], []>} : vector<224x4xbf16>, vector<4x4xbf16>, vector<224x4xf32> -> vector<224x4xf32>
    %c0_79 = arith.constant 0 : index
    %c1_80 = arith.constant 1 : index
    %c1_81 = arith.constant 1 : index
    %c0_82 = arith.constant 0 : index
    %82 = vector.load %arg2[%c0_79, %c1_80, %c1_81, %c0_82] : memref<1x16x18x4xf32, #tpu.memory_space<vmem>>, vector<1x14x16x4xf32>
    %83 = vector.shape_cast %82 : vector<1x14x16x4xf32> to vector<14x16x4xf32>
    %84 = vector.shape_cast %83 : vector<14x16x4xf32> to vector<224x4xf32>
    %85 = arith.addf %84, %81 : vector<224x4xf32>
    %c0_83 = arith.constant 0 : index
    %c0_84 = arith.constant 0 : index
    %c0_85 = arith.constant 0 : index
    %86 = vector.load %arg6[%c0_83, %c0_84, %c0_85] : memref<1x256x4xf32, #tpu.memory_space<vmem>>, vector<1x224x4xf32>
    %87 = vector.shape_cast %86 : vector<1x224x4xf32> to vector<224x4xf32>
    %88 = vector.shape_cast %85 : vector<224x4xf32> to vector<1x224x4xf32>
    tpu.vector_store %arg6[%c0_83, %c0_84, %c0_85], %88 {strides = array<i32>} : memref<1x256x4xf32, #tpu.memory_space<vmem>>, vector<1x224x4xf32>,
    %c0_86 = arith.constant 0 : index
    %c0_87 = arith.constant 0 : index
    %c0_88 = arith.constant 0 : index
    %89 = vector.load %arg7[%c0_86, %c0_87, %c0_88] : memref<4x18x4xf32, #tpu.memory_space<vmem>>, vector<2x16x4xf32>
    %90 = vector.shape_cast %89 : vector<2x16x4xf32> to vector<32x4xf32>
    %91 = arith.truncf %90 : vector<32x4xf32> to vector<32x4xbf16>
    %c0_89 = arith.constant 0 : index
    %c0_90 = arith.constant 0 : index
    %c0_91 = arith.constant 0 : index
    %92 = vector.load %arg4[%c0_89, %c0_90, %c0_91] : memref<9x4x4xbf16, #tpu.memory_space<vmem>>, vector<1x4x4xbf16>
    %93 = vector.shape_cast %92 : vector<1x4x4xbf16> to vector<4x4xbf16>
    %cst_92 = arith.constant dense<0.000000e+00> : vector<32x4xf32>
    %94 = tpu.matmul %91, %93, %cst_92 {dimension_numbers = #tpu.dot_dimension_numbers<[1], [0], [0], [1], [0, 0, 1, 1], [], []>} : vector<32x4xbf16>, vector<4x4xbf16>, vector<32x4xf32> -> vector<32x4xf32>
    %c0_93 = arith.constant 0 : index
    %c1_94 = arith.constant 1 : index
    %c0_95 = arith.constant 0 : index
    %95 = vector.load %arg7[%c0_93, %c1_94, %c0_95] : memref<4x18x4xf32, #tpu.memory_space<vmem>>, vector<2x16x4xf32>
    %96 = vector.shape_cast %95 : vector<2x16x4xf32> to vector<32x4xf32>
    %97 = arith.truncf %96 : vector<32x4xf32> to vector<32x4xbf16>
    %c1_96 = arith.constant 1 : index
    %c0_97 = arith.constant 0 : index
    %c0_98 = arith.constant 0 : index
    %98 = vector.load %arg4[%c1_96, %c0_97, %c0_98] : memref<9x4x4xbf16, #tpu.memory_space<vmem>>, vector<1x4x4xbf16>
    %99 = vector.shape_cast %98 : vector<1x4x4xbf16> to vector<4x4xbf16>
    %cst_99 = arith.constant dense<0.000000e+00> : vector<32x4xf32>
    %100 = tpu.matmul %97, %99, %cst_99 {dimension_numbers = #tpu.dot_dimension_numbers<[1], [0], [0], [1], [0, 0, 1, 1], [], []>} : vector<32x4xbf16>, vector<4x4xbf16>, vector<32x4xf32> -> vector<32x4xf32>
    %101 = arith.addf %94, %100 : vector<32x4xf32>
    %c0_100 = arith.constant 0 : index
    %c2_101 = arith.constant 2 : index
    %c0_102 = arith.constant 0 : index
    %102 = vector.load %arg7[%c0_100, %c2_101, %c0_102] : memref<4x18x4xf32, #tpu.memory_space<vmem>>, vector<2x16x4xf32>
    %103 = vector.shape_cast %102 : vector<2x16x4xf32> to vector<32x4xf32>
    %104 = arith.truncf %103 : vector<32x4xf32> to vector<32x4xbf16>
    %c2_103 = arith.constant 2 : index
    %c0_104 = arith.constant 0 : index
    %c0_105 = arith.constant 0 : index
    %105 = vector.load %arg4[%c2_103, %c0_104, %c0_105] : memref<9x4x4xbf16, #tpu.memory_space<vmem>>, vector<1x4x4xbf16>
    %106 = vector.shape_cast %105 : vector<1x4x4xbf16> to vector<4x4xbf16>
    %cst_106 = arith.constant dense<0.000000e+00> : vector<32x4xf32>
    %107 = tpu.matmul %104, %106, %cst_106 {dimension_numbers = #tpu.dot_dimension_numbers<[1], [0], [0], [1], [0, 0, 1, 1], [], []>} : vector<32x4xbf16>, vector<4x4xbf16>, vector<32x4xf32> -> vector<32x4xf32>
    %108 = arith.addf %101, %107 : vector<32x4xf32>
    %c1_107 = arith.constant 1 : index
    %c0_108 = arith.constant 0 : index
    %c0_109 = arith.constant 0 : index
    %109 = vector.load %arg7[%c1_107, %c0_108, %c0_109] : memref<4x18x4xf32, #tpu.memory_space<vmem>>, vector<2x16x4xf32>
    %110 = vector.shape_cast %109 : vector<2x16x4xf32> to vector<32x4xf32>
    %111 = arith.truncf %110 : vector<32x4xf32> to vector<32x4xbf16>
    %c3_110 = arith.constant 3 : index
    %c0_111 = arith.constant 0 : index
    %c0_112 = arith.constant 0 : index
    %112 = vector.load %arg4[%c3_110, %c0_111, %c0_112] : memref<9x4x4xbf16, #tpu.memory_space<vmem>>, vector<1x4x4xbf16>
    %113 = vector.shape_cast %112 : vector<1x4x4xbf16> to vector<4x4xbf16>
    %cst_113 = arith.constant dense<0.000000e+00> : vector<32x4xf32>
    %114 = tpu.matmul %111, %113, %cst_113 {dimension_numbers = #tpu.dot_dimension_numbers<[1], [0], [0], [1], [0, 0, 1, 1], [], []>} : vector<32x4xbf16>, vector<4x4xbf16>, vector<32x4xf32> -> vector<32x4xf32>
    %115 = arith.addf %108, %114 : vector<32x4xf32>
    %c1_114 = arith.constant 1 : index
    %c1_115 = arith.constant 1 : index
    %c0_116 = arith.constant 0 : index
    %116 = vector.load %arg7[%c1_114, %c1_115, %c0_116] : memref<4x18x4xf32, #tpu.memory_space<vmem>>, vector<2x16x4xf32>
    %117 = vector.shape_cast %116 : vector<2x16x4xf32> to vector<32x4xf32>
    %118 = arith.truncf %117 : vector<32x4xf32> to vector<32x4xbf16>
    %c4_117 = arith.constant 4 : index
    %c0_118 = arith.constant 0 : index
    %c0_119 = arith.constant 0 : index
    %119 = vector.load %arg4[%c4_117, %c0_118, %c0_119] : memref<9x4x4xbf16, #tpu.memory_space<vmem>>, vector<1x4x4xbf16>
    %120 = vector.shape_cast %119 : vector<1x4x4xbf16> to vector<4x4xbf16>
    %cst_120 = arith.constant dense<0.000000e+00> : vector<32x4xf32>
    %121 = tpu.matmul %118, %120, %cst_120 {dimension_numbers = #tpu.dot_dimension_numbers<[1], [0], [0], [1], [0, 0, 1, 1], [], []>} : vector<32x4xbf16>, vector<4x4xbf16>, vector<32x4xf32> -> vector<32x4xf32>
    %122 = arith.addf %115, %121 : vector<32x4xf32>
    %c1_121 = arith.constant 1 : index
    %c2_122 = arith.constant 2 : index
    %c0_123 = arith.constant 0 : index
    %123 = vector.load %arg7[%c1_121, %c2_122, %c0_123] : memref<4x18x4xf32, #tpu.memory_space<vmem>>, vector<2x16x4xf32>
    %124 = vector.shape_cast %123 : vector<2x16x4xf32> to vector<32x4xf32>
    %125 = arith.truncf %124 : vector<32x4xf32> to vector<32x4xbf16>
    %c5_124 = arith.constant 5 : index
    %c0_125 = arith.constant 0 : index
    %c0_126 = arith.constant 0 : index
    %126 = vector.load %arg4[%c5_124, %c0_125, %c0_126] : memref<9x4x4xbf16, #tpu.memory_space<vmem>>, vector<1x4x4xbf16>
    %127 = vector.shape_cast %126 : vector<1x4x4xbf16> to vector<4x4xbf16>
    %cst_127 = arith.constant dense<0.000000e+00> : vector<32x4xf32>
    %128 = tpu.matmul %125, %127, %cst_127 {dimension_numbers = #tpu.dot_dimension_numbers<[1], [0], [0], [1], [0, 0, 1, 1], [], []>} : vector<32x4xbf16>, vector<4x4xbf16>, vector<32x4xf32> -> vector<32x4xf32>
    %129 = arith.addf %122, %128 : vector<32x4xf32>
    %c2_128 = arith.constant 2 : index
    %c0_129 = arith.constant 0 : index
    %c0_130 = arith.constant 0 : index
    %130 = vector.load %arg7[%c2_128, %c0_129, %c0_130] : memref<4x18x4xf32, #tpu.memory_space<vmem>>, vector<2x16x4xf32>
    %131 = vector.shape_cast %130 : vector<2x16x4xf32> to vector<32x4xf32>
    %132 = arith.truncf %131 : vector<32x4xf32> to vector<32x4xbf16>
    %c6_131 = arith.constant 6 : index
    %c0_132 = arith.constant 0 : index
    %c0_133 = arith.constant 0 : index
    %133 = vector.load %arg4[%c6_131, %c0_132, %c0_133] : memref<9x4x4xbf16, #tpu.memory_space<vmem>>, vector<1x4x4xbf16>
    %134 = vector.shape_cast %133 : vector<1x4x4xbf16> to vector<4x4xbf16>
    %cst_134 = arith.constant dense<0.000000e+00> : vector<32x4xf32>
    %135 = tpu.matmul %132, %134, %cst_134 {dimension_numbers = #tpu.dot_dimension_numbers<[1], [0], [0], [1], [0, 0, 1, 1], [], []>} : vector<32x4xbf16>, vector<4x4xbf16>, vector<32x4xf32> -> vector<32x4xf32>
    %136 = arith.addf %129, %135 : vector<32x4xf32>
    %c2_135 = arith.constant 2 : index
    %c1_136 = arith.constant 1 : index
    %c0_137 = arith.constant 0 : index
    %137 = vector.load %arg7[%c2_135, %c1_136, %c0_137] : memref<4x18x4xf32, #tpu.memory_space<vmem>>, vector<2x16x4xf32>
    %138 = vector.shape_cast %137 : vector<2x16x4xf32> to vector<32x4xf32>
    %139 = arith.truncf %138 : vector<32x4xf32> to vector<32x4xbf16>
    %c7_138 = arith.constant 7 : index
    %c0_139 = arith.constant 0 : index
    %c0_140 = arith.constant 0 : index
    %140 = vector.load %arg4[%c7_138, %c0_139, %c0_140] : memref<9x4x4xbf16, #tpu.memory_space<vmem>>, vector<1x4x4xbf16>
    %141 = vector.shape_cast %140 : vector<1x4x4xbf16> to vector<4x4xbf16>
    %cst_141 = arith.constant dense<0.000000e+00> : vector<32x4xf32>
    %142 = tpu.matmul %139, %141, %cst_141 {dimension_numbers = #tpu.dot_dimension_numbers<[1], [0], [0], [1], [0, 0, 1, 1], [], []>} : vector<32x4xbf16>, vector<4x4xbf16>, vector<32x4xf32> -> vector<32x4xf32>
    %143 = arith.addf %136, %142 : vector<32x4xf32>
    %c2_142 = arith.constant 2 : index
    %c2_143 = arith.constant 2 : index
    %c0_144 = arith.constant 0 : index
    %144 = vector.load %arg7[%c2_142, %c2_143, %c0_144] : memref<4x18x4xf32, #tpu.memory_space<vmem>>, vector<2x16x4xf32>
    %145 = vector.shape_cast %144 : vector<2x16x4xf32> to vector<32x4xf32>
    %146 = arith.truncf %145 : vector<32x4xf32> to vector<32x4xbf16>
    %c8_145 = arith.constant 8 : index
    %c0_146 = arith.constant 0 : index
    %c0_147 = arith.constant 0 : index
    %147 = vector.load %arg4[%c8_145, %c0_146, %c0_147] : memref<9x4x4xbf16, #tpu.memory_space<vmem>>, vector<1x4x4xbf16>
    %148 = vector.shape_cast %147 : vector<1x4x4xbf16> to vector<4x4xbf16>
    %cst_148 = arith.constant dense<0.000000e+00> : vector<32x4xf32>
    %149 = tpu.matmul %146, %148, %cst_148 {dimension_numbers = #tpu.dot_dimension_numbers<[1], [0], [0], [1], [0, 0, 1, 1], [], []>} : vector<32x4xbf16>, vector<4x4xbf16>, vector<32x4xf32> -> vector<32x4xf32>
    %150 = arith.addf %143, %149 : vector<32x4xf32>
    %cst_149 = arith.constant 0.000000e+00 : f32
    %151 = vector.broadcast %cst_149 : f32 to vector<32x4xf32>
    %152 = arith.maximumf %150, %151 : vector<32x4xf32>
    %153 = arith.truncf %152 : vector<32x4xf32> to vector<32x4xbf16>
    %c0_150 = arith.constant 0 : index
    %c0_151 = arith.constant 0 : index
    %154 = vector.load %arg5[%c0_150, %c0_151] : memref<4x4xbf16, #tpu.memory_space<vmem>>, vector<4x4xbf16>
    %cst_152 = arith.constant dense<0.000000e+00> : vector<32x4xf32>
    %155 = tpu.matmul %153, %154, %cst_152 {dimension_numbers = #tpu.dot_dimension_numbers<[1], [0], [0], [1], [0, 0, 1, 1], [], []>} : vector<32x4xbf16>, vector<4x4xbf16>, vector<32x4xf32> -> vector<32x4xf32>
    %c1_153 = arith.constant 1 : index
    %c1_154 = arith.constant 1 : index
    %c0_155 = arith.constant 0 : index
    %156 = vector.load %arg7[%c1_153, %c1_154, %c0_155] : memref<4x18x4xf32, #tpu.memory_space<vmem>>, vector<2x16x4xf32>
    %157 = vector.shape_cast %156 : vector<2x16x4xf32> to vector<32x4xf32>
    %158 = arith.addf %157, %155 : vector<32x4xf32>
    %c0_156 = arith.constant 0 : index
    %c224 = arith.constant 224 : index
    %c0_157 = arith.constant 0 : index
    %159 = vector.load %arg6[%c0_156, %c224, %c0_157] : memref<1x256x4xf32, #tpu.memory_space<vmem>>, vector<1x32x4xf32>
    %160 = vector.shape_cast %159 : vector<1x32x4xf32> to vector<32x4xf32>
    %161 = vector.shape_cast %158 : vector<32x4xf32> to vector<1x32x4xf32>
    tpu.vector_store %arg6[%c0_156, %c224, %c0_157], %161 {strides = array<i32>} : memref<1x256x4xf32, #tpu.memory_space<vmem>>, vector<1x32x4xf32>,
    return
  }
  func.func @transform_0(%arg0: i32, %arg1: i32) -> (i32, i32, i32, i32) {
    %c0_i32 = arith.constant 0 : i32
    %c0_i32_0 = arith.constant 0 : i32
    %c0_i32_1 = arith.constant 0 : i32
    return %arg0, %arg1, %c0_i32, %c0_i32_0 : i32, i32, i32, i32
  }
  func.func @transform_1(%arg0: i32, %arg1: i32) -> (i32, i32, i32, i32) {
    %c1_i32 = arith.constant 1 : i32
    %0 = arith.addi %arg1, %c1_i32 : i32
    %c8_i32 = arith.constant 8 : i32
    %1 = arith.muli %0, %c8_i32 : i32
    %c0_i32 = arith.constant 0 : i32
    %c0_i32_0 = arith.constant 0 : i32
    %c0_i32_1 = arith.constant 0 : i32
    return %arg0, %1, %c0_i32, %c0_i32_0 : i32, i32, i32, i32
  }
  func.func @transform_2(%arg0: i32, %arg1: i32) -> (i32, i32, i32) {
    %c0_i32 = arith.constant 0 : i32
    %c0_i32_0 = arith.constant 0 : i32
    %c0_i32_1 = arith.constant 0 : i32
    %c0_i32_2 = arith.constant 0 : i32
    return %c0_i32, %c0_i32_0, %c0_i32_1 : i32, i32, i32
  }
  func.func @transform_3(%arg0: i32, %arg1: i32) -> (i32, i32) {
    %c0_i32 = arith.constant 0 : i32
    %c0_i32_0 = arith.constant 0 : i32
    %c0_i32_1 = arith.constant 0 : i32
    return %c0_i32, %c0_i32_0 : i32, i32
  }
  func.func @transform_4(%arg0: i32, %arg1: i32) -> (i32, i32, i32) {
    %c0_i32 = arith.constant 0 : i32
    %c0_i32_0 = arith.constant 0 : i32
    return %arg0, %arg1, %c0_i32 : i32, i32, i32
  }
}

</mosaic_0001>

<llo_original>
// kernel: tpu_custom_call.1
$region0: #{tpu_custom_call.1}
  #allocation0 [shape = 'u32[]', space=smem, size = 0x4, offset = 0x4, fixed_abs, tag = 'smem constant byte address 0x4 - core index']
  #allocation1 [shape = 'u32[144,128]{1,0:T(1,128)}', space=vmem, size = 0x12000, scoped, tag = 'internal scratch']
  #allocation2 [shape = 'f32[4,18,4]{2,1,0:T(8,128)}', space=vmem, size = 0xc000, scoped, tag = 'scratch operand']
  %s0 = inlined_call_operand.vmem [shape: f32[2,18,18,4], index: 0, kind: input, shape index: {}]
  %s1 = inlined_call_operand.vmem [shape: f32[2,18,18,4], index: 1, kind: input, shape index: {}]
  %s2 = inlined_call_operand.vmem [shape: bf16[9,4,4], index: 2, kind: input, shape index: {}]
  %s3 = inlined_call_operand.vmem [shape: bf16[4,4], index: 3, kind: input, shape index: {}]
  %s4 = inlined_call_operand.vmem [shape: f32[2,256,4], index: 4, kind: output, shape index: {}]
  %s5 = sld [smem:[#allocation0]]
  $region49: #{tpu_custom_call.1} parent=0
    _
  %s7 = ssub.s32 1, %s5
  %s8 = scalar_select 0, %s7, %s5
  loop: start=0, step=1, limit=4
  $region2: #{tpu_custom_call.1} parent=0 // loop_pre_header
    _
  $region3: #{tpu_custom_call.1} parent=0 // loop_header
    %s10 = sphi 0, %s14
    %p11 = scmp.ge.s32.totalorder %s10, 4
    %s17 = sphi 0, %s29
    %s18 = sphi 0, %s25
    %s19 = sphi 0, %s17
    %s20 = sphi 0, %s18
    %s21 = sphi 0, %s19
    %s22 = sphi 0, %s20
    %s34 = sphi 0, %s36
    %s37 = sphi 0, %s34
    %s38 = sphi 0, %s37
    %s54 = sphi 0, %s38
    %s66 = sphi 0, %s68
    %s69 = sphi 0, %s66
    %s70 = sphi 0, %s69
    %s86 = sphi 0, %s70
    %s90 = sphi 0, %s90
    %s92 = sphi 0, %s90
    %s93 = sphi 0, %s92
    %s107 = sphi 0, %s93
    %s111 = sphi 0, %s111
    %s113 = sphi 0, %s111
    %s114 = sphi 0, %s113
    %s128 = sphi 0, %s114
    %s136 = sphi 0, %s138
    %s139 = sphi 0, %s136
    %s140 = sphi 0, %s139
    %s156 = sphi 0, %s140
  $region4: #{tpu_custom_call.1} parent=0 // loop_header_branch
    %13 = sbr.rel (%p11) target = $region8
  $region5: #{tpu_custom_call.1} parent=0 // loop_body
    %s15 = ssub.s32 %s10, 1
    %s16 = ssub.s32 %s10, 2
    %s23 = sadd.s32 1, %s18
    %p24 = scmp.ge.s32.totalorder %s23, 1
    %s25 = scalar_select %p24, 0, %s23
    %s26 = sadd.s32 1, %s17
    %s27 = scalar_select %p24, %s26, %s17
    %p28 = scmp.ge.s32.totalorder %s27, 2
    %s29 = scalar_select %p28, 0, %s27
    %s30 = ssub.s32 %s17, %s29
    %s31 = ssub.s32 %s18, %s25
    %s32 = sor.u32 %s30, %s31
    %p33 = scmp.eq.s32.totalorder %s32, 0
    %s35 = sadd.s32 %s34, 1
    %s36 = scalar_select %p33, %s34, %s35
    %p39 = pneg %p33
    %p40 = scmp.eq.s32.totalorder %s10, 1
    %p41 = por %p39, %p40
    %p42 = scmp.ne.s32.totalorder %s34, %s37
    %p43 = scmp.eq.s32.totalorder %s10, 0
    %p44 = por %p42, %p43
    %p45 = scmp.ne.s32.totalorder %s34, %s37
    %p46 = scmp.eq.s32.totalorder %s15, 1
    %p47 = por %p45, %p46
    %p48 = scmp.ne.s32.totalorder %s37, %s38
    %p49 = scmp.eq.s32.totalorder %s15, 0
    %p50 = por %p48, %p49
    %p51 = scmp.ne.s32.totalorder %s37, %s38
    %p52 = scmp.eq.s32.totalorder %s16, 1
    %p53 = por %p51, %p52
    %p55 = scmp.ne.s32.totalorder %s38, %s54
    %p56 = scmp.eq.s32.totalorder %s16, 0
    %p57 = por %p55, %p56
    %s58 = sadd.s32 %s18, 1
    %s59 = smul.u32 %s58, 8
    %s60 = sadd.s32 %s25, 1
    %s61 = smul.u32 %s60, 8
    %s62 = ssub.s32 %s17, %s29
    %s63 = ssub.s32 %s59, %s61
    %s64 = sor.u32 %s62, %s63
    %p65 = scmp.eq.s32.totalorder %s64, 0
    %s67 = sadd.s32 %s66, 1
    %s68 = scalar_select %p65, %s66, %s67
    %p71 = pneg %p65
    %p72 = scmp.eq.s32.totalorder %s10, 1
    %p73 = por %p71, %p72
    %p74 = scmp.ne.s32.totalorder %s66, %s69
    %p75 = scmp.eq.s32.totalorder %s10, 0
    %p76 = por %p74, %p75
    %p77 = scmp.ne.s32.totalorder %s66, %s69
    %p78 = scmp.eq.s32.totalorder %s15, 1
    %p79 = por %p77, %p78
    %p80 = scmp.ne.s32.totalorder %s69, %s70
    %p81 = scmp.eq.s32.totalorder %s15, 0
    %p82 = por %p80, %p81
    %p83 = scmp.ne.s32.totalorder %s69, %s70
    %p84 = scmp.eq.s32.totalorder %s16, 1
    %p85 = por %p83, %p84
    %p87 = scmp.ne.s32.totalorder %s70, %s86
    %p88 = scmp.eq.s32.totalorder %s16, 0
    %p89 = por %p87, %p88
    %s91 = sadd.s32 %s90, 1
    %p94 = scmp.eq.s32.totalorder %s10, 1
    %p95 = scmp.ne.s32.totalorder %s90, %s92
    %p96 = scmp.eq.s32.totalorder %s10, 0
    %p97 = por %p95, %p96
    %p98 = scmp.ne.s32.totalorder %s90, %s92
    %p99 = scmp.eq.s32.totalorder %s15, 1
    %p100 = por %p98, %p99
    %p101 = scmp.ne.s32.totalorder %s92, %s93
    %p102 = scmp.eq.s32.totalorder %s15, 0
    %p103 = por %p101, %p102
    %p104 = scmp.ne.s32.totalorder %s92, %s93
    %p105 = scmp.eq.s32.totalorder %s16, 1
    %p106 = por %p104, %p105
    %p108 = scmp.ne.s32.totalorder %s93, %s107
    %p109 = scmp.eq.s32.totalorder %s16, 0
    %p110 = por %p108, %p109
    %s112 = sadd.s32 %s111, 1
    %p115 = scmp.eq.s32.totalorder %s10, 1
    %p116 = scmp.ne.s32.totalorder %s111, %s113
    %p117 = scmp.eq.s32.totalorder %s10, 0
    %p118 = por %p116, %p117
    %p119 = scmp.ne.s32.totalorder %s111, %s113
    %p120 = scmp.eq.s32.totalorder %s15, 1
    %p121 = por %p119, %p120
    %p122 = scmp.ne.s32.totalorder %s113, %s114
    %p123 = scmp.eq.s32.totalorder %s15, 0
    %p124 = por %p122, %p123
    %p125 = scmp.ne.s32.totalorder %s113, %s114
    %p126 = scmp.eq.s32.totalorder %s16, 1
    %p127 = por %p125, %p126
    %p129 = scmp.ne.s32.totalorder %s114, %s128
    %p130 = scmp.eq.s32.totalorder %s16, 0
    %p131 = por %p129, %p130
    %s132 = ssub.s32 %s17, %s29
    %s133 = ssub.s32 %s18, %s25
    %s134 = sor.u32 %s132, %s133
    %p135 = scmp.eq.s32.totalorder %s134, 0
    %s137 = sadd.s32 %s136, 1
    %s138 = scalar_select %p135, %s136, %s137
    %p141 = pneg %p135
    %p142 = scmp.eq.s32.totalorder %s10, 1
    %p143 = por %p141, %p142
    %p144 = scmp.ne.s32.totalorder %s136, %s139
    %p145 = scmp.eq.s32.totalorder %s10, 0
    %p146 = por %p144, %p145
    %p147 = scmp.ne.s32.totalorder %s136, %s139
    %p148 = scmp.eq.s32.totalorder %s15, 1
    %p149 = por %p147, %p148
    %p150 = scmp.ne.s32.totalorder %s139, %s140
    %p151 = scmp.eq.s32.totalorder %s15, 0
    %p152 = por %p150, %p151
    %p153 = scmp.ne.s32.totalorder %s139, %s140
    %p154 = scmp.eq.s32.totalorder %s16, 1
    %p155 = por %p153, %p154
    %p157 = scmp.ne.s32.totalorder %s140, %s156
    %p158 = scmp.eq.s32.totalorder %s16, 0
    %p159 = por %p157, %p158
    %p160 = scmp.le.s32.totalorder 1, %s10
    %p161 = scmp.lt.s32.totalorder %s10, 3
    %p162 = pnand %p160, %p161
    %p163 = pneg %p162
    // Predicated region
    $region9: #{tpu_custom_call.1} parent=5 // pred_check
      _
    $region10: #{tpu_custom_call.1} parent=5 // pred_check_branch
      %165 = sbr.rel (%p162) target = $region12
    $region11: #{tpu_custom_call.1} parent=5 // pred_region
      %s166 = ssub.s32 %s10, 1
      // Predicated region
      $region13: #{tpu_custom_call.1} parent=11 // pred_check
        %p167 = pneg %p103
      $region14: #{tpu_custom_call.1} parent=11 // pred_check_branch
        %169 = sbr.rel (%p167) target = $region16
      $region15: #{tpu_custom_call.1} parent=11 // pred_region
        _
      $region16: #{tpu_custom_call.1} parent=11 // pred_fallthru
        _
      // Predicated region
      $region17: #{tpu_custom_call.1} parent=11 // pred_check
        %p170 = pneg %p124
      $region18: #{tpu_custom_call.1} parent=11 // pred_check_branch
        %172 = sbr.rel (%p170) target = $region20
      $region19: #{tpu_custom_call.1} parent=11 // pred_region
        _
      $region20: #{tpu_custom_call.1} parent=11 // pred_fallthru
        _
    $region12: #{tpu_custom_call.1} parent=5 // pred_fallthru
      _
    %p173 = scmp.lt.s32.totalorder %s10, 2
    // Predicated region
    $region21: #{tpu_custom_call.1} parent=5 // pred_check
      %p174 = pneg %p173
    $region22: #{tpu_custom_call.1} parent=5 // pred_check_branch
      %176 = sbr.rel (%p174) target = $region24
    $region23: #{tpu_custom_call.1} parent=5 // pred_region
      // Predicated region
      $region25: #{tpu_custom_call.1} parent=23 // pred_check
        %p177 = pneg %p44
      $region26: #{tpu_custom_call.1} parent=23 // pred_check_branch
        %179 = sbr.rel (%p177) target = $region28
      $region27: #{tpu_custom_call.1} parent=23 // pred_region
        %s180 = smul.u32 16, %s18
        %s181 = ssub.s32 18, %s180
        %p182 = scmp.lt.s32.totalorder %s181, 16
        %s183 = scalar_select %p182, %s181, 16
        %s184 = smul.u32 128, %s183
        %s185 = smul.u32 %s184, 3
        %p186 = scmp.lt.s32.totalorder %s17, 1
        %s187 = scalar_select %p186, %s17, 1
        %p188 = scmp.lt.s32.totalorder %s180, 17
        %s189 = scalar_select %p188, %s180, 17
        %s190 = smul.addr %s189, 3
        %s191 = smul.addr %s187, 54
        %s192 = sadd.s32 %s190, %s191
        %s193 = smul.addr %s192, 8
        %s194 = scalar_lea.vmem %s0, %s193
        %s195 = smul.u32 16, %s18
        %s196 = ssub.s32 18, %s195
        %p197 = scmp.lt.s32.totalorder %s196, 16
        %s198 = scalar_select %p197, %s196, 16
        %s199 = smul.u32 128, %s198
        %s200 = smul.u32 %s199, 3
      $region28: #{tpu_custom_call.1} parent=23 // pred_fallthru
        _
      // Predicated region
      $region29: #{tpu_custom_call.1} parent=23 // pred_check
        %p201 = pneg %p76
      $region30: #{tpu_custom_call.1} parent=23 // pred_check_branch
        %203 = sbr.rel (%p201) target = $region32
      $region31: #{tpu_custom_call.1} parent=23 // pred_region
        %s204 = sadd.s32 %s18, 1
        %s205 = smul.u32 %s204, 8
        %s206 = smul.u32 2, %s205
        %p207 = scmp.lt.s32.totalorder %s17, 1
        %s208 = scalar_select %p207, %s17, 1
        %p209 = scmp.lt.s32.totalorder %s206, 17
        %s210 = scalar_select %p209, %s206, 17
        %s211 = smul.addr %s210, 3
        %s212 = smul.addr %s208, 54
        %s213 = sadd.s32 %s211, %s212
        %s214 = smul.addr %s213, 8
        %s215 = scalar_lea.vmem %s1, %s214
        %s216 = sadd.s32 %s18, 1
        %s217 = smul.u32 %s216, 8
        %s218 = smul.u32 2, %s217
      $region32: #{tpu_custom_call.1} parent=23 // pred_fallthru
        _
    $region24: #{tpu_custom_call.1} parent=5 // pred_fallthru
      _
    %p219 = scmp.le.s32.totalorder 1, %s10
    %p220 = scmp.lt.s32.totalorder %s10, 3
    %p221 = pnand %p219, %p220
    %p222 = pneg %p221
    // Predicated region
    $region33: #{tpu_custom_call.1} parent=5 // pred_check
      _
    $region34: #{tpu_custom_call.1} parent=5 // pred_check_branch
      %224 = sbr.rel (%p221) target = $region36
    $region35: #{tpu_custom_call.1} parent=5 // pred_region
      %s225 = ssub.s32 %s10, 1
      %s226 = smul.u32 16, %s20
      %s227 = ssub.s32 18, %s226
      %p228 = scmp.lt.s32.totalorder %s227, 16
      %s229 = scalar_select %p228, %s227, 16
      %s230 = smul.u32 128, %s229
      %s231 = smul.u32 %s230, 3
      %p232 = scmp.lt.s32.totalorder %s19, 1
      %s233 = scalar_select %p232, %s19, 1
      %p234 = scmp.lt.s32.totalorder %s226, 17
      %s235 = scalar_select %p234, %s226, 17
      %s236 = smul.addr %s235, 3
      %s237 = smul.addr %s233, 54
      %s238 = sadd.s32 %s236, %s237
      %s239 = smul.addr %s238, 8
      %s240 = scalar_lea.vmem %s0, %s239
      %p241 = pneg %p50
      %p242 = pneg %p47
      %s243 = sadd.s32 %s20, 1
      %s244 = smul.u32 %s243, 8
      %s245 = smul.u32 2, %s244
      %p246 = scmp.lt.s32.totalorder %s19, 1
      %s247 = scalar_select %p246, %s19, 1
      %p248 = scmp.lt.s32.totalorder %s245, 17
      %s249 = scalar_select %p248, %s245, 17
      %s250 = smul.addr %s249, 3
      %s251 = smul.addr %s247, 54
      %s252 = sadd.s32 %s250, %s251
      %s253 = smul.addr %s252, 8
      %s254 = scalar_lea.vmem %s1, %s253
      %p255 = pneg %p82
      %p256 = pneg %p79
      %p257 = pneg %p103
      %p258 = pneg %p100
      %p259 = pneg %p124
      %p260 = pneg %p121
      %p261 = pneg %p152
      %p262 = pneg %p149
      %s263 = smul.u32 32, %s20
      %p264 = scmp.lt.s32.totalorder %s19, 1
      %s265 = scalar_select %p264, %s19, 1
      %p266 = scmp.lt.s32.totalorder %s263, 31
      %s267 = scalar_select %p266, %s263, 31
      %s268 = smul.addr %s265, 32
      %s269 = sadd.s32 %s267, %s268
      %s270 = smul.addr %s269, 8
      %s271 = scalar_lea.vmem %s4, %s270
      %s272 = smul.u32 16, %s20
      %s273 = ssub.s32 18, %s272
      %p274 = scmp.lt.s32.totalorder %s273, 16
      %s275 = scalar_select %p274, %s273, 16
      %s276 = smul.u32 128, %s275
      %s277 = smul.u32 %s276, 3
      %p278 = scmp.lt.s32.totalorder %s19, 1
      %s279 = scalar_select %p278, %s19, 1
      %p280 = scmp.lt.s32.totalorder %s272, 17
      %s281 = scalar_select %p280, %s272, 17
      %s282 = smul.addr %s281, 3
      %s283 = smul.addr %s279, 54
      %s284 = sadd.s32 %s282, %s283
      %s285 = smul.addr %s284, 8
      %s286 = scalar_lea.vmem %s0, %s285
      %s287 = smul.u32 16, %s20
      %s288 = ssub.s32 18, %s287
      %p289 = scmp.lt.s32.totalorder %s288, 16
      %s290 = scalar_select %p289, %s288, 16
      %s291 = smul.u32 128, %s290
      %s292 = smul.u32 %s291, 3
      %s293 = sadd.s32 %s20, 1
      %s294 = smul.u32 %s293, 8
      %s295 = smul.u32 2, %s294
      %p296 = scmp.lt.s32.totalorder %s19, 1
      %s297 = scalar_select %p296, %s19, 1
      %p298 = scmp.lt.s32.totalorder %s295, 17
      %s299 = scalar_select %p298, %s295, 17
      %s300 = smul.addr %s299, 3
      %s301 = smul.addr %s297, 54
      %s302 = sadd.s32 %s300, %s301
      %s303 = smul.addr %s302, 8
      %s304 = scalar_lea.vmem %s1, %s303
      %s305 = sadd.s32 %s20, 1
      %s306 = smul.u32 %s305, 8
      %s307 = smul.u32 2, %s306
      %s308 = smul.u32 32, %s20
      %p309 = scmp.lt.s32.totalorder %s19, 1
      %s310 = scalar_select %p309, %s19, 1
      %p311 = scmp.lt.s32.totalorder %s308, 31
      %s312 = scalar_select %p311, %s308, 31
      %s313 = smul.addr %s310, 32
      %s314 = sadd.s32 %s312, %s313
      %s315 = smul.addr %s314, 8
      %s316 = scalar_lea.vmem %s4, %s315
      %s317 = smul.u32 32, %s20
      %s319 = scalar_lea.vmem %s286, 336
      %v320 = vld [vmem:[%s319] sm:$0xff]
      %v321 = vld [vmem:[%s319 + $0x8] sm:$0xff]
      %v322 = vld [vmem:[%s319 + $0x10] sm:$0x3]
      %v323 = vld [vmem:[%s319 + $0x18] sm:$0xff]
      %v324 = vld [vmem:[%s319 + $0x20] sm:$0xff]
      %v325 = vld [vmem:[%s319 + $0x28] sm:$0x3]
      %vm326 = vcmask 31744
      %327 = vst.msk [vmem:[#allocation2] sm:$0xff] %vm326, %v320
      %328 = vst.msk [vmem:[#allocation2 + $0x8] sm:$0xff] %vm326, %v321
      %vm329 = vcmask 25600
      %330 = vst.msk [vmem:[#allocation2 + $0x10] sm:$0x3] %vm329, %v322
      %331 = vst.msk [vmem:[#allocation2 + $0x18] sm:$0xff] %vm326, %v323
      %332 = vst.msk [vmem:[#allocation2 + $0x20] sm:$0xff] %vm326, %v324
      %333 = vst.msk [vmem:[#allocation2 + $0x28] sm:$0x3] %vm329, %v325
      %v334 = vld [vmem:[%s304] sm:$0xff]
      %v335 = vld [vmem:[%s304 + $0x8] sm:$0xff]
      %v336 = vld [vmem:[%s304 + $0x10] sm:$0x3]
      %v337 = vld [vmem:[%s304 + $0x18] sm:$0xff]
      %v338 = vld [vmem:[%s304 + $0x20] sm:$0xff]
      %v339 = vld [vmem:[%s304 + $0x28] sm:$0x3]
      %s340 = scalar_lea.vmem [#allocation2], 48
      %341 = vst.msk [vmem:[%s340] sm:$0xff] %vm326, %v334
      %342 = vst.msk [vmem:[%s340 + $0x8] sm:$0xff] %vm326, %v335
      %343 = vst.msk [vmem:[%s340 + $0x10] sm:$0x3] %vm329, %v336
      %344 = vst.msk [vmem:[%s340 + $0x18] sm:$0xff] %vm326, %v337
      %345 = vst.msk [vmem:[%s340 + $0x20] sm:$0xff] %vm326, %v338
      %346 = vst.msk [vmem:[%s340 + $0x28] sm:$0x3] %vm329, %v339
      %v347 = vld [vmem:[%s286] sm:$0xff]
      %v348 = vld [vmem:[%s286 + $0x8] sm:$0xff]
      %v349 = vld [vmem:[%s286 + $0x18] sm:$0xff]
      %v350 = vld [vmem:[%s286 + $0x20] sm:$0xff]
      %v351 = vld [vmem:[%s286 + $0x30] sm:$0xff]
      %v352 = vld [vmem:[%s286 + $0x38] sm:$0xff]
      %v353 = vld [vmem:[%s286 + $0x48] sm:$0xff]
      %v354 = vld [vmem:[%s286 + $0x50] sm:$0xff]
      %v355 = vld [vmem:[%s286 + $0x60] sm:$0xff]
      %v356 = vld [vmem:[%s286 + $0x68] sm:$0xff]
      %v357 = vld [vmem:[%s286 + $0x78] sm:$0xff]
      %v358 = vld [vmem:[%s286 + $0x80] sm:$0xff]
      %v359 = vld [vmem:[%s286 + $0x90] sm:$0xff]
      %v360 = vld [vmem:[%s286 + $0x98] sm:$0xff]
      %v361 = vld [vmem:[%s286 + $0xa8] sm:$0xff]
      %v362 = vld [vmem:[%s286 + $0xb0] sm:$0xff]
      %v363 = vld [vmem:[%s286 + $0xc0] sm:$0xff]
      %v364 = vld [vmem:[%s286 + $0xc8] sm:$0xff]
      %v365 = vld [vmem:[%s286 + $0xd8] sm:$0xff]
      %v366 = vld [vmem:[%s286 + $0xe0] sm:$0xff]
      %v367 = vld [vmem:[%s286 + $0xf0] sm:$0xff]
      %v368 = vld [vmem:[%s286 + $0xf8] sm:$0xff]
      %v369 = vld [vmem:[%s286 + $0x108] sm:$0xff]
      %v370 = vld [vmem:[%s286 + $0x110] sm:$0xff]
      %v371 = vld [vmem:[%s286 + $0x120] sm:$0xff]
      %v372 = vld [vmem:[%s286 + $0x128] sm:$0xff]
      %v373 = vld [vmem:[%s286 + $0x138] sm:$0xff]
      %v374 = vld [vmem:[%s286 + $0x140] sm:$0xff]
      %v375 = vpack.c.bf16 %v348, %v347
      %v376 = vpack.c.bf16 %v350, %v349
      %v377 = vpack.c.bf16 %v352, %v351
      %v378 = vpack.c.bf16 %v354, %v353
      %v379 = vpack.c.bf16 %v356, %v355
      %v380 = vpack.c.bf16 %v358, %v357
      %v381 = vpack.c.bf16 %v360, %v359
      %v382 = vpack.c.bf16 %v362, %v361
      %v383 = vpack.c.bf16 %v364, %v363
      %v384 = vpack.c.bf16 %v366, %v365
      %v385 = vpack.c.bf16 %v368, %v367
      %v386 = vpack.c.bf16 %v370, %v369
      %v387 = vpack.c.bf16 %v372, %v371
      %v388 = vpack.c.bf16 %v374, %v373
      %v389 = vld [vmem:[%s2] sm:$0x3]
      %v390 = vld [vmem:[%s286 + $0x1] sm:$0xff]
      %v391 = vld [vmem:[%s286 + $0x9] sm:$0xff]
      %v392 = vld [vmem:[%s286 + $0x19] sm:$0xff]
      %v393 = vld [vmem:[%s286 + $0x21] sm:$0xff]
      %v394 = vld [vmem:[%s286 + $0x31] sm:$0xff]
      %v395 = vld [vmem:[%s286 + $0x39] sm:$0xff]
      %v396 = vld [vmem:[%s286 + $0x49] sm:$0xff]
      %v397 = vld [vmem:[%s286 + $0x51] sm:$0xff]
      %v398 = vld [vmem:[%s286 + $0x61] sm:$0xff]
      %v399 = vld [vmem:[%s286 + $0x69] sm:$0xff]
      %v400 = vld [vmem:[%s286 + $0x79] sm:$0xff]
      %v401 = vld [vmem:[%s286 + $0x81] sm:$0xff]
      %v402 = vld [vmem:[%s286 + $0x91] sm:$0xff]
      %v403 = vld [vmem:[%s286 + $0x99] sm:$0xff]
      %v404 = vld [vmem:[%s286 + $0xa9] sm:$0xff]
      %v405 = vld [vmem:[%s286 + $0xb1] sm:$0xff]
      %v406 = vld [vmem:[%s286 + $0xc1] sm:$0xff]
      %v407 = vld [vmem:[%s286 + $0xc9] sm:$0xff]
      %v408 = vld [vmem:[%s286 + $0xd9] sm:$0xff]
      %v409 = vld [vmem:[%s286 + $0xe1] sm:$0xff]
      %v410 = vld [vmem:[%s286 + $0xf1] sm:$0xff]
      %v411 = vld [vmem:[%s286 + $0xf9] sm:$0xff]
      %v412 = vld [vmem:[%s286 + $0x109] sm:$0xff]
      %v413 = vld [vmem:[%s286 + $0x111] sm:$0xff]
      %v414 = vld [vmem:[%s286 + $0x121] sm:$0xff]
      %v415 = vld [vmem:[%s286 + $0x129] sm:$0xff]
      %v416 = vld [vmem:[%s286 + $0x139] sm:$0xff]
      %v417 = vld [vmem:[%s286 + $0x141] sm:$0xff]
      %v418 = vpack.c.bf16 %v391, %v390
      %v419 = vpack.c.bf16 %v393, %v392
      %v420 = vpack.c.bf16 %v395, %v394
      %v421 = vpack.c.bf16 %v397, %v396
      %v422 = vpack.c.bf16 %v399, %v398
      %v423 = vpack.c.bf16 %v401, %v400
      %v424 = vpack.c.bf16 %v403, %v402
      %v425 = vpack.c.bf16 %v405, %v404
      %v426 = vpack.c.bf16 %v407, %v406
      %v427 = vpack.c.bf16 %v409, %v408
      %v428 = vpack.c.bf16 %v411, %v410
      %v429 = vpack.c.bf16 %v413, %v412
      %v430 = vpack.c.bf16 %v415, %v414
      %v431 = vpack.c.bf16 %v417, %v416
      %s432 = scalar_lea.vmem %s2, 2
      %v433 = vld [vmem:[%s432] sm:$0x3]
      %v435 = vsel %vm326, %v418, 0
      %v438 = vsel %vm326, %v419, 0
      %v441 = vsel %vm326, %v420, 0
      %v444 = vsel %vm326, %v421, 0
      %v447 = vsel %vm326, %v422, 0
      %v450 = vsel %vm326, %v423, 0
      %v453 = vsel %vm326, %v424, 0
      %v456 = vsel %vm326, %v425, 0
      %v459 = vsel %vm326, %v426, 0
      %v462 = vsel %vm326, %v427, 0
      %v465 = vsel %vm326, %v428, 0
      %v468 = vsel %vm326, %v429, 0
      %v471 = vsel %vm326, %v430, 0
      %v474 = vsel %vm326, %v431, 0
      %vm476 = vcmask 1041408
      %v478 = vsel %vm476, %v433, 0
      %480 = vmatprep.subr.bf16.mxu0 0
      %481 = vmatpush1.bf16.msra.mxu0 %v478
      %482 = vmatprep.subr.bf16.mxu0 0
      %483 = vmatpush1.bf16.msra.mxu0 0
      %484 = vmatprep.subr.bf16.mxu0 0
      %485 = vmatpush1.bf16.msra.mxu0 0
      %486 = vmatprep.subr.bf16.mxu0 0
      %487 = vmatpush1.bf16.msra.mxu0 0
      %488 = vmatprep.subr.bf16.mxu0 0
      %489 = vmatpush1.bf16.msra.mxu0 0
      %490 = vmatprep.subr.bf16.mxu0 0
      %491 = vmatpush1.bf16.msra.mxu0 0
      %492 = vmatprep.subr.bf16.mxu0 0
      %493 = vmatpush1.bf16.msra.mxu0 0
      %494 = vmatprep.subr.bf16.mxu0 0
      %495 = vmatpush1.bf16.msra.mxu0 0
      %496 = vmatprep.subr.bf16.mxu0 0
      %497 = vmatpush1.bf16.msra.mxu0 0
      %498 = vmatprep.subr.bf16.mxu0 0
      %499 = vmatpush1.bf16.msra.mxu0 0
      %500 = vmatprep.subr.bf16.mxu0 0
      %501 = vmatpush1.bf16.msra.mxu0 0
      %502 = vmatprep.subr.bf16.mxu0 0
      %503 = vmatpush1.bf16.msra.mxu0 0
      %504 = vmatprep.subr.bf16.mxu0 0
      %505 = vmatpush1.bf16.msra.mxu0 0
      %506 = vmatprep.subr.bf16.mxu0 0
      %507 = vmatpush1.bf16.msra.mxu0 0
      %508 = vmatprep.subr.bf16.mxu0 0
      %509 = vmatpush1.bf16.msra.mxu0 0
      %510 = vmatprep.subr.bf16.mxu0 0
      %511 = vmatpush1.bf16.msra.mxu0 0
      %512 = vmatprep.mubr.bf16.mxu0 0
      %513 = vmatmul.mubr.bf16.gmra.mrb[0].mxu0 %v435
      %v514 = vpop.f32.mrb[0].mxu0
      %v515 = vadd.f32 0.0, %v514
      %v516 = vpop.f32.mrb[0].mxu0
      %v517 = vpop.f32.mrb[0].mxu0
      %v518 = vadd.f32 0.0, %v517
      %v519 = vpop.f32.mrb[0].mxu0
      %520 = vmatprep.mubr.bf16.mxu0 0
      %521 = vmatmul.mubr.bf16.gmra.mrb[0].mxu0 %v438
      %v522 = vpop.f32.mrb[0].mxu0
      %v523 = vadd.f32 0.0, %v522
      %v524 = vpop.f32.mrb[0].mxu0
      %v525 = vpop.f32.mrb[0].mxu0
      %v526 = vadd.f32 0.0, %v525
      %v527 = vpop.f32.mrb[0].mxu0
      %528 = vmatprep.mubr.bf16.mxu0 0
      %529 = vmatmul.mubr.bf16.gmra.mrb[0].mxu0 %v441
      %v530 = vpop.f32.mrb[0].mxu0
      %v531 = vadd.f32 0.0, %v530
      %v532 = vpop.f32.mrb[0].mxu0
      %v533 = vpop.f32.mrb[0].mxu0
      %v534 = vadd.f32 0.0, %v533
      %v535 = vpop.f32.mrb[0].mxu0
      %536 = vmatprep.mubr.bf16.mxu0 0
      %537 = vmatmul.mubr.bf16.gmra.mrb[0].mxu0 %v444
      %v538 = vpop.f32.mrb[0].mxu0
      %v539 = vadd.f32 0.0, %v538
      %v540 = vpop.f32.mrb[0].mxu0
      %v541 = vpop.f32.mrb[0].mxu0
      %v542 = vadd.f32 0.0, %v541
      %v543 = vpop.f32.mrb[0].mxu0
      %544 = vmatprep.mubr.bf16.mxu0 0
      %545 = vmatmul.mubr.bf16.gmra.mrb[0].mxu0 %v447
      %v546 = vpop.f32.mrb[0].mxu0
      %v547 = vadd.f32 0.0, %v546
      %v548 = vpop.f32.mrb[0].mxu0
      %v549 = vpop.f32.mrb[0].mxu0
      %v550 = vadd.f32 0.0, %v549
      %v551 = vpop.f32.mrb[0].mxu0
      %552 = vmatprep.mubr.bf16.mxu0 0
      %553 = vmatmul.mubr.bf16.gmra.mrb[0].mxu0 %v450
      %v554 = vpop.f32.mrb[0].mxu0
      %v555 = vadd.f32 0.0, %v554
      %v556 = vpop.f32.mrb[0].mxu0
      %v557 = vpop.f32.mrb[0].mxu0
      %v558 = vadd.f32 0.0, %v557
      %v559 = vpop.f32.mrb[0].mxu0
      %560 = vmatprep.mubr.bf16.mxu0 0
      %561 = vmatmul.mubr.bf16.gmra.mrb[0].mxu0 %v453
      %v562 = vpop.f32.mrb[0].mxu0
      %v563 = vadd.f32 0.0, %v562
      %v564 = vpop.f32.mrb[0].mxu0
      %v565 = vpop.f32.mrb[0].mxu0
      %v566 = vadd.f32 0.0, %v565
      %v567 = vpop.f32.mrb[0].mxu0
      %568 = vmatprep.mubr.bf16.mxu0 0
      %569 = vmatmul.mubr.bf16.gmra.mrb[0].mxu0 %v456
      %v570 = vpop.f32.mrb[0].mxu0
      %v571 = vadd.f32 0.0, %v570
      %v572 = vpop.f32.mrb[0].mxu0
      %v573 = vpop.f32.mrb[0].mxu0
      %v574 = vadd.f32 0.0, %v573
      %v575 = vpop.f32.mrb[0].mxu0
      %576 = vmatprep.mubr.bf16.mxu0 0
      %577 = vmatmul.mubr.bf16.gmra.mrb[0].mxu0 %v459
      %v578 = vpop.f32.mrb[0].mxu0
      %v579 = vadd.f32 0.0, %v578
      %v580 = vpop.f32.mrb[0].mxu0
      %v581 = vpop.f32.mrb[0].mxu0
      %v582 = vadd.f32 0.0, %v581
      %v583 = vpop.f32.mrb[0].mxu0
      %584 = vmatprep.mubr.bf16.mxu0 0
      %585 = vmatmul.mubr.bf16.gmra.mrb[0].mxu0 %v462
      %v586 = vpop.f32.mrb[0].mxu0
      %v587 = vadd.f32 0.0, %v586
      %v588 = vpop.f32.mrb[0].mxu0
      %v589 = vpop.f32.mrb[0].mxu0
      %v590 = vadd.f32 0.0, %v589
      %v591 = vpop.f32.mrb[0].mxu0
      %592 = vmatprep.mubr.bf16.mxu0 0
      %593 = vmatmul.mubr.bf16.gmra.mrb[0].mxu0 %v465
      %v594 = vpop.f32.mrb[0].mxu0
      %v595 = vadd.f32 0.0, %v594
      %v596 = vpop.f32.mrb[0].mxu0
      %v597 = vpop.f32.mrb[0].mxu0
      %v598 = vadd.f32 0.0, %v597
      %v599 = vpop.f32.mrb[0].mxu0
      %600 = vmatprep.mubr.bf16.mxu0 0
      %601 = vmatmul.mubr.bf16.gmra.mrb[0].mxu0 %v468
      %v602 = vpop.f32.mrb[0].mxu0
      %v603 = vadd.f32 0.0, %v602
      %v604 = vpop.f32.mrb[0].mxu0
      %v605 = vpop.f32.mrb[0].mxu0
      %v606 = vadd.f32 0.0, %v605
      %v607 = vpop.f32.mrb[0].mxu0
      %608 = vmatprep.mubr.bf16.mxu0 0
      %609 = vmatmul.mubr.bf16.gmra.mrb[0].mxu0 %v471
      %v610 = vpop.f32.mrb[0].mxu0
      %v611 = vadd.f32 0.0, %v610
      %v612 = vpop.f32.mrb[0].mxu0
      %v613 = vpop.f32.mrb[0].mxu0
      %v614 = vadd.f32 0.0, %v613
      %v615 = vpop.f32.mrb[0].mxu0
      %616 = vmatprep.mubr.bf16.mxu0 0
      %617 = vmatmul.mubr.bf16.gmra.mrb[0].mxu0 %v474
      %v618 = vpop.f32.mrb[0].mxu0
      %v619 = vadd.f32 0.0, %v618
      %v620 = vpop.f32.mrb[0].mxu0
      %v621 = vpop.f32.mrb[0].mxu0
      %v622 = vadd.f32 0.0, %v621
      %v623 = vpop.f32.mrb[0].mxu0
      %624 = vdwg.mxu0
      %v626 = vsel %vm326, %v375, 0
      %v629 = vsel %vm326, %v376, 0
      %v632 = vsel %vm326, %v377, 0
      %v635 = vsel %vm326, %v378, 0
      %v638 = vsel %vm326, %v379, 0
      %v641 = vsel %vm326, %v380, 0
      %v644 = vsel %vm326, %v381, 0
      %v647 = vsel %vm326, %v382, 0
      %v650 = vsel %vm326, %v383, 0
      %v653 = vsel %vm326, %v384, 0
      %v656 = vsel %vm326, %v385, 0
      %v659 = vsel %vm326, %v386, 0
      %v662 = vsel %vm326, %v387, 0
      %v665 = vsel %vm326, %v388, 0
      %v668 = vsel %vm476, %v389, 0
      %670 = vmatprep.subr.bf16.mxu0 0
      %671 = vmatpush1.bf16.msra.mxu0 %v668
      %672 = vmatprep.subr.bf16.mxu0 0
      %673 = vmatpush1.bf16.msra.mxu0 0
      %674 = vmatprep.subr.bf16.mxu0 0
      %675 = vmatpush1.bf16.msra.mxu0 0
      %676 = vmatprep.subr.bf16.mxu0 0
      %677 = vmatpush1.bf16.msra.mxu0 0
      %678 = vmatprep.subr.bf16.mxu0 0
      %679 = vmatpush1.bf16.msra.mxu0 0
      %680 = vmatprep.subr.bf16.mxu0 0
      %681 = vmatpush1.bf16.msra.mxu0 0
      %682 = vmatprep.subr.bf16.mxu0 0
      %683 = vmatpush1.bf16.msra.mxu0 0
      %684 = vmatprep.subr.bf16.mxu0 0
      %685 = vmatpush1.bf16.msra.mxu0 0
      %686 = vmatprep.subr.bf16.mxu0 0
      %687 = vmatpush1.bf16.msra.mxu0 0
      %688 = vmatprep.subr.bf16.mxu0 0
      %689 = vmatpush1.bf16.msra.mxu0 0
      %690 = vmatprep.subr.bf16.mxu0 0
      %691 = vmatpush1.bf16.msra.mxu0 0
      %692 = vmatprep.subr.bf16.mxu0 0
      %693 = vmatpush1.bf16.msra.mxu0 0
      %694 = vmatprep.subr.bf16.mxu0 0
      %695 = vmatpush1.bf16.msra.mxu0 0
      %696 = vmatprep.subr.bf16.mxu0 0
      %697 = vmatpush1.bf16.msra.mxu0 0
      %698 = vmatprep.subr.bf16.mxu0 0
      %699 = vmatpush1.bf16.msra.mxu0 0
      %700 = vmatprep.subr.bf16.mxu0 0
      %701 = vmatpush1.bf16.msra.mxu0 0
      %702 = vmatprep.mubr.bf16.mxu0 0
      %703 = vmatmul.mubr.bf16.gmra.mrb[0].mxu0 %v626
      %v704 = vpop.f32.mrb[0].mxu0
      %v705 = vadd.f32 %v515, %v704
      %v706 = vpop.f32.mrb[0].mxu0
      %v707 = vpop.f32.mrb[0].mxu0
      %v708 = vadd.f32 %v518, %v707
      %v709 = vpop.f32.mrb[0].mxu0
      %710 = vmatprep.mubr.bf16.mxu0 0
      %711 = vmatmul.mubr.bf16.gmra.mrb[0].mxu0 %v629
      %v712 = vpop.f32.mrb[0].mxu0
      %v713 = vadd.f32 %v523, %v712
      %v714 = vpop.f32.mrb[0].mxu0
      %v715 = vpop.f32.mrb[0].mxu0
      %v716 = vadd.f32 %v526, %v715
      %v717 = vpop.f32.mrb[0].mxu0
      %718 = vmatprep.mubr.bf16.mxu0 0
      %719 = vmatmul.mubr.bf16.gmra.mrb[0].mxu0 %v632
      %v720 = vpop.f32.mrb[0].mxu0
      %v721 = vadd.f32 %v531, %v720
      %v722 = vpop.f32.mrb[0].mxu0
      %v723 = vpop.f32.mrb[0].mxu0
      %v724 = vadd.f32 %v534, %v723
      %v725 = vpop.f32.mrb[0].mxu0
      %726 = vmatprep.mubr.bf16.mxu0 0
      %727 = vmatmul.mubr.bf16.gmra.mrb[0].mxu0 %v635
      %v728 = vpop.f32.mrb[0].mxu0
      %v729 = vadd.f32 %v539, %v728
      %v730 = vpop.f32.mrb[0].mxu0
      %v731 = vpop.f32.mrb[0].mxu0
      %v732 = vadd.f32 %v542, %v731
      %v733 = vpop.f32.mrb[0].mxu0
      %734 = vmatprep.mubr.bf16.mxu0 0
      %735 = vmatmul.mubr.bf16.gmra.mrb[0].mxu0 %v638
      %v736 = vpop.f32.mrb[0].mxu0
      %v737 = vadd.f32 %v547, %v736
      %v738 = vpop.f32.mrb[0].mxu0
      %v739 = vpop.f32.mrb[0].mxu0
      %v740 = vadd.f32 %v550, %v739
      %v741 = vpop.f32.mrb[0].mxu0
      %742 = vmatprep.mubr.bf16.mxu0 0
      %743 = vmatmul.mubr.bf16.gmra.mrb[0].mxu0 %v641
      %v744 = vpop.f32.mrb[0].mxu0
      %v745 = vadd.f32 %v555, %v744
      %v746 = vpop.f32.mrb[0].mxu0
      %v747 = vpop.f32.mrb[0].mxu0
      %v748 = vadd.f32 %v558, %v747
      %v749 = vpop.f32.mrb[0].mxu0
      %750 = vmatprep.mubr.bf16.mxu0 0
      %751 = vmatmul.mubr.bf16.gmra.mrb[0].mxu0 %v644
      %v752 = vpop.f32.mrb[0].mxu0
      %v753 = vadd.f32 %v563, %v752
      %v754 = vpop.f32.mrb[0].mxu0
      %v755 = vpop.f32.mrb[0].mxu0
      %v756 = vadd.f32 %v566, %v755
      %v757 = vpop.f32.mrb[0].mxu0
      %758 = vmatprep.mubr.bf16.mxu0 0
      %759 = vmatmul.mubr.bf16.gmra.mrb[0].mxu0 %v647
      %v760 = vpop.f32.mrb[0].mxu0
      %v761 = vadd.f32 %v571, %v760
      %v762 = vpop.f32.mrb[0].mxu0
      %v763 = vpop.f32.mrb[0].mxu0
      %v764 = vadd.f32 %v574, %v763
      %v765 = vpop.f32.mrb[0].mxu0
      %766 = vmatprep.mubr.bf16.mxu0 0
      %767 = vmatmul.mubr.bf16.gmra.mrb[0].mxu0 %v650
      %v768 = vpop.f32.mrb[0].mxu0
      %v769 = vadd.f32 %v579, %v768
      %v770 = vpop.f32.mrb[0].mxu0
      %v771 = vpop.f32.mrb[0].mxu0
      %v772 = vadd.f32 %v582, %v771
      %v773 = vpop.f32.mrb[0].mxu0
      %774 = vmatprep.mubr.bf16.mxu0 0
      %775 = vmatmul.mubr.bf16.gmra.mrb[0].mxu0 %v653
      %v776 = vpop.f32.mrb[0].mxu0
      %v777 = vadd.f32 %v587, %v776
      %v778 = vpop.f32.mrb[0].mxu0
      %v779 = vpop.f32.mrb[0].mxu0
      %v780 = vadd.f32 %v590, %v779
      %v781 = vpop.f32.mrb[0].mxu0
      %782 = vmatprep.mubr.bf16.mxu0 0
      %783 = vmatmul.mubr.bf16.gmra.mrb[0].mxu0 %v656
      %v784 = vpop.f32.mrb[0].mxu0
      %v785 = vadd.f32 %v595, %v784
      %v786 = vpop.f32.mrb[0].mxu0
      %v787 = vpop.f32.mrb[0].mxu0
      %v788 = vadd.f32 %v598, %v787
      %v789 = vpop.f32.mrb[0].mxu0
      %790 = vmatprep.mubr.bf16.mxu0 0
      %791 = vmatmul.mubr.bf16.gmra.mrb[0].mxu0 %v659
      %v792 = vpop.f32.mrb[0].mxu0
      %v793 = vadd.f32 %v603, %v792
      %v794 = vpop.f32.mrb[0].mxu0
      %v795 = vpop.f32.mrb[0].mxu0
      %v796 = vadd.f32 %v606, %v795
      %v797 = vpop.f32.mrb[0].mxu0
      %798 = vmatprep.mubr.bf16.mxu0 0
      %799 = vmatmul.mubr.bf16.gmra.mrb[0].mxu0 %v662
      %v800 = vpop.f32.mrb[0].mxu0
      %v801 = vadd.f32 %v611, %v800
      %v802 = vpop.f32.mrb[0].mxu0
      %v803 = vpop.f32.mrb[0].mxu0
      %v804 = vadd.f32 %v614, %v803
      %v805 = vpop.f32.mrb[0].mxu0
      %806 = vmatprep.mubr.bf16.mxu0 0
      %807 = vmatmul.mubr.bf16.gmra.mrb[0].mxu0 %v665
      %v808 = vpop.f32.mrb[0].mxu0
      %v809 = vadd.f32 %v619, %v808
      %v810 = vpop.f32.mrb[0].mxu0
      %v811 = vpop.f32.mrb[0].mxu0
      %v812 = vadd.f32 %v622, %v811
      %v813 = vpop.f32.mrb[0].mxu0
      %814 = vdwg.mxu0
      %v815 = vld [vmem:[%s286 + $0x2] sm:$0xff]
      %v816 = vld [vmem:[%s286 + $0xa] sm:$0xff]
      %v817 = vld [vmem:[%s286 + $0x1a] sm:$0xff]
      %v818 = vld [vmem:[%s286 + $0x22] sm:$0xff]
      %v819 = vld [vmem:[%s286 + $0x32] sm:$0xff]
      %v820 = vld [vmem:[%s286 + $0x3a] sm:$0xff]
      %v821 = vld [vmem:[%s286 + $0x4a] sm:$0xff]
      %v822 = vld [vmem:[%s286 + $0x52] sm:$0xff]
      %v823 = vld [vmem:[%s286 + $0x62] sm:$0xff]
      %v824 = vld [vmem:[%s286 + $0x6a] sm:$0xff]
      %v825 = vld [vmem:[%s286 + $0x7a] sm:$0xff]
      %v826 = vld [vmem:[%s286 + $0x82] sm:$0xff]
      %v827 = vld [vmem:[%s286 + $0x92] sm:$0xff]
      %v828 = vld [vmem:[%s286 + $0x9a] sm:$0xff]
      %v829 = vld [vmem:[%s286 + $0xaa] sm:$0xff]
      %v830 = vld [vmem:[%s286 + $0xb2] sm:$0xff]
      %v831 = vld [vmem:[%s286 + $0xc2] sm:$0xff]
      %v832 = vld [vmem:[%s286 + $0xca] sm:$0xff]
      %v833 = vld [vmem:[%s286 + $0xda] sm:$0xff]
      %v834 = vld [vmem:[%s286 + $0xe2] sm:$0xff]
      %v835 = vld [vmem:[%s286 + $0xf2] sm:$0xff]
      %v836 = vld [vmem:[%s286 + $0xfa] sm:$0xff]
      %v837 = vld [vmem:[%s286 + $0x10a] sm:$0xff]
      %v838 = vld [vmem:[%s286 + $0x112] sm:$0xff]
      %v839 = vld [vmem:[%s286 + $0x122] sm:$0xff]
      %v840 = vld [vmem:[%s286 + $0x12a] sm:$0xff]
      %v841 = vld [vmem:[%s286 + $0x13a] sm:$0xff]
      %v842 = vld [vmem:[%s286 + $0x142] sm:$0xff]
      %v843 = vpack.c.bf16 %v816, %v815
      %v844 = vpack.c.bf16 %v818, %v817
      %v845 = vpack.c.bf16 %v820, %v819
      %v846 = vpack.c.bf16 %v822, %v821
      %v847 = vpack.c.bf16 %v824, %v823
      %v848 = vpack.c.bf16 %v826, %v825
      %v849 = vpack.c.bf16 %v828, %v827
      %v850 = vpack.c.bf16 %v830, %v829
      %v851 = vpack.c.bf16 %v832, %v831
      %v852 = vpack.c.bf16 %v834, %v833
      %v853 = vpack.c.bf16 %v836, %v835
      %v854 = vpack.c.bf16 %v838, %v837
      %v855 = vpack.c.bf16 %v840, %v839
      %v856 = vpack.c.bf16 %v842, %v841
      %s857 = scalar_lea.vmem %s2, 4
      %v858 = vld [vmem:[%s857] sm:$0x3]
      %v860 = vsel %vm326, %v843, 0
      %v863 = vsel %vm326, %v844, 0
      %v866 = vsel %vm326, %v845, 0
      %v869 = vsel %vm326, %v846, 0
      %v872 = vsel %vm326, %v847, 0
      %v875 = vsel %vm326, %v848, 0
      %v878 = vsel %vm326, %v849, 0
      %v881 = vsel %vm326, %v850, 0
      %v884 = vsel %vm326, %v851, 0
      %v887 = vsel %vm326, %v852, 0
      %v890 = vsel %vm326, %v853, 0
      %v893 = vsel %vm326, %v854, 0
      %v896 = vsel %vm326, %v855, 0
      %v899 = vsel %vm326, %v856, 0
      %v902 = vsel %vm476, %v858, 0
      %904 = vmatprep.subr.bf16.mxu0 0
      %905 = vmatpush1.bf16.msra.mxu0 %v902
      %906 = vmatprep.subr.bf16.mxu0 0
      %907 = vmatpush1.bf16.msra.mxu0 0
      %908 = vmatprep.subr.bf16.mxu0 0
      %909 = vmatpush1.bf16.msra.mxu0 0
      %910 = vmatprep.subr.bf16.mxu0 0
      %911 = vmatpush1.bf16.msra.mxu0 0
      %912 = vmatprep.subr.bf16.mxu0 0
      %913 = vmatpush1.bf16.msra.mxu0 0
      %914 = vmatprep.subr.bf16.mxu0 0
      %915 = vmatpush1.bf16.msra.mxu0 0
      %916 = vmatprep.subr.bf16.mxu0 0
      %917 = vmatpush1.bf16.msra.mxu0 0
      %918 = vmatprep.subr.bf16.mxu0 0
      %919 = vmatpush1.bf16.msra.mxu0 0
      %920 = vmatprep.subr.bf16.mxu0 0
      %921 = vmatpush1.bf16.msra.mxu0 0
      %922 = vmatprep.subr.bf16.mxu0 0
      %923 = vmatpush1.bf16.msra.mxu0 0
      %924 = vmatprep.subr.bf16.mxu0 0
      %925 = vmatpush1.bf16.msra.mxu0 0
      %926 = vmatprep.subr.bf16.mxu0 0
      %927 = vmatpush1.bf16.msra.mxu0 0
      %928 = vmatprep.subr.bf16.mxu0 0
      %929 = vmatpush1.bf16.msra.mxu0 0
      %930 = vmatprep.subr.bf16.mxu0 0
      %931 = vmatpush1.bf16.msra.mxu0 0
      %932 = vmatprep.subr.bf16.mxu0 0
      %933 = vmatpush1.bf16.msra.mxu0 0
      %934 = vmatprep.subr.bf16.mxu0 0
      %935 = vmatpush1.bf16.msra.mxu0 0
      %936 = vmatprep.mubr.bf16.mxu0 0
      %937 = vmatmul.mubr.bf16.gmra.mrb[0].mxu0 %v860
      %v938 = vpop.f32.mrb[0].mxu0
      %v939 = vadd.f32 0.0, %v938
      %v940 = vpop.f32.mrb[0].mxu0
      %v941 = vpop.f32.mrb[0].mxu0
      %v942 = vadd.f32 0.0, %v941
      %v943 = vpop.f32.mrb[0].mxu0
      %944 = vmatprep.mubr.bf16.mxu0 0
      %945 = vmatmul.mubr.bf16.gmra.mrb[0].mxu0 %v863
      %v946 = vpop.f32.mrb[0].mxu0
      %v947 = vadd.f32 0.0, %v946
      %v948 = vpop.f32.mrb[0].mxu0
      %v949 = vpop.f32.mrb[0].mxu0
      %v950 = vadd.f32 0.0, %v949
      %v951 = vpop.f32.mrb[0].mxu0
      %952 = vmatprep.mubr.bf16.mxu0 0
      %953 = vmatmul.mubr.bf16.gmra.mrb[0].mxu0 %v866
      %v954 = vpop.f32.mrb[0].mxu0
      %v955 = vadd.f32 0.0, %v954
      %v956 = vpop.f32.mrb[0].mxu0
      %v957 = vpop.f32.mrb[0].mxu0
      %v958 = vadd.f32 0.0, %v957
      %v959 = vpop.f32.mrb[0].mxu0
      %960 = vmatprep.mubr.bf16.mxu0 0
      %961 = vmatmul.mubr.bf16.gmra.mrb[0].mxu0 %v869
      %v962 = vpop.f32.mrb[0].mxu0
      %v963 = vadd.f32 0.0, %v962
      %v964 = vpop.f32.mrb[0].mxu0
      %v965 = vpop.f32.mrb[0].mxu0
      %v966 = vadd.f32 0.0, %v965
      %v967 = vpop.f32.mrb[0].mxu0
      %968 = vmatprep.mubr.bf16.mxu0 0
      %969 = vmatmul.mubr.bf16.gmra.mrb[0].mxu0 %v872
      %v970 = vpop.f32.mrb[0].mxu0
      %v971 = vadd.f32 0.0, %v970
      %v972 = vpop.f32.mrb[0].mxu0
      %v973 = vpop.f32.mrb[0].mxu0
      %v974 = vadd.f32 0.0, %v973
      %v975 = vpop.f32.mrb[0].mxu0
      %976 = vmatprep.mubr.bf16.mxu0 0
      %977 = vmatmul.mubr.bf16.gmra.mrb[0].mxu0 %v875
      %v978 = vpop.f32.mrb[0].mxu0
      %v979 = vadd.f32 0.0, %v978
      %v980 = vpop.f32.mrb[0].mxu0
      %v981 = vpop.f32.mrb[0].mxu0
      %v982 = vadd.f32 0.0, %v981
      %v983 = vpop.f32.mrb[0].mxu0
      %984 = vmatprep.mubr.bf16.mxu0 0
      %985 = vmatmul.mubr.bf16.gmra.mrb[0].mxu0 %v878
      %v986 = vpop.f32.mrb[0].mxu0
      %v987 = vadd.f32 0.0, %v986
      %v988 = vpop.f32.mrb[0].mxu0
      %v989 = vpop.f32.mrb[0].mxu0
      %v990 = vadd.f32 0.0, %v989
      %v991 = vpop.f32.mrb[0].mxu0
      %992 = vmatprep.mubr.bf16.mxu0 0
      %993 = vmatmul.mubr.bf16.gmra.mrb[0].mxu0 %v881
      %v994 = vpop.f32.mrb[0].mxu0
      %v995 = vadd.f32 0.0, %v994
      %v996 = vpop.f32.mrb[0].mxu0
      %v997 = vpop.f32.mrb[0].mxu0
      %v998 = vadd.f32 0.0, %v997
      %v999 = vpop.f32.mrb[0].mxu0
      %1000 = vmatprep.mubr.bf16.mxu0 0
      %1001 = vmatmul.mubr.bf16.gmra.mrb[0].mxu0 %v884
      %v1002 = vpop.f32.mrb[0].mxu0
      %v1003 = vadd.f32 0.0, %v1002
      %v1004 = vpop.f32.mrb[0].mxu0
      %v1005 = vpop.f32.mrb[0].mxu0
      %v1006 = vadd.f32 0.0, %v1005
      %v1007 = vpop.f32.mrb[0].mxu0
      %1008 = vmatprep.mubr.bf16.mxu0 0
      %1009 = vmatmul.mubr.bf16.gmra.mrb[0].mxu0 %v887
      %v1010 = vpop.f32.mrb[0].mxu0
      %v1011 = vadd.f32 0.0, %v1010
      %v1012 = vpop.f32.mrb[0].mxu0
      %v1013 = vpop.f32.mrb[0].mxu0
      %v1014 = vadd.f32 0.0, %v1013
      %v1015 = vpop.f32.mrb[0].mxu0
      %1016 = vmatprep.mubr.bf16.mxu0 0
      %1017 = vmatmul.mubr.bf16.gmra.mrb[0].mxu0 %v890
      %v1018 = vpop.f32.mrb[0].mxu0
      %v1019 = vadd.f32 0.0, %v1018
      %v1020 = vpop.f32.mrb[0].mxu0
      %v1021 = vpop.f32.mrb[0].mxu0
      %v1022 = vadd.f32 0.0, %v1021
      %v1023 = vpop.f32.mrb[0].mxu0
      %1024 = vmatprep.mubr.bf16.mxu0 0
      %1025 = vmatmul.mubr.bf16.gmra.mrb[0].mxu0 %v893
      %v1026 = vpop.f32.mrb[0].mxu0
      %v1027 = vadd.f32 0.0, %v1026
      %v1028 = vpop.f32.mrb[0].mxu0
      %v1029 = vpop.f32.mrb[0].mxu0
      %v1030 = vadd.f32 0.0, %v1029
      %v1031 = vpop.f32.mrb[0].mxu0
      %1032 = vmatprep.mubr.bf16.mxu0 0
      %1033 = vmatmul.mubr.bf16.gmra.mrb[0].mxu0 %v896
      %v1034 = vpop.f32.mrb[0].mxu0
      %v1035 = vadd.f32 0.0, %v1034
      %v1036 = vpop.f32.mrb[0].mxu0
      %v1037 = vpop.f32.mrb[0].mxu0
      %v1038 = vadd.f32 0.0, %v1037
      %v1039 = vpop.f32.mrb[0].mxu0
      %1040 = vmatprep.mubr.bf16.mxu0 0
      %1041 = vmatmul.mubr.bf16.gmra.mrb[0].mxu0 %v899
      %v1042 = vpop.f32.mrb[0].mxu0
      %v1043 = vadd.f32 0.0, %v1042
      %v1044 = vpop.f32.mrb[0].mxu0
      %v1045 = vpop.f32.mrb[0].mxu0
      %v1046 = vadd.f32 0.0, %v1045
      %v1047 = vpop.f32.mrb[0].mxu0
      %1048 = vdwg.mxu0
      %v1049 = vadd.f32 %v705, %v939
      %v1050 = vadd.f32 %v708, %v942
      %v1051 = vadd.f32 %v713, %v947
      %v1052 = vadd.f32 %v716, %v950
      %v1053 = vadd.f32 %v721, %v955
      %v1054 = vadd.f32 %v724, %v958
      %v1055 = vadd.f32 %v729, %v963
      %v1056 = vadd.f32 %v732, %v966
      %v1057 = vadd.f32 %v737, %v971
      %v1058 = vadd.f32 %v740, %v974
      %v1059 = vadd.f32 %v745, %v979
      %v1060 = vadd.f32 %v748, %v982
      %v1061 = vadd.f32 %v753, %v987
      %v1062 = vadd.f32 %v756, %v990
      %v1063 = vadd.f32 %v761, %v995
      %v1064 = vadd.f32 %v764, %v998
      %v1065 = vadd.f32 %v769, %v1003
      %v1066 = vadd.f32 %v772, %v1006
      %v1067 = vadd.f32 %v777, %v1011
      %v1068 = vadd.f32 %v780, %v1014
      %v1069 = vadd.f32 %v785, %v1019
      %v1070 = vadd.f32 %v788, %v1022
      %v1071 = vadd.f32 %v793, %v1027
      %v1072 = vadd.f32 %v796, %v1030
      %v1073 = vadd.f32 %v801, %v1035
      %v1074 = vadd.f32 %v804, %v1038
      %v1075 = vadd.f32 %v809, %v1043
      %v1076 = vadd.f32 %v812, %v1046
      %s1077 = scalar_lea.vmem %s286, 24
      %v1078 = vld [vmem:[%s1077] sm:$0xff]
      %v1079 = vld [vmem:[%s1077 + $0x8] sm:$0xff]
      %v1080 = vld [vmem:[%s1077 + $0x18] sm:$0xff]
      %v1081 = vld [vmem:[%s1077 + $0x20] sm:$0xff]
      %v1082 = vld [vmem:[%s1077 + $0x30] sm:$0xff]
      %v1083 = vld [vmem:[%s1077 + $0x38] sm:$0xff]
      %v1084 = vld [vmem:[%s1077 + $0x48] sm:$0xff]
      %v1085 = vld [vmem:[%s1077 + $0x50] sm:$0xff]
      %v1086 = vld [vmem:[%s1077 + $0x60] sm:$0xff]
      %v1087 = vld [vmem:[%s1077 + $0x68] sm:$0xff]
      %v1088 = vld [vmem:[%s1077 + $0x78] sm:$0xff]
      %v1089 = vld [vmem:[%s1077 + $0x80] sm:$0xff]
      %v1090 = vld [vmem:[%s1077 + $0x90] sm:$0xff]
      %v1091 = vld [vmem:[%s1077 + $0x98] sm:$0xff]
      %v1092 = vld [vmem:[%s1077 + $0xa8] sm:$0xff]
      %v1093 = vld [vmem:[%s1077 + $0xb0] sm:$0xff]
      %v1094 = vld [vmem:[%s1077 + $0xc0] sm:$0xff]
      %v1095 = vld [vmem:[%s1077 + $0xc8] sm:$0xff]
      %v1096 = vld [vmem:[%s1077 + $0xd8] sm:$0xff]
      %v1097 = vld [vmem:[%s1077 + $0xe0] sm:$0xff]
      %v1098 = vld [vmem:[%s1077 + $0xf0] sm:$0xff]
      %v1099 = vld [vmem:[%s1077 + $0xf8] sm:$0xff]
      %v1100 = vld [vmem:[%s1077 + $0x108] sm:$0xff]
      %v1101 = vld [vmem:[%s1077 + $0x110] sm:$0xff]
      %v1102 = vld [vmem:[%s1077 + $0x120] sm:$0xff]
      %v1103 = vld [vmem:[%s1077 + $0x128] sm:$0xff]
      %v1104 = vld [vmem:[%s1077 + $0x138] sm:$0xff]
      %v1105 = vld [vmem:[%s1077 + $0x140] sm:$0xff]
      %v1106 = vpack.c.bf16 %v1079, %v1078
      %v1107 = vpack.c.bf16 %v1081, %v1080
      %v1108 = vpack.c.bf16 %v1083, %v1082
      %v1109 = vpack.c.bf16 %v1085, %v1084
      %v1110 = vpack.c.bf16 %v1087, %v1086
      %v1111 = vpack.c.bf16 %v1089, %v1088
      %v1112 = vpack.c.bf16 %v1091, %v1090
      %v1113 = vpack.c.bf16 %v1093, %v1092
      %v1114 = vpack.c.bf16 %v1095, %v1094
      %v1115 = vpack.c.bf16 %v1097, %v1096
      %v1116 = vpack.c.bf16 %v1099, %v1098
      %v1117 = vpack.c.bf16 %v1101, %v1100
      %v1118 = vpack.c.bf16 %v1103, %v1102
      %v1119 = vpack.c.bf16 %v1105, %v1104
      %s1120 = scalar_lea.vmem %s2, 6
      %v1121 = vld [vmem:[%s1120] sm:$0x3]
      %v1123 = vsel %vm326, %v1106, 0
      %v1126 = vsel %vm326, %v1107, 0
      %v1129 = vsel %vm326, %v1108, 0
      %v1132 = vsel %vm326, %v1109, 0
      %v1135 = vsel %vm326, %v1110, 0
      %v1138 = vsel %vm326, %v1111, 0
      %v1141 = vsel %vm326, %v1112, 0
      %v1144 = vsel %vm326, %v1113, 0
      %v1147 = vsel %vm326, %v1114, 0
      %v1150 = vsel %vm326, %v1115, 0
      %v1153 = vsel %vm326, %v1116, 0
      %v1156 = vsel %vm326, %v1117, 0
      %v1159 = vsel %vm326, %v1118, 0
      %v1162 = vsel %vm326, %v1119, 0
      %v1165 = vsel %vm476, %v1121, 0
      %1167 = vmatprep.subr.bf16.mxu0 0
      %1168 = vmatpush1.bf16.msra.mxu0 %v1165
      %1169 = vmatprep.subr.bf16.mxu0 0
      %1170 = vmatpush1.bf16.msra.mxu0 0
      %1171 = vmatprep.subr.bf16.mxu0 0
      %1172 = vmatpush1.bf16.msra.mxu0 0
      %1173 = vmatprep.subr.bf16.mxu0 0
      %1174 = vmatpush1.bf16.msra.mxu0 0
      %1175 = vmatprep.subr.bf16.mxu0 0
      %1176 = vmatpush1.bf16.msra.mxu0 0
      %1177 = vmatprep.subr.bf16.mxu0 0
      %1178 = vmatpush1.bf16.msra.mxu0 0
      %1179 = vmatprep.subr.bf16.mxu0 0
      %1180 = vmatpush1.bf16.msra.mxu0 0
      %1181 = vmatprep.subr.bf16.mxu0 0
      %1182 = vmatpush1.bf16.msra.mxu0 0
      %1183 = vmatprep.subr.bf16.mxu0 0
      %1184 = vmatpush1.bf16.msra.mxu0 0
      %1185 = vmatprep.subr.bf16.mxu0 0
      %1186 = vmatpush1.bf16.msra.mxu0 0
      %1187 = vmatprep.subr.bf16.mxu0 0
      %1188 = vmatpush1.bf16.msra.mxu0 0
      %1189 = vmatprep.subr.bf16.mxu0 0
      %1190 = vmatpush1.bf16.msra.mxu0 0
      %1191 = vmatprep.subr.bf16.mxu0 0
      %1192 = vmatpush1.bf16.msra.mxu0 0
      %1193 = vmatprep.subr.bf16.mxu0 0
      %1194 = vmatpush1.bf16.msra.mxu0 0
      %1195 = vmatprep.subr.bf16.mxu0 0
      %1196 = vmatpush1.bf16.msra.mxu0 0
      %1197 = vmatprep.subr.bf16.mxu0 0
      %1198 = vmatpush1.bf16.msra.mxu0 0
      %1199 = vmatprep.mubr.bf16.mxu0 0
      %1200 = vmatmul.mubr.bf16.gmra.mrb[0].mxu0 %v1123
      %v1201 = vpop.f32.mrb[0].mxu0
      %v1202 = vadd.f32 0.0, %v1201
      %v1203 = vpop.f32.mrb[0].mxu0
      %v1204 = vpop.f32.mrb[0].mxu0
      %v1205 = vadd.f32 0.0, %v1204
      %v1206 = vpop.f32.mrb[0].mxu0
      %1207 = vmatprep.mubr.bf16.mxu0 0
      %1208 = vmatmul.mubr.bf16.gmra.mrb[0].mxu0 %v1126
      %v1209 = vpop.f32.mrb[0].mxu0
      %v1210 = vadd.f32 0.0, %v1209
      %v1211 = vpop.f32.mrb[0].mxu0
      %v1212 = vpop.f32.mrb[0].mxu0
      %v1213 = vadd.f32 0.0, %v1212
      %v1214 = vpop.f32.mrb[0].mxu0
      %1215 = vmatprep.mubr.bf16.mxu0 0
      %1216 = vmatmul.mubr.bf16.gmra.mrb[0].mxu0 %v1129
      %v1217 = vpop.f32.mrb[0].mxu0
      %v1218 = vadd.f32 0.0, %v1217
      %v1219 = vpop.f32.mrb[0].mxu0
      %v1220 = vpop.f32.mrb[0].mxu0
      %v1221 = vadd.f32 0.0, %v1220
      %v1222 = vpop.f32.mrb[0].mxu0
      %1223 = vmatprep.mubr.bf16.mxu0 0
      %1224 = vmatmul.mubr.bf16.gmra.mrb[0].mxu0 %v1132
      %v1225 = vpop.f32.mrb[0].mxu0
      %v1226 = vadd.f32 0.0, %v1225
      %v1227 = vpop.f32.mrb[0].mxu0
      %v1228 = vpop.f32.mrb[0].mxu0
      %v1229 = vadd.f32 0.0, %v1228
      %v1230 = vpop.f32.mrb[0].mxu0
      %1231 = vmatprep.mubr.bf16.mxu0 0
      %1232 = vmatmul.mubr.bf16.gmra.mrb[0].mxu0 %v1135
      %v1233 = vpop.f32.mrb[0].mxu0
      %v1234 = vadd.f32 0.0, %v1233
      %v1235 = vpop.f32.mrb[0].mxu0
      %v1236 = vpop.f32.mrb[0].mxu0
      %v1237 = vadd.f32 0.0, %v1236
      %v1238 = vpop.f32.mrb[0].mxu0
      %1239 = vmatprep.mubr.bf16.mxu0 0
      %1240 = vmatmul.mubr.bf16.gmra.mrb[0].mxu0 %v1138
      %v1241 = vpop.f32.mrb[0].mxu0
      %v1242 = vadd.f32 0.0, %v1241
      %v1243 = vpop.f32.mrb[0].mxu0
      %v1244 = vpop.f32.mrb[0].mxu0
      %v1245 = vadd.f32 0.0, %v1244
      %v1246 = vpop.f32.mrb[0].mxu0
      %1247 = vmatprep.mubr.bf16.mxu0 0
      %1248 = vmatmul.mubr.bf16.gmra.mrb[0].mxu0 %v1141
      %v1249 = vpop.f32.mrb[0].mxu0
      %v1250 = vadd.f32 0.0, %v1249
      %v1251 = vpop.f32.mrb[0].mxu0
      %v1252 = vpop.f32.mrb[0].mxu0
      %v1253 = vadd.f32 0.0, %v1252
      %v1254 = vpop.f32.mrb[0].mxu0
      %1255 = vmatprep.mubr.bf16.mxu0 0
      %1256 = vmatmul.mubr.bf16.gmra.mrb[0].mxu0 %v1144
      %v1257 = vpop.f32.mrb[0].mxu0
      %v1258 = vadd.f32 0.0, %v1257
      %v1259 = vpop.f32.mrb[0].mxu0
      %v1260 = vpop.f32.mrb[0].mxu0
      %v1261 = vadd.f32 0.0, %v1260
      %v1262 = vpop.f32.mrb[0].mxu0
      %1263 = vmatprep.mubr.bf16.mxu0 0
      %1264 = vmatmul.mubr.bf16.gmra.mrb[0].mxu0 %v1147
      %v1265 = vpop.f32.mrb[0].mxu0
      %v1266 = vadd.f32 0.0, %v1265
      %v1267 = vpop.f32.mrb[0].mxu0
      %v1268 = vpop.f32.mrb[0].mxu0
      %v1269 = vadd.f32 0.0, %v1268
      %v1270 = vpop.f32.mrb[0].mxu0
      %1271 = vmatprep.mubr.bf16.mxu0 0
      %1272 = vmatmul.mubr.bf16.gmra.mrb[0].mxu0 %v1150
      %v1273 = vpop.f32.mrb[0].mxu0
      %v1274 = vadd.f32 0.0, %v1273
      %v1275 = vpop.f32.mrb[0].mxu0
      %v1276 = vpop.f32.mrb[0].mxu0
      %v1277 = vadd.f32 0.0, %v1276
      %v1278 = vpop.f32.mrb[0].mxu0
      %1279 = vmatprep.mubr.bf16.mxu0 0
      %1280 = vmatmul.mubr.bf16.gmra.mrb[0].mxu0 %v1153
      %v1281 = vpop.f32.mrb[0].mxu0
      %v1282 = vadd.f32 0.0, %v1281
      %v1283 = vpop.f32.mrb[0].mxu0
      %v1284 = vpop.f32.mrb[0].mxu0
      %v1285 = vadd.f32 0.0, %v1284
      %v1286 = vpop.f32.mrb[0].mxu0
      %1287 = vmatprep.mubr.bf16.mxu0 0
      %1288 = vmatmul.mubr.bf16.gmra.mrb[0].mxu0 %v1156
      %v1289 = vpop.f32.mrb[0].mxu0
      %v1290 = vadd.f32 0.0, %v1289
      %v1291 = vpop.f32.mrb[0].mxu0
      %v1292 = vpop.f32.mrb[0].mxu0
      %v1293 = vadd.f32 0.0, %v1292
      %v1294 = vpop.f32.mrb[0].mxu0
      %1295 = vmatprep.mubr.bf16.mxu0 0
      %1296 = vmatmul.mubr.bf16.gmra.mrb[0].mxu0 %v1159
      %v1297 = vpop.f32.mrb[0].mxu0
      %v1298 = vadd.f32 0.0, %v1297
      %v1299 = vpop.f32.mrb[0].mxu0
      %v1300 = vpop.f32.mrb[0].mxu0
      %v1301 = vadd.f32 0.0, %v1300
      %v1302 = vpop.f32.mrb[0].mxu0
      %1303 = vmatprep.mubr.bf16.mxu0 0
      %1304 = vmatmul.mubr.bf16.gmra.mrb[0].mxu0 %v1162
      %v1305 = vpop.f32.mrb[0].mxu0
      %v1306 = vadd.f32 0.0, %v1305
      %v1307 = vpop.f32.mrb[0].mxu0
      %v1308 = vpop.f32.mrb[0].mxu0
      %v1309 = vadd.f32 0.0, %v1308
      %v1310 = vpop.f32.mrb[0].mxu0
      %1311 = vdwg.mxu0
      %v1312 = vadd.f32 %v1049, %v1202
      %v1313 = vadd.f32 %v1050, %v1205
      %v1314 = vadd.f32 %v1051, %v1210
      %v1315 = vadd.f32 %v1052, %v1213
      %v1316 = vadd.f32 %v1053, %v1218
      %v1317 = vadd.f32 %v1054, %v1221
      %v1318 = vadd.f32 %v1055, %v1226
      %v1319 = vadd.f32 %v1056, %v1229
      %v1320 = vadd.f32 %v1057, %v1234
      %v1321 = vadd.f32 %v1058, %v1237
      %v1322 = vadd.f32 %v1059, %v1242
      %v1323 = vadd.f32 %v1060, %v1245
      %v1324 = vadd.f32 %v1061, %v1250
      %v1325 = vadd.f32 %v1062, %v1253
      %v1326 = vadd.f32 %v1063, %v1258
      %v1327 = vadd.f32 %v1064, %v1261
      %v1328 = vadd.f32 %v1065, %v1266
      %v1329 = vadd.f32 %v1066, %v1269
      %v1330 = vadd.f32 %v1067, %v1274
      %v1331 = vadd.f32 %v1068, %v1277
      %v1332 = vadd.f32 %v1069, %v1282
      %v1333 = vadd.f32 %v1070, %v1285
      %v1334 = vadd.f32 %v1071, %v1290
      %v1335 = vadd.f32 %v1072, %v1293
      %v1336 = vadd.f32 %v1073, %v1298
      %v1337 = vadd.f32 %v1074, %v1301
      %v1338 = vadd.f32 %v1075, %v1306
      %v1339 = vadd.f32 %v1076, %v1309
      %v1340 = vld [vmem:[%s1077 + $0x1] sm:$0xff]
      %v1341 = vld [vmem:[%s1077 + $0x9] sm:$0xff]
      %v1342 = vld [vmem:[%s1077 + $0x19] sm:$0xff]
      %v1343 = vld [vmem:[%s1077 + $0x21] sm:$0xff]
      %v1344 = vld [vmem:[%s1077 + $0x31] sm:$0xff]
      %v1345 = vld [vmem:[%s1077 + $0x39] sm:$0xff]
      %v1346 = vld [vmem:[%s1077 + $0x49] sm:$0xff]
      %v1347 = vld [vmem:[%s1077 + $0x51] sm:$0xff]
      %v1348 = vld [vmem:[%s1077 + $0x61] sm:$0xff]
      %v1349 = vld [vmem:[%s1077 + $0x69] sm:$0xff]
      %v1350 = vld [vmem:[%s1077 + $0x79] sm:$0xff]
      %v1351 = vld [vmem:[%s1077 + $0x81] sm:$0xff]
      %v1352 = vld [vmem:[%s1077 + $0x91] sm:$0xff]
      %v1353 = vld [vmem:[%s1077 + $0x99] sm:$0xff]
      %v1354 = vld [vmem:[%s1077 + $0xa9] sm:$0xff]
      %v1355 = vld [vmem:[%s1077 + $0xb1] sm:$0xff]
      %v1356 = vld [vmem:[%s1077 + $0xc1] sm:$0xff]
      %v1357 = vld [vmem:[%s1077 + $0xc9] sm:$0xff]
      %v1358 = vld [vmem:[%s1077 + $0xd9] sm:$0xff]
      %v1359 = vld [vmem:[%s1077 + $0xe1] sm:$0xff]
      %v1360 = vld [vmem:[%s1077 + $0xf1] sm:$0xff]
      %v1361 = vld [vmem:[%s1077 + $0xf9] sm:$0xff]
      %v1362 = vld [vmem:[%s1077 + $0x109] sm:$0xff]
      %v1363 = vld [vmem:[%s1077 + $0x111] sm:$0xff]
      %v1364 = vld [vmem:[%s1077 + $0x121] sm:$0xff]
      %v1365 = vld [vmem:[%s1077 + $0x129] sm:$0xff]
      %v1366 = vld [vmem:[%s1077 + $0x139] sm:$0xff]
      %v1367 = vld [vmem:[%s1077 + $0x141] sm:$0xff]
      %v1368 = vpack.c.bf16 %v1341, %v1340
      %v1369 = vpack.c.bf16 %v1343, %v1342
      %v1370 = vpack.c.bf16 %v1345, %v1344
      %v1371 = vpack.c.bf16 %v1347, %v1346
      %v1372 = vpack.c.bf16 %v1349, %v1348
      %v1373 = vpack.c.bf16 %v1351, %v1350
      %v1374 = vpack.c.bf16 %v1353, %v1352
      %v1375 = vpack.c.bf16 %v1355, %v1354
      %v1376 = vpack.c.bf16 %v1357, %v1356
      %v1377 = vpack.c.bf16 %v1359, %v1358
      %v1378 = vpack.c.bf16 %v1361, %v1360
      %v1379 = vpack.c.bf16 %v1363, %v1362
      %v1380 = vpack.c.bf16 %v1365, %v1364
      %v1381 = vpack.c.bf16 %v1367, %v1366
      %s1382 = scalar_lea.vmem %s2, 8
      %v1383 = vld [vmem:[%s1382] sm:$0x3]
      %v1385 = vsel %vm326, %v1368, 0
      %v1388 = vsel %vm326, %v1369, 0
      %v1391 = vsel %vm326, %v1370, 0
      %v1394 = vsel %vm326, %v1371, 0
      %v1397 = vsel %vm326, %v1372, 0
      %v1400 = vsel %vm326, %v1373, 0
      %v1403 = vsel %vm326, %v1374, 0
      %v1406 = vsel %vm326, %v1375, 0
      %v1409 = vsel %vm326, %v1376, 0
      %v1412 = vsel %vm326, %v1377, 0
      %v1415 = vsel %vm326, %v1378, 0
      %v1418 = vsel %vm326, %v1379, 0
      %v1421 = vsel %vm326, %v1380, 0
      %v1424 = vsel %vm326, %v1381, 0
      %v1427 = vsel %vm476, %v1383, 0
      %1429 = vmatprep.subr.bf16.mxu0 0
      %1430 = vmatpush1.bf16.msra.mxu0 %v1427
      %1431 = vmatprep.subr.bf16.mxu0 0
      %1432 = vmatpush1.bf16.msra.mxu0 0
      %1433 = vmatprep.subr.bf16.mxu0 0
      %1434 = vmatpush1.bf16.msra.mxu0 0
      %1435 = vmatprep.subr.bf16.mxu0 0
      %1436 = vmatpush1.bf16.msra.mxu0 0
      %1437 = vmatprep.subr.bf16.mxu0 0
      %1438 = vmatpush1.bf16.msra.mxu0 0
      %1439 = vmatprep.subr.bf16.mxu0 0
      %1440 = vmatpush1.bf16.msra.mxu0 0
      %1441 = vmatprep.subr.bf16.mxu0 0
      %1442 = vmatpush1.bf16.msra.mxu0 0
      %1443 = vmatprep.subr.bf16.mxu0 0
      %1444 = vmatpush1.bf16.msra.mxu0 0
      %1445 = vmatprep.subr.bf16.mxu0 0
      %1446 = vmatpush1.bf16.msra.mxu0 0
      %1447 = vmatprep.subr.bf16.mxu0 0
      %1448 = vmatpush1.bf16.msra.mxu0 0
      %1449 = vmatprep.subr.bf16.mxu0 0
      %1450 = vmatpush1.bf16.msra.mxu0 0
      %1451 = vmatprep.subr.bf16.mxu0 0
      %1452 = vmatpush1.bf16.msra.mxu0 0
      %1453 = vmatprep.subr.bf16.mxu0 0
      %1454 = vmatpush1.bf16.msra.mxu0 0
      %1455 = vmatprep.subr.bf16.mxu0 0
      %1456 = vmatpush1.bf16.msra.mxu0 0
      %1457 = vmatprep.subr.bf16.mxu0 0
      %1458 = vmatpush1.bf16.msra.mxu0 0
      %1459 = vmatprep.subr.bf16.mxu0 0
      %1460 = vmatpush1.bf16.msra.mxu0 0
      %1461 = vmatprep.mubr.bf16.mxu0 0
      %1462 = vmatmul.mubr.bf16.gmra.mrb[0].mxu0 %v1385
      %v1463 = vpop.f32.mrb[0].mxu0
      %v1464 = vadd.f32 0.0, %v1463
      %v1465 = vpop.f32.mrb[0].mxu0
      %v1466 = vpop.f32.mrb[0].mxu0
      %v1467 = vadd.f32 0.0, %v1466
      %v1468 = vpop.f32.mrb[0].mxu0
      %1469 = vmatprep.mubr.bf16.mxu0 0
      %1470 = vmatmul.mubr.bf16.gmra.mrb[0].mxu0 %v1388
      %v1471 = vpop.f32.mrb[0].mxu0
      %v1472 = vadd.f32 0.0, %v1471
      %v1473 = vpop.f32.mrb[0].mxu0
      %v1474 = vpop.f32.mrb[0].mxu0
      %v1475 = vadd.f32 0.0, %v1474
      %v1476 = vpop.f32.mrb[0].mxu0
      %1477 = vmatprep.mubr.bf16.mxu0 0
      %1478 = vmatmul.mubr.bf16.gmra.mrb[0].mxu0 %v1391
      %v1479 = vpop.f32.mrb[0].mxu0
      %v1480 = vadd.f32 0.0, %v1479
      %v1481 = vpop.f32.mrb[0].mxu0
      %v1482 = vpop.f32.mrb[0].mxu0
      %v1483 = vadd.f32 0.0, %v1482
      %v1484 = vpop.f32.mrb[0].mxu0
      %1485 = vmatprep.mubr.bf16.mxu0 0
      %1486 = vmatmul.mubr.bf16.gmra.mrb[0].mxu0 %v1394
      %v1487 = vpop.f32.mrb[0].mxu0
      %v1488 = vadd.f32 0.0, %v1487
      %v1489 = vpop.f32.mrb[0].mxu0
      %v1490 = vpop.f32.mrb[0].mxu0
      %v1491 = vadd.f32 0.0, %v1490
      %v1492 = vpop.f32.mrb[0].mxu0
      %1493 = vmatprep.mubr.bf16.mxu0 0
      %1494 = vmatmul.mubr.bf16.gmra.mrb[0].mxu0 %v1397
      %v1495 = vpop.f32.mrb[0].mxu0
      %v1496 = vadd.f32 0.0, %v1495
      %v1497 = vpop.f32.mrb[0].mxu0
      %v1498 = vpop.f32.mrb[0].mxu0
      %v1499 = vadd.f32 0.0, %v1498
      %v1500 = vpop.f32.mrb[0].mxu0
      %1501 = vmatprep.mubr.bf16.mxu0 0
      %1502 = vmatmul.mubr.bf16.gmra.mrb[0].mxu0 %v1400
      %v1503 = vpop.f32.mrb[0].mxu0
      %v1504 = vadd.f32 0.0, %v1503
      %v1505 = vpop.f32.mrb[0].mxu0
      %v1506 = vpop.f32.mrb[0].mxu0
      %v1507 = vadd.f32 0.0, %v1506
      %v1508 = vpop.f32.mrb[0].mxu0
      %1509 = vmatprep.mubr.bf16.mxu0 0
      %1510 = vmatmul.mubr.bf16.gmra.mrb[0].mxu0 %v1403
      %v1511 = vpop.f32.mrb[0].mxu0
      %v1512 = vadd.f32 0.0, %v1511
      %v1513 = vpop.f32.mrb[0].mxu0
      %v1514 = vpop.f32.mrb[0].mxu0
      %v1515 = vadd.f32 0.0, %v1514
      %v1516 = vpop.f32.mrb[0].mxu0
      %1517 = vmatprep.mubr.bf16.mxu0 0
      %1518 = vmatmul.mubr.bf16.gmra.mrb[0].mxu0 %v1406
      %v1519 = vpop.f32.mrb[0].mxu0
      %v1520 = vadd.f32 0.0, %v1519
      %v1521 = vpop.f32.mrb[0].mxu0
      %v1522 = vpop.f32.mrb[0].mxu0
      %v1523 = vadd.f32 0.0, %v1522
      %v1524 = vpop.f32.mrb[0].mxu0
      %1525 = vmatprep.mubr.bf16.mxu0 0
      %1526 = vmatmul.mubr.bf16.gmra.mrb[0].mxu0 %v1409
      %v1527 = vpop.f32.mrb[0].mxu0
      %v1528 = vadd.f32 0.0, %v1527
      %v1529 = vpop.f32.mrb[0].mxu0
      %v1530 = vpop.f32.mrb[0].mxu0
      %v1531 = vadd.f32 0.0, %v1530
      %v1532 = vpop.f32.mrb[0].mxu0
      %1533 = vmatprep.mubr.bf16.mxu0 0
      %1534 = vmatmul.mubr.bf16.gmra.mrb[0].mxu0 %v1412
      %v1535 = vpop.f32.mrb[0].mxu0
      %v1536 = vadd.f32 0.0, %v1535
      %v1537 = vpop.f32.mrb[0].mxu0
      %v1538 = vpop.f32.mrb[0].mxu0
      %v1539 = vadd.f32 0.0, %v1538
      %v1540 = vpop.f32.mrb[0].mxu0
      %1541 = vmatprep.mubr.bf16.mxu0 0
      %1542 = vmatmul.mubr.bf16.gmra.mrb[0].mxu0 %v1415
      %v1543 = vpop.f32.mrb[0].mxu0
      %v1544 = vadd.f32 0.0, %v1543
      %v1545 = vpop.f32.mrb[0].mxu0
      %v1546 = vpop.f32.mrb[0].mxu0
      %v1547 = vadd.f32 0.0, %v1546
      %v1548 = vpop.f32.mrb[0].mxu0
      %1549 = vmatprep.mubr.bf16.mxu0 0
      %1550 = vmatmul.mubr.bf16.gmra.mrb[0].mxu0 %v1418
      %v1551 = vpop.f32.mrb[0].mxu0
      %v1552 = vadd.f32 0.0, %v1551
      %v1553 = vpop.f32.mrb[0].mxu0
      %v1554 = vpop.f32.mrb[0].mxu0
      %v1555 = vadd.f32 0.0, %v1554
      %v1556 = vpop.f32.mrb[0].mxu0
      %1557 = vmatprep.mubr.bf16.mxu0 0
      %1558 = vmatmul.mubr.bf16.gmra.mrb[0].mxu0 %v1421
      %v1559 = vpop.f32.mrb[0].mxu0
      %v1560 = vadd.f32 0.0, %v1559
      %v1561 = vpop.f32.mrb[0].mxu0
      %v1562 = vpop.f32.mrb[0].mxu0
      %v1563 = vadd.f32 0.0, %v1562
      %v1564 = vpop.f32.mrb[0].mxu0
      %1565 = vmatprep.mubr.bf16.mxu0 0
      %1566 = vmatmul.mubr.bf16.gmra.mrb[0].mxu0 %v1424
      %v1567 = vpop.f32.mrb[0].mxu0
      %v1568 = vadd.f32 0.0, %v1567
      %v1569 = vpop.f32.mrb[0].mxu0
      %v1570 = vpop.f32.mrb[0].mxu0
      %v1571 = vadd.f32 0.0, %v1570
      %v1572 = vpop.f32.mrb[0].mxu0
      %1573 = vdwg.mxu0
      %v1574 = vadd.f32 %v1312, %v1464
      %v1575 = vadd.f32 %v1313, %v1467
      %v1576 = vadd.f32 %v1314, %v1472
      %v1577 = vadd.f32 %v1315, %v1475
      %v1578 = vadd.f32 %v1316, %v1480
      %v1579 = vadd.f32 %v1317, %v1483
      %v1580 = vadd.f32 %v1318, %v1488
      %v1581 = vadd.f32 %v1319, %v1491
      %v1582 = vadd.f32 %v1320, %v1496
      %v1583 = vadd.f32 %v1321, %v1499
      %v1584 = vadd.f32 %v1322, %v1504
      %v1585 = vadd.f32 %v1323, %v1507
      %v1586 = vadd.f32 %v1324, %v1512
      %v1587 = vadd.f32 %v1325, %v1515
      %v1588 = vadd.f32 %v1326, %v1520
      %v1589 = vadd.f32 %v1327, %v1523
      %v1590 = vadd.f32 %v1328, %v1528
      %v1591 = vadd.f32 %v1329, %v1531
      %v1592 = vadd.f32 %v1330, %v1536
      %v1593 = vadd.f32 %v1331, %v1539
      %v1594 = vadd.f32 %v1332, %v1544
      %v1595 = vadd.f32 %v1333, %v1547
      %v1596 = vadd.f32 %v1334, %v1552
      %v1597 = vadd.f32 %v1335, %v1555
      %v1598 = vadd.f32 %v1336, %v1560
      %v1599 = vadd.f32 %v1337, %v1563
      %v1600 = vadd.f32 %v1338, %v1568
      %v1601 = vadd.f32 %v1339, %v1571
      %v1602 = vld [vmem:[%s1077 + $0x2] sm:$0xff]
      %v1603 = vld [vmem:[%s1077 + $0xa] sm:$0xff]
      %v1604 = vld [vmem:[%s1077 + $0x1a] sm:$0xff]
      %v1605 = vld [vmem:[%s1077 + $0x22] sm:$0xff]
      %v1606 = vld [vmem:[%s1077 + $0x32] sm:$0xff]
      %v1607 = vld [vmem:[%s1077 + $0x3a] sm:$0xff]
      %v1608 = vld [vmem:[%s1077 + $0x4a] sm:$0xff]
      %v1609 = vld [vmem:[%s1077 + $0x52] sm:$0xff]
      %v1610 = vld [vmem:[%s1077 + $0x62] sm:$0xff]
      %v1611 = vld [vmem:[%s1077 + $0x6a] sm:$0xff]
      %v1612 = vld [vmem:[%s1077 + $0x7a] sm:$0xff]
      %v1613 = vld [vmem:[%s1077 + $0x82] sm:$0xff]
      %v1614 = vld [vmem:[%s1077 + $0x92] sm:$0xff]
      %v1615 = vld [vmem:[%s1077 + $0x9a] sm:$0xff]
      %v1616 = vld [vmem:[%s1077 + $0xaa] sm:$0xff]
      %v1617 = vld [vmem:[%s1077 + $0xb2] sm:$0xff]
      %v1618 = vld [vmem:[%s1077 + $0xc2] sm:$0xff]
      %v1619 = vld [vmem:[%s1077 + $0xca] sm:$0xff]
      %v1620 = vld [vmem:[%s1077 + $0xda] sm:$0xff]
      %v1621 = vld [vmem:[%s1077 + $0xe2] sm:$0xff]
      %v1622 = vld [vmem:[%s1077 + $0xf2] sm:$0xff]
      %v1623 = vld [vmem:[%s1077 + $0xfa] sm:$0xff]
      %v1624 = vld [vmem:[%s1077 + $0x10a] sm:$0xff]
      %v1625 = vld [vmem:[%s1077 + $0x112] sm:$0xff]
      %v1626 = vld [vmem:[%s1077 + $0x122] sm:$0xff]
      %v1627 = vld [vmem:[%s1077 + $0x12a] sm:$0xff]
      %v1628 = vld [vmem:[%s1077 + $0x13a] sm:$0xff]
      %v1629 = vld [vmem:[%s1077 + $0x142] sm:$0xff]
      %v1630 = vpack.c.bf16 %v1603, %v1602
      %v1631 = vpack.c.bf16 %v1605, %v1604
      %v1632 = vpack.c.bf16 %v1607, %v1606
      %v1633 = vpack.c.bf16 %v1609, %v1608
      %v1634 = vpack.c.bf16 %v1611, %v1610
      %v1635 = vpack.c.bf16 %v1613, %v1612
      %v1636 = vpack.c.bf16 %v1615, %v1614
      %v1637 = vpack.c.bf16 %v1617, %v1616
      %v1638 = vpack.c.bf16 %v1619, %v1618
      %v1639 = vpack.c.bf16 %v1621, %v1620
      %v1640 = vpack.c.bf16 %v1623, %v1622
      %v1641 = vpack.c.bf16 %v1625, %v1624
      %v1642 = vpack.c.bf16 %v1627, %v1626
      %v1643 = vpack.c.bf16 %v1629, %v1628
      %s1644 = scalar_lea.vmem %s2, 10
      %v1645 = vld [vmem:[%s1644] sm:$0x3]
      %v1647 = vsel %vm326, %v1630, 0
      %v1650 = vsel %vm326, %v1631, 0
      %v1653 = vsel %vm326, %v1632, 0
      %v1656 = vsel %vm326, %v1633, 0
      %v1659 = vsel %vm326, %v1634, 0
      %v1662 = vsel %vm326, %v1635, 0
      %v1665 = vsel %vm326, %v1636, 0
      %v1668 = vsel %vm326, %v1637, 0
      %v1671 = vsel %vm326, %v1638, 0
      %v1674 = vsel %vm326, %v1639, 0
      %v1677 = vsel %vm326, %v1640, 0
      %v1680 = vsel %vm326, %v1641, 0
      %v1683 = vsel %vm326, %v1642, 0
      %v1686 = vsel %vm326, %v1643, 0
      %v1689 = vsel %vm476, %v1645, 0
      %1691 = vmatprep.subr.bf16.mxu0 0
      %1692 = vmatpush1.bf16.msra.mxu0 %v1689
      %1693 = vmatprep.subr.bf16.mxu0 0
      %1694 = vmatpush1.bf16.msra.mxu0 0
      %1695 = vmatprep.subr.bf16.mxu0 0
      %1696 = vmatpush1.bf16.msra.mxu0 0
      %1697 = vmatprep.subr.bf16.mxu0 0
      %1698 = vmatpush1.bf16.msra.mxu0 0
      %1699 = vmatprep.subr.bf16.mxu0 0
      %1700 = vmatpush1.bf16.msra.mxu0 0
      %1701 = vmatprep.subr.bf16.mxu0 0
      %1702 = vmatpush1.bf16.msra.mxu0 0
      %1703 = vmatprep.subr.bf16.mxu0 0
      %1704 = vmatpush1.bf16.msra.mxu0 0
      %1705 = vmatprep.subr.bf16.mxu0 0
      %1706 = vmatpush1.bf16.msra.mxu0 0
      %1707 = vmatprep.subr.bf16.mxu0 0
      %1708 = vmatpush1.bf16.msra.mxu0 0
      %1709 = vmatprep.subr.bf16.mxu0 0
      %1710 = vmatpush1.bf16.msra.mxu0 0
      %1711 = vmatprep.subr.bf16.mxu0 0
      %1712 = vmatpush1.bf16.msra.mxu0 0
      %1713 = vmatprep.subr.bf16.mxu0 0
      %1714 = vmatpush1.bf16.msra.mxu0 0
      %1715 = vmatprep.subr.bf16.mxu0 0
      %1716 = vmatpush1.bf16.msra.mxu0 0
      %1717 = vmatprep.subr.bf16.mxu0 0
      %1718 = vmatpush1.bf16.msra.mxu0 0
      %1719 = vmatprep.subr.bf16.mxu0 0
      %1720 = vmatpush1.bf16.msra.mxu0 0
      %1721 = vmatprep.subr.bf16.mxu0 0
      %1722 = vmatpush1.bf16.msra.mxu0 0
      %1723 = vmatprep.mubr.bf16.mxu0 0
      %1724 = vmatmul.mubr.bf16.gmra.mrb[0].mxu0 %v1647
      %v1725 = vpop.f32.mrb[0].mxu0
      %v1726 = vadd.f32 0.0, %v1725
      %v1727 = vpop.f32.mrb[0].mxu0
      %v1728 = vpop.f32.mrb[0].mxu0
      %v1729 = vadd.f32 0.0, %v1728
      %v1730 = vpop.f32.mrb[0].mxu0
      %1731 = vmatprep.mubr.bf16.mxu0 0
      %1732 = vmatmul.mubr.bf16.gmra.mrb[0].mxu0 %v1650
      %v1733 = vpop.f32.mrb[0].mxu0
      %v1734 = vadd.f32 0.0, %v1733
      %v1735 = vpop.f32.mrb[0].mxu0
      %v1736 = vpop.f32.mrb[0].mxu0
      %v1737 = vadd.f32 0.0, %v1736
      %v1738 = vpop.f32.mrb[0].mxu0
      %1739 = vmatprep.mubr.bf16.mxu0 0
      %1740 = vmatmul.mubr.bf16.gmra.mrb[0].mxu0 %v1653
      %v1741 = vpop.f32.mrb[0].mxu0
      %v1742 = vadd.f32 0.0, %v1741
      %v1743 = vpop.f32.mrb[0].mxu0
      %v1744 = vpop.f32.mrb[0].mxu0
      %v1745 = vadd.f32 0.0, %v1744
      %v1746 = vpop.f32.mrb[0].mxu0
      %1747 = vmatprep.mubr.bf16.mxu0 0
      %1748 = vmatmul.mubr.bf16.gmra.mrb[0].mxu0 %v1656
      %v1749 = vpop.f32.mrb[0].mxu0
      %v1750 = vadd.f32 0.0, %v1749
      %v1751 = vpop.f32.mrb[0].mxu0
      %v1752 = vpop.f32.mrb[0].mxu0
      %v1753 = vadd.f32 0.0, %v1752
      %v1754 = vpop.f32.mrb[0].mxu0
      %1755 = vmatprep.mubr.bf16.mxu0 0
      %1756 = vmatmul.mubr.bf16.gmra.mrb[0].mxu0 %v1659
      %v1757 = vpop.f32.mrb[0].mxu0
      %v1758 = vadd.f32 0.0, %v1757
      %v1759 = vpop.f32.mrb[0].mxu0
      %v1760 = vpop.f32.mrb[0].mxu0
      %v1761 = vadd.f32 0.0, %v1760
      %v1762 = vpop.f32.mrb[0].mxu0
      %1763 = vmatprep.mubr.bf16.mxu0 0
      %1764 = vmatmul.mubr.bf16.gmra.mrb[0].mxu0 %v1662
      %v1765 = vpop.f32.mrb[0].mxu0
      %v1766 = vadd.f32 0.0, %v1765
      %v1767 = vpop.f32.mrb[0].mxu0
      %v1768 = vpop.f32.mrb[0].mxu0
      %v1769 = vadd.f32 0.0, %v1768
      %v1770 = vpop.f32.mrb[0].mxu0
      %1771 = vmatprep.mubr.bf16.mxu0 0
      %1772 = vmatmul.mubr.bf16.gmra.mrb[0].mxu0 %v1665
      %v1773 = vpop.f32.mrb[0].mxu0
      %v1774 = vadd.f32 0.0, %v1773
      %v1775 = vpop.f32.mrb[0].mxu0
      %v1776 = vpop.f32.mrb[0].mxu0
      %v1777 = vadd.f32 0.0, %v1776
      %v1778 = vpop.f32.mrb[0].mxu0
      %1779 = vmatprep.mubr.bf16.mxu0 0
      %1780 = vmatmul.mubr.bf16.gmra.mrb[0].mxu0 %v1668
      %v1781 = vpop.f32.mrb[0].mxu0
      %v1782 = vadd.f32 0.0, %v1781
      %v1783 = vpop.f32.mrb[0].mxu0
      %v1784 = vpop.f32.mrb[0].mxu0
      %v1785 = vadd.f32 0.0, %v1784
      %v1786 = vpop.f32.mrb[0].mxu0
      %1787 = vmatprep.mubr.bf16.mxu0 0
      %1788 = vmatmul.mubr.bf16.gmra.mrb[0].mxu0 %v1671
      %v1789 = vpop.f32.mrb[0].mxu0
      %v1790 = vadd.f32 0.0, %v1789
      %v1791 = vpop.f32.mrb[0].mxu0
      %v1792 = vpop.f32.mrb[0].mxu0
      %v1793 = vadd.f32 0.0, %v1792
      %v1794 = vpop.f32.mrb[0].mxu0
      %1795 = vmatprep.mubr.bf16.mxu0 0
      %1796 = vmatmul.mubr.bf16.gmra.mrb[0].mxu0 %v1674
      %v1797 = vpop.f32.mrb[0].mxu0
      %v1798 = vadd.f32 0.0, %v1797
      %v1799 = vpop.f32.mrb[0].mxu0
      %v1800 = vpop.f32.mrb[0].mxu0
      %v1801 = vadd.f32 0.0, %v1800
      %v1802 = vpop.f32.mrb[0].mxu0
      %1803 = vmatprep.mubr.bf16.mxu0 0
      %1804 = vmatmul.mubr.bf16.gmra.mrb[0].mxu0 %v1677
      %v1805 = vpop.f32.mrb[0].mxu0
      %v1806 = vadd.f32 0.0, %v1805
      %v1807 = vpop.f32.mrb[0].mxu0
      %v1808 = vpop.f32.mrb[0].mxu0
      %v1809 = vadd.f32 0.0, %v1808
      %v1810 = vpop.f32.mrb[0].mxu0
      %1811 = vmatprep.mubr.bf16.mxu0 0
      %1812 = vmatmul.mubr.bf16.gmra.mrb[0].mxu0 %v1680
      %v1813 = vpop.f32.mrb[0].mxu0
      %v1814 = vadd.f32 0.0, %v1813
      %v1815 = vpop.f32.mrb[0].mxu0
      %v1816 = vpop.f32.mrb[0].mxu0
      %v1817 = vadd.f32 0.0, %v1816
      %v1818 = vpop.f32.mrb[0].mxu0
      %1819 = vmatprep.mubr.bf16.mxu0 0
      %1820 = vmatmul.mubr.bf16.gmra.mrb[0].mxu0 %v1683
      %v1821 = vpop.f32.mrb[0].mxu0
      %v1822 = vadd.f32 0.0, %v1821
      %v1823 = vpop.f32.mrb[0].mxu0
      %v1824 = vpop.f32.mrb[0].mxu0
      %v1825 = vadd.f32 0.0, %v1824
      %v1826 = vpop.f32.mrb[0].mxu0
      %1827 = vmatprep.mubr.bf16.mxu0 0
      %1828 = vmatmul.mubr.bf16.gmra.mrb[0].mxu0 %v1686
      %v1829 = vpop.f32.mrb[0].mxu0
      %v1830 = vadd.f32 0.0, %v1829
      %v1831 = vpop.f32.mrb[0].mxu0
      %v1832 = vpop.f32.mrb[0].mxu0
      %v1833 = vadd.f32 0.0, %v1832
      %v1834 = vpop.f32.mrb[0].mxu0
      %1835 = vdwg.mxu0
      %v1836 = vadd.f32 %v1574, %v1726
      %v1837 = vadd.f32 %v1575, %v1729
      %v1838 = vadd.f32 %v1576, %v1734
      %v1839 = vadd.f32 %v1577, %v1737
      %v1840 = vadd.f32 %v1578, %v1742
      %v1841 = vadd.f32 %v1579, %v1745
      %v1842 = vadd.f32 %v1580, %v1750
      %v1843 = vadd.f32 %v1581, %v1753
      %v1844 = vadd.f32 %v1582, %v1758
      %v1845 = vadd.f32 %v1583, %v1761
      %v1846 = vadd.f32 %v1584, %v1766
      %v1847 = vadd.f32 %v1585, %v1769
      %v1848 = vadd.f32 %v1586, %v1774
      %v1849 = vadd.f32 %v1587, %v1777
      %v1850 = vadd.f32 %v1588, %v1782
      %v1851 = vadd.f32 %v1589, %v1785
      %v1852 = vadd.f32 %v1590, %v1790
      %v1853 = vadd.f32 %v1591, %v1793
      %v1854 = vadd.f32 %v1592, %v1798
      %v1855 = vadd.f32 %v1593, %v1801
      %v1856 = vadd.f32 %v1594, %v1806
      %v1857 = vadd.f32 %v1595, %v1809
      %v1858 = vadd.f32 %v1596, %v1814
      %v1859 = vadd.f32 %v1597, %v1817
      %v1860 = vadd.f32 %v1598, %v1822
      %v1861 = vadd.f32 %v1599, %v1825
      %v1862 = vadd.f32 %v1600, %v1830
      %v1863 = vadd.f32 %v1601, %v1833
      %s1864 = scalar_lea.vmem %s286, 48
      %v1865 = vld [vmem:[%s1864] sm:$0xff]
      %v1866 = vld [vmem:[%s1864 + $0x8] sm:$0xff]
      %v1867 = vld [vmem:[%s1864 + $0x18] sm:$0xff]
      %v1868 = vld [vmem:[%s1864 + $0x20] sm:$0xff]
      %v1869 = vld [vmem:[%s1864 + $0x30] sm:$0xff]
      %v1870 = vld [vmem:[%s1864 + $0x38] sm:$0xff]
      %v1871 = vld [vmem:[%s1864 + $0x48] sm:$0xff]
      %v1872 = vld [vmem:[%s1864 + $0x50] sm:$0xff]
      %v1873 = vld [vmem:[%s1864 + $0x60] sm:$0xff]
      %v1874 = vld [vmem:[%s1864 + $0x68] sm:$0xff]
      %v1875 = vld [vmem:[%s1864 + $0x78] sm:$0xff]
      %v1876 = vld [vmem:[%s1864 + $0x80] sm:$0xff]
      %v1877 = vld [vmem:[%s1864 + $0x90] sm:$0xff]
      %v1878 = vld [vmem:[%s1864 + $0x98] sm:$0xff]
      %v1879 = vld [vmem:[%s1864 + $0xa8] sm:$0xff]
      %v1880 = vld [vmem:[%s1864 + $0xb0] sm:$0xff]
      %v1881 = vld [vmem:[%s1864 + $0xc0] sm:$0xff]
      %v1882 = vld [vmem:[%s1864 + $0xc8] sm:$0xff]
      %v1883 = vld [vmem:[%s1864 + $0xd8] sm:$0xff]
      %v1884 = vld [vmem:[%s1864 + $0xe0] sm:$0xff]
      %v1885 = vld [vmem:[%s1864 + $0xf0] sm:$0xff]
      %v1886 = vld [vmem:[%s1864 + $0xf8] sm:$0xff]
      %v1887 = vld [vmem:[%s1864 + $0x108] sm:$0xff]
      %v1888 = vld [vmem:[%s1864 + $0x110] sm:$0xff]
      %v1889 = vld [vmem:[%s1864 + $0x120] sm:$0xff]
      %v1890 = vld [vmem:[%s1864 + $0x128] sm:$0xff]
      %v1891 = vld [vmem:[%s1864 + $0x138] sm:$0xff]
      %v1892 = vld [vmem:[%s1864 + $0x140] sm:$0xff]
      %v1893 = vpack.c.bf16 %v1866, %v1865
      %v1894 = vpack.c.bf16 %v1868, %v1867
      %v1895 = vpack.c.bf16 %v1870, %v1869
      %v1896 = vpack.c.bf16 %v1872, %v1871
      %v1897 = vpack.c.bf16 %v1874, %v1873
      %v1898 = vpack.c.bf16 %v1876, %v1875
      %v1899 = vpack.c.bf16 %v1878, %v1877
      %v1900 = vpack.c.bf16 %v1880, %v1879
      %v1901 = vpack.c.bf16 %v1882, %v1881
      %v1902 = vpack.c.bf16 %v1884, %v1883
      %v1903 = vpack.c.bf16 %v1886, %v1885
      %v1904 = vpack.c.bf16 %v1888, %v1887
      %v1905 = vpack.c.bf16 %v1890, %v1889
      %v1906 = vpack.c.bf16 %v1892, %v1891
      %s1907 = scalar_lea.vmem %s2, 12
      %v1908 = vld [vmem:[%s1907] sm:$0x3]
      %v1910 = vsel %vm326, %v1893, 0
      %v1913 = vsel %vm326, %v1894, 0
      %v1916 = vsel %vm326, %v1895, 0
      %v1919 = vsel %vm326, %v1896, 0
      %v1922 = vsel %vm326, %v1897, 0
      %v1925 = vsel %vm326, %v1898, 0
      %v1928 = vsel %vm326, %v1899, 0
      %v1931 = vsel %vm326, %v1900, 0
      %v1934 = vsel %vm326, %v1901, 0
      %v1937 = vsel %vm326, %v1902, 0
      %v1940 = vsel %vm326, %v1903, 0
      %v1943 = vsel %vm326, %v1904, 0
      %v1946 = vsel %vm326, %v1905, 0
      %v1949 = vsel %vm326, %v1906, 0
      %v1952 = vsel %vm476, %v1908, 0
      %1954 = vmatprep.subr.bf16.mxu0 0
      %1955 = vmatpush1.bf16.msra.mxu0 %v1952
      %1956 = vmatprep.subr.bf16.mxu0 0
      %1957 = vmatpush1.bf16.msra.mxu0 0
      %1958 = vmatprep.subr.bf16.mxu0 0
      %1959 = vmatpush1.bf16.msra.mxu0 0
      %1960 = vmatprep.subr.bf16.mxu0 0
      %1961 = vmatpush1.bf16.msra.mxu0 0
      %1962 = vmatprep.subr.bf16.mxu0 0
      %1963 = vmatpush1.bf16.msra.mxu0 0
      %1964 = vmatprep.subr.bf16.mxu0 0
      %1965 = vmatpush1.bf16.msra.mxu0 0
      %1966 = vmatprep.subr.bf16.mxu0 0
      %1967 = vmatpush1.bf16.msra.mxu0 0
      %1968 = vmatprep.subr.bf16.mxu0 0
      %1969 = vmatpush1.bf16.msra.mxu0 0
      %1970 = vmatprep.subr.bf16.mxu0 0
      %1971 = vmatpush1.bf16.msra.mxu0 0
      %1972 = vmatprep.subr.bf16.mxu0 0
      %1973 = vmatpush1.bf16.msra.mxu0 0
      %1974 = vmatprep.subr.bf16.mxu0 0
      %1975 = vmatpush1.bf16.msra.mxu0 0
      %1976 = vmatprep.subr.bf16.mxu0 0
      %1977 = vmatpush1.bf16.msra.mxu0 0
      %1978 = vmatprep.subr.bf16.mxu0 0
      %1979 = vmatpush1.bf16.msra.mxu0 0
      %1980 = vmatprep.subr.bf16.mxu0 0
      %1981 = vmatpush1.bf16.msra.mxu0 0
      %1982 = vmatprep.subr.bf16.mxu0 0
      %1983 = vmatpush1.bf16.msra.mxu0 0
      %1984 = vmatprep.subr.bf16.mxu0 0
      %1985 = vmatpush1.bf16.msra.mxu0 0
      %1986 = vmatprep.mubr.bf16.mxu0 0
      %1987 = vmatmul.mubr.bf16.gmra.mrb[0].mxu0 %v1910
      %v1988 = vpop.f32.mrb[0].mxu0
      %v1989 = vadd.f32 0.0, %v1988
      %v1990 = vpop.f32.mrb[0].mxu0
      %v1991 = vpop.f32.mrb[0].mxu0
      %v1992 = vadd.f32 0.0, %v1991
      %v1993 = vpop.f32.mrb[0].mxu0
      %1994 = vmatprep.mubr.bf16.mxu0 0
      %1995 = vmatmul.mubr.bf16.gmra.mrb[0].mxu0 %v1913
      %v1996 = vpop.f32.mrb[0].mxu0
      %v1997 = vadd.f32 0.0, %v1996
      %v1998 = vpop.f32.mrb[0].mxu0
      %v1999 = vpop.f32.mrb[0].mxu0
      %v2000 = vadd.f32 0.0, %v1999
      %v2001 = vpop.f32.mrb[0].mxu0
      %2002 = vmatprep.mubr.bf16.mxu0 0
      %2003 = vmatmul.mubr.bf16.gmra.mrb[0].mxu0 %v1916
      %v2004 = vpop.f32.mrb[0].mxu0
      %v2005 = vadd.f32 0.0, %v2004
      %v2006 = vpop.f32.mrb[0].mxu0
      %v2007 = vpop.f32.mrb[0].mxu0
      %v2008 = vadd.f32 0.0, %v2007
      %v2009 = vpop.f32.mrb[0].mxu0
      %2010 = vmatprep.mubr.bf16.mxu0 0
      %2011 = vmatmul.mubr.bf16.gmra.mrb[0].mxu0 %v1919
      %v2012 = vpop.f32.mrb[0].mxu0
      %v2013 = vadd.f32 0.0, %v2012
      %v2014 = vpop.f32.mrb[0].mxu0
      %v2015 = vpop.f32.mrb[0].mxu0
      %v2016 = vadd.f32 0.0, %v2015
      %v2017 = vpop.f32.mrb[0].mxu0
      %2018 = vmatprep.mubr.bf16.mxu0 0
      %2019 = vmatmul.mubr.bf16.gmra.mrb[0].mxu0 %v1922
      %v2020 = vpop.f32.mrb[0].mxu0
      %v2021 = vadd.f32 0.0, %v2020
      %v2022 = vpop.f32.mrb[0].mxu0
      %v2023 = vpop.f32.mrb[0].mxu0
      %v2024 = vadd.f32 0.0, %v2023
      %v2025 = vpop.f32.mrb[0].mxu0
      %2026 = vmatprep.mubr.bf16.mxu0 0
      %2027 = vmatmul.mubr.bf16.gmra.mrb[0].mxu0 %v1925
      %v2028 = vpop.f32.mrb[0].mxu0
      %v2029 = vadd.f32 0.0, %v2028
      %v2030 = vpop.f32.mrb[0].mxu0
      %v2031 = vpop.f32.mrb[0].mxu0
      %v2032 = vadd.f32 0.0, %v2031
      %v2033 = vpop.f32.mrb[0].mxu0
      %2034 = vmatprep.mubr.bf16.mxu0 0
      %2035 = vmatmul.mubr.bf16.gmra.mrb[0].mxu0 %v1928
      %v2036 = vpop.f32.mrb[0].mxu0
      %v2037 = vadd.f32 0.0, %v2036
      %v2038 = vpop.f32.mrb[0].mxu0
      %v2039 = vpop.f32.mrb[0].mxu0
      %v2040 = vadd.f32 0.0, %v2039
      %v2041 = vpop.f32.mrb[0].mxu0
      %2042 = vmatprep.mubr.bf16.mxu0 0
      %2043 = vmatmul.mubr.bf16.gmra.mrb[0].mxu0 %v1931
      %v2044 = vpop.f32.mrb[0].mxu0
      %v2045 = vadd.f32 0.0, %v2044
      %v2046 = vpop.f32.mrb[0].mxu0
      %v2047 = vpop.f32.mrb[0].mxu0
      %v2048 = vadd.f32 0.0, %v2047
      %v2049 = vpop.f32.mrb[0].mxu0
      %2050 = vmatprep.mubr.bf16.mxu0 0
      %2051 = vmatmul.mubr.bf16.gmra.mrb[0].mxu0 %v1934
      %v2052 = vpop.f32.mrb[0].mxu0
      %v2053 = vadd.f32 0.0, %v2052
      %v2054 = vpop.f32.mrb[0].mxu0
      %v2055 = vpop.f32.mrb[0].mxu0
      %v2056 = vadd.f32 0.0, %v2055
      %v2057 = vpop.f32.mrb[0].mxu0
      %2058 = vmatprep.mubr.bf16.mxu0 0
      %2059 = vmatmul.mubr.bf16.gmra.mrb[0].mxu0 %v1937
      %v2060 = vpop.f32.mrb[0].mxu0
      %v2061 = vadd.f32 0.0, %v2060
      %v2062 = vpop.f32.mrb[0].mxu0
      %v2063 = vpop.f32.mrb[0].mxu0
      %v2064 = vadd.f32 0.0, %v2063
      %v2065 = vpop.f32.mrb[0].mxu0
      %2066 = vmatprep.mubr.bf16.mxu0 0
      %2067 = vmatmul.mubr.bf16.gmra.mrb[0].mxu0 %v1940
      %v2068 = vpop.f32.mrb[0].mxu0
      %v2069 = vadd.f32 0.0, %v2068
      %v2070 = vpop.f32.mrb[0].mxu0
      %v2071 = vpop.f32.mrb[0].mxu0
      %v2072 = vadd.f32 0.0, %v2071
      %v2073 = vpop.f32.mrb[0].mxu0
      %2074 = vmatprep.mubr.bf16.mxu0 0
      %2075 = vmatmul.mubr.bf16.gmra.mrb[0].mxu0 %v1943
      %v2076 = vpop.f32.mrb[0].mxu0
      %v2077 = vadd.f32 0.0, %v2076
      %v2078 = vpop.f32.mrb[0].mxu0
      %v2079 = vpop.f32.mrb[0].mxu0
      %v2080 = vadd.f32 0.0, %v2079
      %v2081 = vpop.f32.mrb[0].mxu0
      %2082 = vmatprep.mubr.bf16.mxu0 0
      %2083 = vmatmul.mubr.bf16.gmra.mrb[0].mxu0 %v1946
      %v2084 = vpop.f32.mrb[0].mxu0
      %v2085 = vadd.f32 0.0, %v2084
      %v2086 = vpop.f32.mrb[0].mxu0
      %v2087 = vpop.f32.mrb[0].mxu0
      %v2088 = vadd.f32 0.0, %v2087
      %v2089 = vpop.f32.mrb[0].mxu0
      %2090 = vmatprep.mubr.bf16.mxu0 0
      %2091 = vmatmul.mubr.bf16.gmra.mrb[0].mxu0 %v1949
      %v2092 = vpop.f32.mrb[0].mxu0
      %v2093 = vadd.f32 0.0, %v2092
      %v2094 = vpop.f32.mrb[0].mxu0
      %v2095 = vpop.f32.mrb[0].mxu0
      %v2096 = vadd.f32 0.0, %v2095
      %v2097 = vpop.f32.mrb[0].mxu0
      %2098 = vdwg.mxu0
      %v2099 = vadd.f32 %v1836, %v1989
      %v2100 = vadd.f32 %v1837, %v1992
      %v2101 = vadd.f32 %v1838, %v1997
      %v2102 = vadd.f32 %v1839, %v2000
      %v2103 = vadd.f32 %v1840, %v2005
      %v2104 = vadd.f32 %v1841, %v2008
      %v2105 = vadd.f32 %v1842, %v2013
      %v2106 = vadd.f32 %v1843, %v2016
      %v2107 = vadd.f32 %v1844, %v2021
      %v2108 = vadd.f32 %v1845, %v2024
      %v2109 = vadd.f32 %v1846, %v2029
      %v2110 = vadd.f32 %v1847, %v2032
      %v2111 = vadd.f32 %v1848, %v2037
      %v2112 = vadd.f32 %v1849, %v2040
      %v2113 = vadd.f32 %v1850, %v2045
      %v2114 = vadd.f32 %v1851, %v2048
      %v2115 = vadd.f32 %v1852, %v2053
      %v2116 = vadd.f32 %v1853, %v2056
      %v2117 = vadd.f32 %v1854, %v2061
      %v2118 = vadd.f32 %v1855, %v2064
      %v2119 = vadd.f32 %v1856, %v2069
      %v2120 = vadd.f32 %v1857, %v2072
      %v2121 = vadd.f32 %v1858, %v2077
      %v2122 = vadd.f32 %v1859, %v2080
      %v2123 = vadd.f32 %v1860, %v2085
      %v2124 = vadd.f32 %v1861, %v2088
      %v2125 = vadd.f32 %v1862, %v2093
      %v2126 = vadd.f32 %v1863, %v2096
      %v2127 = vld [vmem:[%s1864 + $0x1] sm:$0xff]
      %v2128 = vld [vmem:[%s1864 + $0x9] sm:$0xff]
      %v2129 = vld [vmem:[%s1864 + $0x19] sm:$0xff]
      %v2130 = vld [vmem:[%s1864 + $0x21] sm:$0xff]
      %v2131 = vld [vmem:[%s1864 + $0x31] sm:$0xff]
      %v2132 = vld [vmem:[%s1864 + $0x39] sm:$0xff]
      %v2133 = vld [vmem:[%s1864 + $0x49] sm:$0xff]
      %v2134 = vld [vmem:[%s1864 + $0x51] sm:$0xff]
      %v2135 = vld [vmem:[%s1864 + $0x61] sm:$0xff]
      %v2136 = vld [vmem:[%s1864 + $0x69] sm:$0xff]
      %v2137 = vld [vmem:[%s1864 + $0x79] sm:$0xff]
      %v2138 = vld [vmem:[%s1864 + $0x81] sm:$0xff]
      %v2139 = vld [vmem:[%s1864 + $0x91] sm:$0xff]
      %v2140 = vld [vmem:[%s1864 + $0x99] sm:$0xff]
      %v2141 = vld [vmem:[%s1864 + $0xa9] sm:$0xff]
      %v2142 = vld [vmem:[%s1864 + $0xb1] sm:$0xff]
      %v2143 = vld [vmem:[%s1864 + $0xc1] sm:$0xff]
      %v2144 = vld [vmem:[%s1864 + $0xc9] sm:$0xff]
      %v2145 = vld [vmem:[%s1864 + $0xd9] sm:$0xff]
      %v2146 = vld [vmem:[%s1864 + $0xe1] sm:$0xff]
      %v2147 = vld [vmem:[%s1864 + $0xf1] sm:$0xff]
      %v2148 = vld [vmem:[%s1864 + $0xf9] sm:$0xff]
      %v2149 = vld [vmem:[%s1864 + $0x109] sm:$0xff]
      %v2150 = vld [vmem:[%s1864 + $0x111] sm:$0xff]
      %v2151 = vld [vmem:[%s1864 + $0x121] sm:$0xff]
      %v2152 = vld [vmem:[%s1864 + $0x129] sm:$0xff]
      %v2153 = vld [vmem:[%s1864 + $0x139] sm:$0xff]
      %v2154 = vld [vmem:[%s1864 + $0x141] sm:$0xff]
      %v2155 = vpack.c.bf16 %v2128, %v2127
      %v2156 = vpack.c.bf16 %v2130, %v2129
      %v2157 = vpack.c.bf16 %v2132, %v2131
      %v2158 = vpack.c.bf16 %v2134, %v2133
      %v2159 = vpack.c.bf16 %v2136, %v2135
      %v2160 = vpack.c.bf16 %v2138, %v2137
      %v2161 = vpack.c.bf16 %v2140, %v2139
      %v2162 = vpack.c.bf16 %v2142, %v2141
      %v2163 = vpack.c.bf16 %v2144, %v2143
      %v2164 = vpack.c.bf16 %v2146, %v2145
      %v2165 = vpack.c.bf16 %v2148, %v2147
      %v2166 = vpack.c.bf16 %v2150, %v2149
      %v2167 = vpack.c.bf16 %v2152, %v2151
      %v2168 = vpack.c.bf16 %v2154, %v2153
      %s2169 = scalar_lea.vmem %s2, 14
      %v2170 = vld [vmem:[%s2169] sm:$0x3]
      %v2172 = vsel %vm326, %v2155, 0
      %v2175 = vsel %vm326, %v2156, 0
      %v2178 = vsel %vm326, %v2157, 0
      %v2181 = vsel %vm326, %v2158, 0
      %v2184 = vsel %vm326, %v2159, 0
      %v2187 = vsel %vm326, %v2160, 0
      %v2190 = vsel %vm326, %v2161, 0
      %v2193 = vsel %vm326, %v2162, 0
      %v2196 = vsel %vm326, %v2163, 0
      %v2199 = vsel %vm326, %v2164, 0
      %v2202 = vsel %vm326, %v2165, 0
      %v2205 = vsel %vm326, %v2166, 0
      %v2208 = vsel %vm326, %v2167, 0
      %v2211 = vsel %vm326, %v2168, 0
      %v2214 = vsel %vm476, %v2170, 0
      %2216 = vmatprep.subr.bf16.mxu0 0
      %2217 = vmatpush1.bf16.msra.mxu0 %v2214
      %2218 = vmatprep.subr.bf16.mxu0 0
      %2219 = vmatpush1.bf16.msra.mxu0 0
      %2220 = vmatprep.subr.bf16.mxu0 0
      %2221 = vmatpush1.bf16.msra.mxu0 0
      %2222 = vmatprep.subr.bf16.mxu0 0
      %2223 = vmatpush1.bf16.msra.mxu0 0
      %2224 = vmatprep.subr.bf16.mxu0 0
      %2225 = vmatpush1.bf16.msra.mxu0 0
      %2226 = vmatprep.subr.bf16.mxu0 0
      %2227 = vmatpush1.bf16.msra.mxu0 0
      %2228 = vmatprep.subr.bf16.mxu0 0
      %2229 = vmatpush1.bf16.msra.mxu0 0
      %2230 = vmatprep.subr.bf16.mxu0 0
      %2231 = vmatpush1.bf16.msra.mxu0 0
      %2232 = vmatprep.subr.bf16.mxu0 0
      %2233 = vmatpush1.bf16.msra.mxu0 0
      %2234 = vmatprep.subr.bf16.mxu0 0
      %2235 = vmatpush1.bf16.msra.mxu0 0
      %2236 = vmatprep.subr.bf16.mxu0 0
      %2237 = vmatpush1.bf16.msra.mxu0 0
      %2238 = vmatprep.subr.bf16.mxu0 0
      %2239 = vmatpush1.bf16.msra.mxu0 0
      %2240 = vmatprep.subr.bf16.mxu0 0
      %2241 = vmatpush1.bf16.msra.mxu0 0
      %2242 = vmatprep.subr.bf16.mxu0 0
      %2243 = vmatpush1.bf16.msra.mxu0 0
      %2244 = vmatprep.subr.bf16.mxu0 0
      %2245 = vmatpush1.bf16.msra.mxu0 0
      %2246 = vmatprep.subr.bf16.mxu0 0
      %2247 = vmatpush1.bf16.msra.mxu0 0
      %2248 = vmatprep.mubr.bf16.mxu0 0
      %2249 = vmatmul.mubr.bf16.gmra.mrb[0].mxu0 %v2172
      %v2250 = vpop.f32.mrb[0].mxu0
      %v2251 = vadd.f32 0.0, %v2250
      %v2252 = vpop.f32.mrb[0].mxu0
      %v2253 = vpop.f32.mrb[0].mxu0
      %v2254 = vadd.f32 0.0, %v2253
      %v2255 = vpop.f32.mrb[0].mxu0
      %2256 = vmatprep.mubr.bf16.mxu0 0
      %2257 = vmatmul.mubr.bf16.gmra.mrb[0].mxu0 %v2175
      %v2258 = vpop.f32.mrb[0].mxu0
      %v2259 = vadd.f32 0.0, %v2258
      %v2260 = vpop.f32.mrb[0].mxu0
      %v2261 = vpop.f32.mrb[0].mxu0
      %v2262 = vadd.f32 0.0, %v2261
      %v2263 = vpop.f32.mrb[0].mxu0
      %2264 = vmatprep.mubr.bf16.mxu0 0
      %2265 = vmatmul.mubr.bf16.gmra.mrb[0].mxu0 %v2178
      %v2266 = vpop.f32.mrb[0].mxu0
      %v2267 = vadd.f32 0.0, %v2266
      %v2268 = vpop.f32.mrb[0].mxu0
      %v2269 = vpop.f32.mrb[0].mxu0
      %v2270 = vadd.f32 0.0, %v2269
      %v2271 = vpop.f32.mrb[0].mxu0
      %2272 = vmatprep.mubr.bf16.mxu0 0
      %2273 = vmatmul.mubr.bf16.gmra.mrb[0].mxu0 %v2181
      %v2274 = vpop.f32.mrb[0].mxu0
      %v2275 = vadd.f32 0.0, %v2274
      %v2276 = vpop.f32.mrb[0].mxu0
      %v2277 = vpop.f32.mrb[0].mxu0
      %v2278 = vadd.f32 0.0, %v2277
      %v2279 = vpop.f32.mrb[0].mxu0
      %2280 = vmatprep.mubr.bf16.mxu0 0
      %2281 = vmatmul.mubr.bf16.gmra.mrb[0].mxu0 %v2184
      %v2282 = vpop.f32.mrb[0].mxu0
      %v2283 = vadd.f32 0.0, %v2282
      %v2284 = vpop.f32.mrb[0].mxu0
      %v2285 = vpop.f32.mrb[0].mxu0
      %v2286 = vadd.f32 0.0, %v2285
      %v2287 = vpop.f32.mrb[0].mxu0
      %2288 = vmatprep.mubr.bf16.mxu0 0
      %2289 = vmatmul.mubr.bf16.gmra.mrb[0].mxu0 %v2187
      %v2290 = vpop.f32.mrb[0].mxu0
      %v2291 = vadd.f32 0.0, %v2290
      %v2292 = vpop.f32.mrb[0].mxu0
      %v2293 = vpop.f32.mrb[0].mxu0
      %v2294 = vadd.f32 0.0, %v2293
      %v2295 = vpop.f32.mrb[0].mxu0
      %2296 = vmatprep.mubr.bf16.mxu0 0
      %2297 = vmatmul.mubr.bf16.gmra.mrb[0].mxu0 %v2190
      %v2298 = vpop.f32.mrb[0].mxu0
      %v2299 = vadd.f32 0.0, %v2298
      %v2300 = vpop.f32.mrb[0].mxu0
      %v2301 = vpop.f32.mrb[0].mxu0
      %v2302 = vadd.f32 0.0, %v2301
      %v2303 = vpop.f32.mrb[0].mxu0
      %2304 = vmatprep.mubr.bf16.mxu0 0
      %2305 = vmatmul.mubr.bf16.gmra.mrb[0].mxu0 %v2193
      %v2306 = vpop.f32.mrb[0].mxu0
      %v2307 = vadd.f32 0.0, %v2306
      %v2308 = vpop.f32.mrb[0].mxu0
      %v2309 = vpop.f32.mrb[0].mxu0
      %v2310 = vadd.f32 0.0, %v2309
      %v2311 = vpop.f32.mrb[0].mxu0
      %2312 = vmatprep.mubr.bf16.mxu0 0
      %2313 = vmatmul.mubr.bf16.gmra.mrb[0].mxu0 %v2196
      %v2314 = vpop.f32.mrb[0].mxu0
      %v2315 = vadd.f32 0.0, %v2314
      %v2316 = vpop.f32.mrb[0].mxu0
      %v2317 = vpop.f32.mrb[0].mxu0
      %v2318 = vadd.f32 0.0, %v2317
      %v2319 = vpop.f32.mrb[0].mxu0
      %2320 = vmatprep.mubr.bf16.mxu0 0
      %2321 = vmatmul.mubr.bf16.gmra.mrb[0].mxu0 %v2199
      %v2322 = vpop.f32.mrb[0].mxu0
      %v2323 = vadd.f32 0.0, %v2322
      %v2324 = vpop.f32.mrb[0].mxu0
      %v2325 = vpop.f32.mrb[0].mxu0
      %v2326 = vadd.f32 0.0, %v2325
      %v2327 = vpop.f32.mrb[0].mxu0
      %2328 = vmatprep.mubr.bf16.mxu0 0
      %2329 = vmatmul.mubr.bf16.gmra.mrb[0].mxu0 %v2202
      %v2330 = vpop.f32.mrb[0].mxu0
      %v2331 = vadd.f32 0.0, %v2330
      %v2332 = vpop.f32.mrb[0].mxu0
      %v2333 = vpop.f32.mrb[0].mxu0
      %v2334 = vadd.f32 0.0, %v2333
      %v2335 = vpop.f32.mrb[0].mxu0
      %2336 = vmatprep.mubr.bf16.mxu0 0
      %2337 = vmatmul.mubr.bf16.gmra.mrb[0].mxu0 %v2205
      %v2338 = vpop.f32.mrb[0].mxu0
      %v2339 = vadd.f32 0.0, %v2338
      %v2340 = vpop.f32.mrb[0].mxu0
      %v2341 = vpop.f32.mrb[0].mxu0
      %v2342 = vadd.f32 0.0, %v2341
      %v2343 = vpop.f32.mrb[0].mxu0
      %2344 = vmatprep.mubr.bf16.mxu0 0
      %2345 = vmatmul.mubr.bf16.gmra.mrb[0].mxu0 %v2208
      %v2346 = vpop.f32.mrb[0].mxu0
      %v2347 = vadd.f32 0.0, %v2346
      %v2348 = vpop.f32.mrb[0].mxu0
      %v2349 = vpop.f32.mrb[0].mxu0
      %v2350 = vadd.f32 0.0, %v2349
      %v2351 = vpop.f32.mrb[0].mxu0
      %2352 = vmatprep.mubr.bf16.mxu0 0
      %2353 = vmatmul.mubr.bf16.gmra.mrb[0].mxu0 %v2211
      %v2354 = vpop.f32.mrb[0].mxu0
      %v2355 = vadd.f32 0.0, %v2354
      %v2356 = vpop.f32.mrb[0].mxu0
      %v2357 = vpop.f32.mrb[0].mxu0
      %v2358 = vadd.f32 0.0, %v2357
      %v2359 = vpop.f32.mrb[0].mxu0
      %2360 = vdwg.mxu0
      %v2361 = vadd.f32 %v2099, %v2251
      %v2362 = vadd.f32 %v2100, %v2254
      %v2363 = vadd.f32 %v2101, %v2259
      %v2364 = vadd.f32 %v2102, %v2262
      %v2365 = vadd.f32 %v2103, %v2267
      %v2366 = vadd.f32 %v2104, %v2270
      %v2367 = vadd.f32 %v2105, %v2275
      %v2368 = vadd.f32 %v2106, %v2278
      %v2369 = vadd.f32 %v2107, %v2283
      %v2370 = vadd.f32 %v2108, %v2286
      %v2371 = vadd.f32 %v2109, %v2291
      %v2372 = vadd.f32 %v2110, %v2294
      %v2373 = vadd.f32 %v2111, %v2299
      %v2374 = vadd.f32 %v2112, %v2302
      %v2375 = vadd.f32 %v2113, %v2307
      %v2376 = vadd.f32 %v2114, %v2310
      %v2377 = vadd.f32 %v2115, %v2315
      %v2378 = vadd.f32 %v2116, %v2318
      %v2379 = vadd.f32 %v2117, %v2323
      %v2380 = vadd.f32 %v2118, %v2326
      %v2381 = vadd.f32 %v2119, %v2331
      %v2382 = vadd.f32 %v2120, %v2334
      %v2383 = vadd.f32 %v2121, %v2339
      %v2384 = vadd.f32 %v2122, %v2342
      %v2385 = vadd.f32 %v2123, %v2347
      %v2386 = vadd.f32 %v2124, %v2350
      %v2387 = vadd.f32 %v2125, %v2355
      %v2388 = vadd.f32 %v2126, %v2358
      %v2389 = vld [vmem:[%s1864 + $0x2] sm:$0xff]
      %v2390 = vld [vmem:[%s1864 + $0xa] sm:$0xff]
      %v2391 = vld [vmem:[%s1864 + $0x1a] sm:$0xff]
      %v2392 = vld [vmem:[%s1864 + $0x22] sm:$0xff]
      %v2393 = vld [vmem:[%s1864 + $0x32] sm:$0xff]
      %v2394 = vld [vmem:[%s1864 + $0x3a] sm:$0xff]
      %v2395 = vld [vmem:[%s1864 + $0x4a] sm:$0xff]
      %v2396 = vld [vmem:[%s1864 + $0x52] sm:$0xff]
      %v2397 = vld [vmem:[%s1864 + $0x62] sm:$0xff]
      %v2398 = vld [vmem:[%s1864 + $0x6a] sm:$0xff]
      %v2399 = vld [vmem:[%s1864 + $0x7a] sm:$0xff]
      %v2400 = vld [vmem:[%s1864 + $0x82] sm:$0xff]
      %v2401 = vld [vmem:[%s1864 + $0x92] sm:$0xff]
      %v2402 = vld [vmem:[%s1864 + $0x9a] sm:$0xff]
      %v2403 = vld [vmem:[%s1864 + $0xaa] sm:$0xff]
      %v2404 = vld [vmem:[%s1864 + $0xb2] sm:$0xff]
      %v2405 = vld [vmem:[%s1864 + $0xc2] sm:$0xff]
      %v2406 = vld [vmem:[%s1864 + $0xca] sm:$0xff]
      %v2407 = vld [vmem:[%s1864 + $0xda] sm:$0xff]
      %v2408 = vld [vmem:[%s1864 + $0xe2] sm:$0xff]
      %v2409 = vld [vmem:[%s1864 + $0xf2] sm:$0xff]
      %v2410 = vld [vmem:[%s1864 + $0xfa] sm:$0xff]
      %v2411 = vld [vmem:[%s1864 + $0x10a] sm:$0xff]
      %v2412 = vld [vmem:[%s1864 + $0x112] sm:$0xff]
      %v2413 = vld [vmem:[%s1864 + $0x122] sm:$0xff]
      %v2414 = vld [vmem:[%s1864 + $0x12a] sm:$0xff]
      %v2415 = vld [vmem:[%s1864 + $0x13a] sm:$0xff]
      %v2416 = vld [vmem:[%s1864 + $0x142] sm:$0xff]
      %v2417 = vpack.c.bf16 %v2390, %v2389
      %v2418 = vpack.c.bf16 %v2392, %v2391
      %v2419 = vpack.c.bf16 %v2394, %v2393
      %v2420 = vpack.c.bf16 %v2396, %v2395
      %v2421 = vpack.c.bf16 %v2398, %v2397
      %v2422 = vpack.c.bf16 %v2400, %v2399
      %v2423 = vpack.c.bf16 %v2402, %v2401
      %v2424 = vpack.c.bf16 %v2404, %v2403
      %v2425 = vpack.c.bf16 %v2406, %v2405
      %v2426 = vpack.c.bf16 %v2408, %v2407
      %v2427 = vpack.c.bf16 %v2410, %v2409
      %v2428 = vpack.c.bf16 %v2412, %v2411
      %v2429 = vpack.c.bf16 %v2414, %v2413
      %v2430 = vpack.c.bf16 %v2416, %v2415
      %s2431 = scalar_lea.vmem %s2, 16
      %v2432 = vld [vmem:[%s2431] sm:$0x3]
      %v2434 = vsel %vm326, %v2417, 0
      %v2437 = vsel %vm326, %v2418, 0
      %v2440 = vsel %vm326, %v2419, 0
      %v2443 = vsel %vm326, %v2420, 0
      %v2446 = vsel %vm326, %v2421, 0
      %v2449 = vsel %vm326, %v2422, 0
      %v2452 = vsel %vm326, %v2423, 0
      %v2455 = vsel %vm326, %v2424, 0
      %v2458 = vsel %vm326, %v2425, 0
      %v2461 = vsel %vm326, %v2426, 0
      %v2464 = vsel %vm326, %v2427, 0
      %v2467 = vsel %vm326, %v2428, 0
      %v2470 = vsel %vm326, %v2429, 0
      %v2473 = vsel %vm326, %v2430, 0
      %v2476 = vsel %vm476, %v2432, 0
      %2478 = vmatprep.subr.bf16.mxu0 0
      %2479 = vmatpush1.bf16.msra.mxu0 %v2476
      %2480 = vmatprep.subr.bf16.mxu0 0
      %2481 = vmatpush1.bf16.msra.mxu0 0
      %2482 = vmatprep.subr.bf16.mxu0 0
      %2483 = vmatpush1.bf16.msra.mxu0 0
      %2484 = vmatprep.subr.bf16.mxu0 0
      %2485 = vmatpush1.bf16.msra.mxu0 0
      %2486 = vmatprep.subr.bf16.mxu0 0
      %2487 = vmatpush1.bf16.msra.mxu0 0
      %2488 = vmatprep.subr.bf16.mxu0 0
      %2489 = vmatpush1.bf16.msra.mxu0 0
      %2490 = vmatprep.subr.bf16.mxu0 0
      %2491 = vmatpush1.bf16.msra.mxu0 0
      %2492 = vmatprep.subr.bf16.mxu0 0
      %2493 = vmatpush1.bf16.msra.mxu0 0
      %2494 = vmatprep.subr.bf16.mxu0 0
      %2495 = vmatpush1.bf16.msra.mxu0 0
      %2496 = vmatprep.subr.bf16.mxu0 0
      %2497 = vmatpush1.bf16.msra.mxu0 0
      %2498 = vmatprep.subr.bf16.mxu0 0
      %2499 = vmatpush1.bf16.msra.mxu0 0
      %2500 = vmatprep.subr.bf16.mxu0 0
      %2501 = vmatpush1.bf16.msra.mxu0 0
      %2502 = vmatprep.subr.bf16.mxu0 0
      %2503 = vmatpush1.bf16.msra.mxu0 0
      %2504 = vmatprep.subr.bf16.mxu0 0
      %2505 = vmatpush1.bf16.msra.mxu0 0
      %2506 = vmatprep.subr.bf16.mxu0 0
      %2507 = vmatpush1.bf16.msra.mxu0 0
      %2508 = vmatprep.subr.bf16.mxu0 0
      %2509 = vmatpush1.bf16.msra.mxu0 0
      %2510 = vmatprep.mubr.bf16.mxu0 0
      %2511 = vmatmul.mubr.bf16.gmra.mrb[0].mxu0 %v2434
      %v2512 = vpop.f32.mrb[0].mxu0
      %v2513 = vadd.f32 0.0, %v2512
      %v2514 = vpop.f32.mrb[0].mxu0
      %v2515 = vpop.f32.mrb[0].mxu0
      %v2516 = vadd.f32 0.0, %v2515
      %v2517 = vpop.f32.mrb[0].mxu0
      %2518 = vmatprep.mubr.bf16.mxu0 0
      %2519 = vmatmul.mubr.bf16.gmra.mrb[0].mxu0 %v2437
      %v2520 = vpop.f32.mrb[0].mxu0
      %v2521 = vadd.f32 0.0, %v2520
      %v2522 = vpop.f32.mrb[0].mxu0
      %v2523 = vpop.f32.mrb[0].mxu0
      %v2524 = vadd.f32 0.0, %v2523
      %v2525 = vpop.f32.mrb[0].mxu0
      %2526 = vmatprep.mubr.bf16.mxu0 0
      %2527 = vmatmul.mubr.bf16.gmra.mrb[0].mxu0 %v2440
      %v2528 = vpop.f32.mrb[0].mxu0
      %v2529 = vadd.f32 0.0, %v2528
      %v2530 = vpop.f32.mrb[0].mxu0
      %v2531 = vpop.f32.mrb[0].mxu0
      %v2532 = vadd.f32 0.0, %v2531
      %v2533 = vpop.f32.mrb[0].mxu0
      %2534 = vmatprep.mubr.bf16.mxu0 0
      %2535 = vmatmul.mubr.bf16.gmra.mrb[0].mxu0 %v2443
      %v2536 = vpop.f32.mrb[0].mxu0
      %v2537 = vadd.f32 0.0, %v2536
      %v2538 = vpop.f32.mrb[0].mxu0
      %v2539 = vpop.f32.mrb[0].mxu0
      %v2540 = vadd.f32 0.0, %v2539
      %v2541 = vpop.f32.mrb[0].mxu0
      %2542 = vmatprep.mubr.bf16.mxu0 0
      %2543 = vmatmul.mubr.bf16.gmra.mrb[0].mxu0 %v2446
      %v2544 = vpop.f32.mrb[0].mxu0
      %v2545 = vadd.f32 0.0, %v2544
      %v2546 = vpop.f32.mrb[0].mxu0
      %v2547 = vpop.f32.mrb[0].mxu0
      %v2548 = vadd.f32 0.0, %v2547
      %v2549 = vpop.f32.mrb[0].mxu0
      %2550 = vmatprep.mubr.bf16.mxu0 0
      %2551 = vmatmul.mubr.bf16.gmra.mrb[0].mxu0 %v2449
      %v2552 = vpop.f32.mrb[0].mxu0
      %v2553 = vadd.f32 0.0, %v2552
      %v2554 = vpop.f32.mrb[0].mxu0
      %v2555 = vpop.f32.mrb[0].mxu0
      %v2556 = vadd.f32 0.0, %v2555
      %v2557 = vpop.f32.mrb[0].mxu0
      %2558 = vmatprep.mubr.bf16.mxu0 0
      %2559 = vmatmul.mubr.bf16.gmra.mrb[0].mxu0 %v2452
      %v2560 = vpop.f32.mrb[0].mxu0
      %v2561 = vadd.f32 0.0, %v2560
      %v2562 = vpop.f32.mrb[0].mxu0
      %v2563 = vpop.f32.mrb[0].mxu0
      %v2564 = vadd.f32 0.0, %v2563
      %v2565 = vpop.f32.mrb[0].mxu0
      %2566 = vmatprep.mubr.bf16.mxu0 0
      %2567 = vmatmul.mubr.bf16.gmra.mrb[0].mxu0 %v2455
      %v2568 = vpop.f32.mrb[0].mxu0
      %v2569 = vadd.f32 0.0, %v2568
      %v2570 = vpop.f32.mrb[0].mxu0
      %v2571 = vpop.f32.mrb[0].mxu0
      %v2572 = vadd.f32 0.0, %v2571
      %v2573 = vpop.f32.mrb[0].mxu0
      %2574 = vmatprep.mubr.bf16.mxu0 0
      %2575 = vmatmul.mubr.bf16.gmra.mrb[0].mxu0 %v2458
      %v2576 = vpop.f32.mrb[0].mxu0
      %v2577 = vadd.f32 0.0, %v2576
      %v2578 = vpop.f32.mrb[0].mxu0
      %v2579 = vpop.f32.mrb[0].mxu0
      %v2580 = vadd.f32 0.0, %v2579
      %v2581 = vpop.f32.mrb[0].mxu0
      %2582 = vmatprep.mubr.bf16.mxu0 0
      %2583 = vmatmul.mubr.bf16.gmra.mrb[0].mxu0 %v2461
      %v2584 = vpop.f32.mrb[0].mxu0
      %v2585 = vadd.f32 0.0, %v2584
      %v2586 = vpop.f32.mrb[0].mxu0
      %v2587 = vpop.f32.mrb[0].mxu0
      %v2588 = vadd.f32 0.0, %v2587
      %v2589 = vpop.f32.mrb[0].mxu0
      %2590 = vmatprep.mubr.bf16.mxu0 0
      %2591 = vmatmul.mubr.bf16.gmra.mrb[0].mxu0 %v2464
      %v2592 = vpop.f32.mrb[0].mxu0
      %v2593 = vadd.f32 0.0, %v2592
      %v2594 = vpop.f32.mrb[0].mxu0
      %v2595 = vpop.f32.mrb[0].mxu0
      %v2596 = vadd.f32 0.0, %v2595
      %v2597 = vpop.f32.mrb[0].mxu0
      %2598 = vmatprep.mubr.bf16.mxu0 0
      %2599 = vmatmul.mubr.bf16.gmra.mrb[0].mxu0 %v2467
      %v2600 = vpop.f32.mrb[0].mxu0
      %v2601 = vadd.f32 0.0, %v2600
      %v2602 = vpop.f32.mrb[0].mxu0
      %v2603 = vpop.f32.mrb[0].mxu0
      %v2604 = vadd.f32 0.0, %v2603
      %v2605 = vpop.f32.mrb[0].mxu0
      %2606 = vmatprep.mubr.bf16.mxu0 0
      %2607 = vmatmul.mubr.bf16.gmra.mrb[0].mxu0 %v2470
      %v2608 = vpop.f32.mrb[0].mxu0
      %v2609 = vadd.f32 0.0, %v2608
      %v2610 = vpop.f32.mrb[0].mxu0
      %v2611 = vpop.f32.mrb[0].mxu0
      %v2612 = vadd.f32 0.0, %v2611
      %v2613 = vpop.f32.mrb[0].mxu0
      %2614 = vmatprep.mubr.bf16.mxu0 0
      %2615 = vmatmul.mubr.bf16.gmra.mrb[0].mxu0 %v2473
      %v2616 = vpop.f32.mrb[0].mxu0
      %v2617 = vadd.f32 0.0, %v2616
      %v2618 = vpop.f32.mrb[0].mxu0
      %v2619 = vpop.f32.mrb[0].mxu0
      %v2620 = vadd.f32 0.0, %v2619
      %v2621 = vpop.f32.mrb[0].mxu0
      %2622 = vdwg.mxu0
      %v2623 = vadd.f32 %v2361, %v2513
      %v2624 = vadd.f32 %v2362, %v2516
      %v2625 = vadd.f32 %v2363, %v2521
      %v2626 = vadd.f32 %v2364, %v2524
      %v2627 = vadd.f32 %v2365, %v2529
      %v2628 = vadd.f32 %v2366, %v2532
      %v2629 = vadd.f32 %v2367, %v2537
      %v2630 = vadd.f32 %v2368, %v2540
      %v2631 = vadd.f32 %v2369, %v2545
      %v2632 = vadd.f32 %v2370, %v2548
      %v2633 = vadd.f32 %v2371, %v2553
      %v2634 = vadd.f32 %v2372, %v2556
      %v2635 = vadd.f32 %v2373, %v2561
      %v2636 = vadd.f32 %v2374, %v2564
      %v2637 = vadd.f32 %v2375, %v2569
      %v2638 = vadd.f32 %v2376, %v2572
      %v2639 = vadd.f32 %v2377, %v2577
      %v2640 = vadd.f32 %v2378, %v2580
      %v2641 = vadd.f32 %v2379, %v2585
      %v2642 = vadd.f32 %v2380, %v2588
      %v2643 = vadd.f32 %v2381, %v2593
      %v2644 = vadd.f32 %v2382, %v2596
      %v2645 = vadd.f32 %v2383, %v2601
      %v2646 = vadd.f32 %v2384, %v2604
      %v2647 = vadd.f32 %v2385, %v2609
      %v2648 = vadd.f32 %v2386, %v2612
      %v2649 = vadd.f32 %v2387, %v2617
      %v2650 = vadd.f32 %v2388, %v2620
      %v2651 = vmax.f32 %v2623, 0.0
      %v2652 = vmax.f32 %v2624, 0.0
      %v2653 = vmax.f32 %v2625, 0.0
      %v2654 = vmax.f32 %v2626, 0.0
      %v2655 = vmax.f32 %v2627, 0.0
      %v2656 = vmax.f32 %v2628, 0.0
      %v2657 = vmax.f32 %v2629, 0.0
      %v2658 = vmax.f32 %v2630, 0.0
      %v2659 = vmax.f32 %v2631, 0.0
      %v2660 = vmax.f32 %v2632, 0.0
      %v2661 = vmax.f32 %v2633, 0.0
      %v2662 = vmax.f32 %v2634, 0.0
      %v2663 = vmax.f32 %v2635, 0.0
      %v2664 = vmax.f32 %v2636, 0.0
      %v2665 = vmax.f32 %v2637, 0.0
      %v2666 = vmax.f32 %v2638, 0.0
      %v2667 = vmax.f32 %v2639, 0.0
      %v2668 = vmax.f32 %v2640, 0.0
      %v2669 = vmax.f32 %v2641, 0.0
      %v2670 = vmax.f32 %v2642, 0.0
      %v2671 = vmax.f32 %v2643, 0.0
      %v2672 = vmax.f32 %v2644, 0.0
      %v2673 = vmax.f32 %v2645, 0.0
      %v2674 = vmax.f32 %v2646, 0.0
      %v2675 = vmax.f32 %v2647, 0.0
      %v2676 = vmax.f32 %v2648, 0.0
      %v2677 = vmax.f32 %v2649, 0.0
      %v2678 = vmax.f32 %v2650, 0.0
      %v2679 = vpack.c.bf16 %v2652, %v2651
      %v2680 = vpack.c.bf16 %v2654, %v2653
      %v2681 = vpack.c.bf16 %v2656, %v2655
      %v2682 = vpack.c.bf16 %v2658, %v2657
      %v2683 = vpack.c.bf16 %v2660, %v2659
      %v2684 = vpack.c.bf16 %v2662, %v2661
      %v2685 = vpack.c.bf16 %v2664, %v2663
      %v2686 = vpack.c.bf16 %v2666, %v2665
      %v2687 = vpack.c.bf16 %v2668, %v2667
      %v2688 = vpack.c.bf16 %v2670, %v2669
      %v2689 = vpack.c.bf16 %v2672, %v2671
      %v2690 = vpack.c.bf16 %v2674, %v2673
      %v2691 = vpack.c.bf16 %v2676, %v2675
      %v2692 = vpack.c.bf16 %v2678, %v2677
      %v2693 = vld [vmem:[%s3] sm:$0x3]
      %v2695 = vsel %vm326, %v2679, 0
      %v2698 = vsel %vm326, %v2680, 0
      %v2701 = vsel %vm326, %v2681, 0
      %v2704 = vsel %vm326, %v2682, 0
      %v2707 = vsel %vm326, %v2683, 0
      %v2710 = vsel %vm326, %v2684, 0
      %v2713 = vsel %vm326, %v2685, 0
      %v2716 = vsel %vm326, %v2686, 0
      %v2719 = vsel %vm326, %v2687, 0
      %v2722 = vsel %vm326, %v2688, 0
      %v2725 = vsel %vm326, %v2689, 0
      %v2728 = vsel %vm326, %v2690, 0
      %v2731 = vsel %vm326, %v2691, 0
      %v2734 = vsel %vm326, %v2692, 0
      %v2737 = vsel %vm476, %v2693, 0
      %2739 = vmatprep.subr.bf16.mxu0 0
      %2740 = vmatpush1.bf16.msra.mxu0 %v2737
      %2741 = vmatprep.subr.bf16.mxu0 0
      %2742 = vmatpush1.bf16.msra.mxu0 0
      %2743 = vmatprep.subr.bf16.mxu0 0
      %2744 = vmatpush1.bf16.msra.mxu0 0
      %2745 = vmatprep.subr.bf16.mxu0 0
      %2746 = vmatpush1.bf16.msra.mxu0 0
      %2747 = vmatprep.subr.bf16.mxu0 0
      %2748 = vmatpush1.bf16.msra.mxu0 0
      %2749 = vmatprep.subr.bf16.mxu0 0
      %2750 = vmatpush1.bf16.msra.mxu0 0
      %2751 = vmatprep.subr.bf16.mxu0 0
      %2752 = vmatpush1.bf16.msra.mxu0 0
      %2753 = vmatprep.subr.bf16.mxu0 0
      %2754 = vmatpush1.bf16.msra.mxu0 0
      %2755 = vmatprep.subr.bf16.mxu0 0
      %2756 = vmatpush1.bf16.msra.mxu0 0
      %2757 = vmatprep.subr.bf16.mxu0 0
      %2758 = vmatpush1.bf16.msra.mxu0 0
      %2759 = vmatprep.subr.bf16.mxu0 0
      %2760 = vmatpush1.bf16.msra.mxu0 0
      %2761 = vmatprep.subr.bf16.mxu0 0
      %2762 = vmatpush1.bf16.msra.mxu0 0
      %2763 = vmatprep.subr.bf16.mxu0 0
      %2764 = vmatpush1.bf16.msra.mxu0 0
      %2765 = vmatprep.subr.bf16.mxu0 0
      %2766 = vmatpush1.bf16.msra.mxu0 0
      %2767 = vmatprep.subr.bf16.mxu0 0
      %2768 = vmatpush1.bf16.msra.mxu0 0
      %2769 = vmatprep.subr.bf16.mxu0 0
      %2770 = vmatpush1.bf16.msra.mxu0 0
      %2771 = vmatprep.mubr.bf16.mxu0 0
      %2772 = vmatmul.mubr.bf16.gmra.mrb[0].mxu0 %v2695
      %v2773 = vpop.f32.mrb[0].mxu0
      %v2774 = vadd.f32 0.0, %v2773
      %v2775 = vpop.f32.mrb[0].mxu0
      %v2776 = vpop.f32.mrb[0].mxu0
      %v2777 = vadd.f32 0.0, %v2776
      %v2778 = vpop.f32.mrb[0].mxu0
      %2779 = vmatprep.mubr.bf16.mxu0 0
      %2780 = vmatmul.mubr.bf16.gmra.mrb[0].mxu0 %v2698
      %v2781 = vpop.f32.mrb[0].mxu0
      %v2782 = vadd.f32 0.0, %v2781
      %v2783 = vpop.f32.mrb[0].mxu0
      %v2784 = vpop.f32.mrb[0].mxu0
      %v2785 = vadd.f32 0.0, %v2784
      %v2786 = vpop.f32.mrb[0].mxu0
      %2787 = vmatprep.mubr.bf16.mxu0 0
      %2788 = vmatmul.mubr.bf16.gmra.mrb[0].mxu0 %v2701
      %v2789 = vpop.f32.mrb[0].mxu0
      %v2790 = vadd.f32 0.0, %v2789
      %v2791 = vpop.f32.mrb[0].mxu0
      %v2792 = vpop.f32.mrb[0].mxu0
      %v2793 = vadd.f32 0.0, %v2792
      %v2794 = vpop.f32.mrb[0].mxu0
      %2795 = vmatprep.mubr.bf16.mxu0 0
      %2796 = vmatmul.mubr.bf16.gmra.mrb[0].mxu0 %v2704
      %v2797 = vpop.f32.mrb[0].mxu0
      %v2798 = vadd.f32 0.0, %v2797
      %v2799 = vpop.f32.mrb[0].mxu0
      %v2800 = vpop.f32.mrb[0].mxu0
      %v2801 = vadd.f32 0.0, %v2800
      %v2802 = vpop.f32.mrb[0].mxu0
      %2803 = vmatprep.mubr.bf16.mxu0 0
      %2804 = vmatmul.mubr.bf16.gmra.mrb[0].mxu0 %v2707
      %v2805 = vpop.f32.mrb[0].mxu0
      %v2806 = vadd.f32 0.0, %v2805
      %v2807 = vpop.f32.mrb[0].mxu0
      %v2808 = vpop.f32.mrb[0].mxu0
      %v2809 = vadd.f32 0.0, %v2808
      %v2810 = vpop.f32.mrb[0].mxu0
      %2811 = vmatprep.mubr.bf16.mxu0 0
      %2812 = vmatmul.mubr.bf16.gmra.mrb[0].mxu0 %v2710
      %v2813 = vpop.f32.mrb[0].mxu0
      %v2814 = vadd.f32 0.0, %v2813
      %v2815 = vpop.f32.mrb[0].mxu0
      %v2816 = vpop.f32.mrb[0].mxu0
      %v2817 = vadd.f32 0.0, %v2816
      %v2818 = vpop.f32.mrb[0].mxu0
      %2819 = vmatprep.mubr.bf16.mxu0 0
      %2820 = vmatmul.mubr.bf16.gmra.mrb[0].mxu0 %v2713
      %v2821 = vpop.f32.mrb[0].mxu0
      %v2822 = vadd.f32 0.0, %v2821
      %v2823 = vpop.f32.mrb[0].mxu0
      %v2824 = vpop.f32.mrb[0].mxu0
      %v2825 = vadd.f32 0.0, %v2824
      %v2826 = vpop.f32.mrb[0].mxu0
      %2827 = vmatprep.mubr.bf16.mxu0 0
      %2828 = vmatmul.mubr.bf16.gmra.mrb[0].mxu0 %v2716
      %v2829 = vpop.f32.mrb[0].mxu0
      %v2830 = vadd.f32 0.0, %v2829
      %v2831 = vpop.f32.mrb[0].mxu0
      %v2832 = vpop.f32.mrb[0].mxu0
      %v2833 = vadd.f32 0.0, %v2832
      %v2834 = vpop.f32.mrb[0].mxu0
      %2835 = vmatprep.mubr.bf16.mxu0 0
      %2836 = vmatmul.mubr.bf16.gmra.mrb[0].mxu0 %v2719
      %v2837 = vpop.f32.mrb[0].mxu0
      %v2838 = vadd.f32 0.0, %v2837
      %v2839 = vpop.f32.mrb[0].mxu0
      %v2840 = vpop.f32.mrb[0].mxu0
      %v2841 = vadd.f32 0.0, %v2840
      %v2842 = vpop.f32.mrb[0].mxu0
      %2843 = vmatprep.mubr.bf16.mxu0 0
      %2844 = vmatmul.mubr.bf16.gmra.mrb[0].mxu0 %v2722
      %v2845 = vpop.f32.mrb[0].mxu0
      %v2846 = vadd.f32 0.0, %v2845
      %v2847 = vpop.f32.mrb[0].mxu0
      %v2848 = vpop.f32.mrb[0].mxu0
      %v2849 = vadd.f32 0.0, %v2848
      %v2850 = vpop.f32.mrb[0].mxu0
      %2851 = vmatprep.mubr.bf16.mxu0 0
      %2852 = vmatmul.mubr.bf16.gmra.mrb[0].mxu0 %v2725
      %v2853 = vpop.f32.mrb[0].mxu0
      %v2854 = vadd.f32 0.0, %v2853
      %v2855 = vpop.f32.mrb[0].mxu0
      %v2856 = vpop.f32.mrb[0].mxu0
      %v2857 = vadd.f32 0.0, %v2856
      %v2858 = vpop.f32.mrb[0].mxu0
      %2859 = vmatprep.mubr.bf16.mxu0 0
      %2860 = vmatmul.mubr.bf16.gmra.mrb[0].mxu0 %v2728
      %v2861 = vpop.f32.mrb[0].mxu0
      %v2862 = vadd.f32 0.0, %v2861
      %v2863 = vpop.f32.mrb[0].mxu0
      %v2864 = vpop.f32.mrb[0].mxu0
      %v2865 = vadd.f32 0.0, %v2864
      %v2866 = vpop.f32.mrb[0].mxu0
      %2867 = vmatprep.mubr.bf16.mxu0 0
      %2868 = vmatmul.mubr.bf16.gmra.mrb[0].mxu0 %v2731
      %v2869 = vpop.f32.mrb[0].mxu0
      %v2870 = vadd.f32 0.0, %v2869
      %v2871 = vpop.f32.mrb[0].mxu0
      %v2872 = vpop.f32.mrb[0].mxu0
      %v2873 = vadd.f32 0.0, %v2872
      %v2874 = vpop.f32.mrb[0].mxu0
      %2875 = vmatprep.mubr.bf16.mxu0 0
      %2876 = vmatmul.mubr.bf16.gmra.mrb[0].mxu0 %v2734
      %v2877 = vpop.f32.mrb[0].mxu0
      %v2878 = vadd.f32 0.0, %v2877
      %v2879 = vpop.f32.mrb[0].mxu0
      %v2880 = vpop.f32.mrb[0].mxu0
      %v2881 = vadd.f32 0.0, %v2880
      %v2882 = vpop.f32.mrb[0].mxu0
      %2883 = vdwg.mxu0
      %v2884 = vadd.f32 %v1340, %v2774
      %v2885 = vadd.f32 %v1341, %v2777
      %v2886 = vadd.f32 %v1342, %v2782
      %v2887 = vadd.f32 %v1343, %v2785
      %v2888 = vadd.f32 %v1344, %v2790
      %v2889 = vadd.f32 %v1345, %v2793
      %v2890 = vadd.f32 %v1346, %v2798
      %v2891 = vadd.f32 %v1347, %v2801
      %v2892 = vadd.f32 %v1348, %v2806
      %v2893 = vadd.f32 %v1349, %v2809
      %v2894 = vadd.f32 %v1350, %v2814
      %v2895 = vadd.f32 %v1351, %v2817
      %v2896 = vadd.f32 %v1352, %v2822
      %v2897 = vadd.f32 %v1353, %v2825
      %v2898 = vadd.f32 %v1354, %v2830
      %v2899 = vadd.f32 %v1355, %v2833
      %v2900 = vadd.f32 %v1356, %v2838
      %v2901 = vadd.f32 %v1357, %v2841
      %v2902 = vadd.f32 %v1358, %v2846
      %v2903 = vadd.f32 %v1359, %v2849
      %v2904 = vadd.f32 %v1360, %v2854
      %v2905 = vadd.f32 %v1361, %v2857
      %v2906 = vadd.f32 %v1362, %v2862
      %v2907 = vadd.f32 %v1363, %v2865
      %v2908 = vadd.f32 %v1364, %v2870
      %v2909 = vadd.f32 %v1365, %v2873
      %v2910 = vadd.f32 %v1366, %v2878
      %v2911 = vadd.f32 %v1367, %v2881
      %2912 = vst.msk [vmem:[%s316] sm:$0xff] %vm326, %v2884
      %2913 = vst.msk [vmem:[%s316 + $0x8] sm:$0xff] %vm326, %v2885
      %2914 = vst.msk [vmem:[%s316 + $0x10] sm:$0xff] %vm326, %v2886
      %2915 = vst.msk [vmem:[%s316 + $0x18] sm:$0xff] %vm326, %v2887
      %2916 = vst.msk [vmem:[%s316 + $0x20] sm:$0xff] %vm326, %v2888
      %2917 = vst.msk [vmem:[%s316 + $0x28] sm:$0xff] %vm326, %v2889
      %2918 = vst.msk [vmem:[%s316 + $0x30] sm:$0xff] %vm326, %v2890
      %2919 = vst.msk [vmem:[%s316 + $0x38] sm:$0xff] %vm326, %v2891
      %2920 = vst.msk [vmem:[%s316 + $0x40] sm:$0xff] %vm326, %v2892
      %2921 = vst.msk [vmem:[%s316 + $0x48] sm:$0xff] %vm326, %v2893
      %2922 = vst.msk [vmem:[%s316 + $0x50] sm:$0xff] %vm326, %v2894
      %2923 = vst.msk [vmem:[%s316 + $0x58] sm:$0xff] %vm326, %v2895
      %2924 = vst.msk [vmem:[%s316 + $0x60] sm:$0xff] %vm326, %v2896
      %2925 = vst.msk [vmem:[%s316 + $0x68] sm:$0xff] %vm326, %v2897
      %2926 = vst.msk [vmem:[%s316 + $0x70] sm:$0xff] %vm326, %v2898
      %2927 = vst.msk [vmem:[%s316 + $0x78] sm:$0xff] %vm326, %v2899
      %2928 = vst.msk [vmem:[%s316 + $0x80] sm:$0xff] %vm326, %v2900
      %2929 = vst.msk [vmem:[%s316 + $0x88] sm:$0xff] %vm326, %v2901
      %2930 = vst.msk [vmem:[%s316 + $0x90] sm:$0xff] %vm326, %v2902
      %2931 = vst.msk [vmem:[%s316 + $0x98] sm:$0xff] %vm326, %v2903
      %2932 = vst.msk [vmem:[%s316 + $0xa0] sm:$0xff] %vm326, %v2904
      %2933 = vst.msk [vmem:[%s316 + $0xa8] sm:$0xff] %vm326, %v2905
      %2934 = vst.msk [vmem:[%s316 + $0xb0] sm:$0xff] %vm326, %v2906
      %2935 = vst.msk [vmem:[%s316 + $0xb8] sm:$0xff] %vm326, %v2907
      %2936 = vst.msk [vmem:[%s316 + $0xc0] sm:$0xff] %vm326, %v2908
      %2937 = vst.msk [vmem:[%s316 + $0xc8] sm:$0xff] %vm326, %v2909
      %2938 = vst.msk [vmem:[%s316 + $0xd0] sm:$0xff] %vm326, %v2910
      %2939 = vst.msk [vmem:[%s316 + $0xd8] sm:$0xff] %vm326, %v2911
      %v2940 = vld [vmem:[#allocation2] sm:$0xff]
      %v2941 = vld [vmem:[#allocation2 + $0x8] sm:$0xff]
      %v2942 = vld [vmem:[#allocation2 + $0x18] sm:$0xff]
      %v2943 = vld [vmem:[#allocation2 + $0x20] sm:$0xff]
      %v2944 = vpack.c.bf16 %v2941, %v2940
      %v2945 = vpack.c.bf16 %v2943, %v2942
      %v2946 = vld [vmem:[%s2] sm:$0x3]
      %v2947 = vld [vmem:[#allocation2 + $0x1] sm:$0xff]
      %v2948 = vld [vmem:[#allocation2 + $0x9] sm:$0xff]
      %v2949 = vld [vmem:[#allocation2 + $0x19] sm:$0xff]
      %v2950 = vld [vmem:[#allocation2 + $0x21] sm:$0xff]
      %v2951 = vpack.c.bf16 %v2948, %v2947
      %v2952 = vpack.c.bf16 %v2950, %v2949
      %v2953 = vld [vmem:[%s432] sm:$0x3]
      %v2955 = vsel %vm326, %v2951, 0
      %v2958 = vsel %vm326, %v2952, 0
      %v2961 = vsel %vm476, %v2953, 0
      %2963 = vmatprep.subr.bf16.mxu0 0
      %2964 = vmatpush1.bf16.msra.mxu0 %v2961
      %2965 = vmatprep.subr.bf16.mxu0 0
      %2966 = vmatpush1.bf16.msra.mxu0 0
      %2967 = vmatprep.subr.bf16.mxu0 0
      %2968 = vmatpush1.bf16.msra.mxu0 0
      %2969 = vmatprep.subr.bf16.mxu0 0
      %2970 = vmatpush1.bf16.msra.mxu0 0
      %2971 = vmatprep.subr.bf16.mxu0 0
      %2972 = vmatpush1.bf16.msra.mxu0 0
      %2973 = vmatprep.subr.bf16.mxu0 0
      %2974 = vmatpush1.bf16.msra.mxu0 0
      %2975 = vmatprep.subr.bf16.mxu0 0
      %2976 = vmatpush1.bf16.msra.mxu0 0
      %2977 = vmatprep.subr.bf16.mxu0 0
      %2978 = vmatpush1.bf16.msra.mxu0 0
      %2979 = vmatprep.subr.bf16.mxu0 0
      %2980 = vmatpush1.bf16.msra.mxu0 0
      %2981 = vmatprep.subr.bf16.mxu0 0
      %2982 = vmatpush1.bf16.msra.mxu0 0
      %2983 = vmatprep.subr.bf16.mxu0 0
      %2984 = vmatpush1.bf16.msra.mxu0 0
      %2985 = vmatprep.subr.bf16.mxu0 0
      %2986 = vmatpush1.bf16.msra.mxu0 0
      %2987 = vmatprep.subr.bf16.mxu0 0
      %2988 = vmatpush1.bf16.msra.mxu0 0
      %2989 = vmatprep.subr.bf16.mxu0 0
      %2990 = vmatpush1.bf16.msra.mxu0 0
      %2991 = vmatprep.subr.bf16.mxu0 0
      %2992 = vmatpush1.bf16.msra.mxu0 0
      %2993 = vmatprep.subr.bf16.mxu0 0
      %2994 = vmatpush1.bf16.msra.mxu0 0
      %2995 = vmatprep.mubr.bf16.mxu0 0
      %2996 = vmatmul.mubr.bf16.gmra.mrb[0].mxu0 %v2955
      %v2997 = vpop.f32.mrb[0].mxu0
      %v2998 = vadd.f32 0.0, %v2997
      %v2999 = vpop.f32.mrb[0].mxu0
      %v3000 = vpop.f32.mrb[0].mxu0
      %v3001 = vadd.f32 0.0, %v3000
      %v3002 = vpop.f32.mrb[0].mxu0
      %3003 = vmatprep.mubr.bf16.mxu0 0
      %3004 = vmatmul.mubr.bf16.gmra.mrb[0].mxu0 %v2958
      %v3005 = vpop.f32.mrb[0].mxu0
      %v3006 = vadd.f32 0.0, %v3005
      %v3007 = vpop.f32.mrb[0].mxu0
      %v3008 = vpop.f32.mrb[0].mxu0
      %v3009 = vadd.f32 0.0, %v3008
      %v3010 = vpop.f32.mrb[0].mxu0
      %3011 = vdwg.mxu0
      %v3013 = vsel %vm326, %v2944, 0
      %v3016 = vsel %vm326, %v2945, 0
      %v3019 = vsel %vm476, %v2946, 0
      %3021 = vmatprep.subr.bf16.mxu0 0
      %3022 = vmatpush1.bf16.msra.mxu0 %v3019
      %3023 = vmatprep.subr.bf16.mxu0 0
      %3024 = vmatpush1.bf16.msra.mxu0 0
      %3025 = vmatprep.subr.bf16.mxu0 0
      %3026 = vmatpush1.bf16.msra.mxu0 0
      %3027 = vmatprep.subr.bf16.mxu0 0
      %3028 = vmatpush1.bf16.msra.mxu0 0
      %3029 = vmatprep.subr.bf16.mxu0 0
      %3030 = vmatpush1.bf16.msra.mxu0 0
      %3031 = vmatprep.subr.bf16.mxu0 0
      %3032 = vmatpush1.bf16.msra.mxu0 0
      %3033 = vmatprep.subr.bf16.mxu0 0
      %3034 = vmatpush1.bf16.msra.mxu0 0
      %3035 = vmatprep.subr.bf16.mxu0 0
      %3036 = vmatpush1.bf16.msra.mxu0 0
      %3037 = vmatprep.subr.bf16.mxu0 0
      %3038 = vmatpush1.bf16.msra.mxu0 0
      %3039 = vmatprep.subr.bf16.mxu0 0
      %3040 = vmatpush1.bf16.msra.mxu0 0
      %3041 = vmatprep.subr.bf16.mxu0 0
      %3042 = vmatpush1.bf16.msra.mxu0 0
      %3043 = vmatprep.subr.bf16.mxu0 0
      %3044 = vmatpush1.bf16.msra.mxu0 0
      %3045 = vmatprep.subr.bf16.mxu0 0
      %3046 = vmatpush1.bf16.msra.mxu0 0
      %3047 = vmatprep.subr.bf16.mxu0 0
      %3048 = vmatpush1.bf16.msra.mxu0 0
      %3049 = vmatprep.subr.bf16.mxu0 0
      %3050 = vmatpush1.bf16.msra.mxu0 0
      %3051 = vmatprep.subr.bf16.mxu0 0
      %3052 = vmatpush1.bf16.msra.mxu0 0
      %3053 = vmatprep.mubr.bf16.mxu0 0
      %3054 = vmatmul.mubr.bf16.gmra.mrb[0].mxu0 %v3013
      %v3055 = vpop.f32.mrb[0].mxu0
      %v3056 = vadd.f32 %v2998, %v3055
      %v3057 = vpop.f32.mrb[0].mxu0
      %v3058 = vpop.f32.mrb[0].mxu0
      %v3059 = vadd.f32 %v3001, %v3058
      %v3060 = vpop.f32.mrb[0].mxu0
      %3061 = vmatprep.mubr.bf16.mxu0 0
      %3062 = vmatmul.mubr.bf16.gmra.mrb[0].mxu0 %v3016
      %v3063 = vpop.f32.mrb[0].mxu0
      %v3064 = vadd.f32 %v3006, %v3063
      %v3065 = vpop.f32.mrb[0].mxu0
      %v3066 = vpop.f32.mrb[0].mxu0
      %v3067 = vadd.f32 %v3009, %v3066
      %v3068 = vpop.f32.mrb[0].mxu0
      %3069 = vdwg.mxu0
      %v3070 = vld [vmem:[#allocation2 + $0x2] sm:$0xff]
      %v3071 = vld [vmem:[#allocation2 + $0xa] sm:$0xff]
      %v3072 = vld [vmem:[#allocation2 + $0x1a] sm:$0xff]
      %v3073 = vld [vmem:[#allocation2 + $0x22] sm:$0xff]
      %v3074 = vpack.c.bf16 %v3071, %v3070
      %v3075 = vpack.c.bf16 %v3073, %v3072
      %v3076 = vld [vmem:[%s857] sm:$0x3]
      %v3078 = vsel %vm326, %v3074, 0
      %v3081 = vsel %vm326, %v3075, 0
      %v3084 = vsel %vm476, %v3076, 0
      %3086 = vmatprep.subr.bf16.mxu0 0
      %3087 = vmatpush1.bf16.msra.mxu0 %v3084
      %3088 = vmatprep.subr.bf16.mxu0 0
      %3089 = vmatpush1.bf16.msra.mxu0 0
      %3090 = vmatprep.subr.bf16.mxu0 0
      %3091 = vmatpush1.bf16.msra.mxu0 0
      %3092 = vmatprep.subr.bf16.mxu0 0
      %3093 = vmatpush1.bf16.msra.mxu0 0
      %3094 = vmatprep.subr.bf16.mxu0 0
      %3095 = vmatpush1.bf16.msra.mxu0 0
      %3096 = vmatprep.subr.bf16.mxu0 0
      %3097 = vmatpush1.bf16.msra.mxu0 0
      %3098 = vmatprep.subr.bf16.mxu0 0
      %3099 = vmatpush1.bf16.msra.mxu0 0
      %3100 = vmatprep.subr.bf16.mxu0 0
      %3101 = vmatpush1.bf16.msra.mxu0 0
      %3102 = vmatprep.subr.bf16.mxu0 0
      %3103 = vmatpush1.bf16.msra.mxu0 0
      %3104 = vmatprep.subr.bf16.mxu0 0
      %3105 = vmatpush1.bf16.msra.mxu0 0
      %3106 = vmatprep.subr.bf16.mxu0 0
      %3107 = vmatpush1.bf16.msra.mxu0 0
      %3108 = vmatprep.subr.bf16.mxu0 0
      %3109 = vmatpush1.bf16.msra.mxu0 0
      %3110 = vmatprep.subr.bf16.mxu0 0
      %3111 = vmatpush1.bf16.msra.mxu0 0
      %3112 = vmatprep.subr.bf16.mxu0 0
      %3113 = vmatpush1.bf16.msra.mxu0 0
      %3114 = vmatprep.subr.bf16.mxu0 0
      %3115 = vmatpush1.bf16.msra.mxu0 0
      %3116 = vmatprep.subr.bf16.mxu0 0
      %3117 = vmatpush1.bf16.msra.mxu0 0
      %3118 = vmatprep.mubr.bf16.mxu0 0
      %3119 = vmatmul.mubr.bf16.gmra.mrb[0].mxu0 %v3078
      %v3120 = vpop.f32.mrb[0].mxu0
      %v3121 = vadd.f32 0.0, %v3120
      %v3122 = vpop.f32.mrb[0].mxu0
      %v3123 = vpop.f32.mrb[0].mxu0
      %v3124 = vadd.f32 0.0, %v3123
      %v3125 = vpop.f32.mrb[0].mxu0
      %3126 = vmatprep.mubr.bf16.mxu0 0
      %3127 = vmatmul.mubr.bf16.gmra.mrb[0].mxu0 %v3081
      %v3128 = vpop.f32.mrb[0].mxu0
      %v3129 = vadd.f32 0.0, %v3128
      %v3130 = vpop.f32.mrb[0].mxu0
      %v3131 = vpop.f32.mrb[0].mxu0
      %v3132 = vadd.f32 0.0, %v3131
      %v3133 = vpop.f32.mrb[0].mxu0
      %3134 = vdwg.mxu0
      %v3135 = vadd.f32 %v3056, %v3121
      %v3136 = vadd.f32 %v3059, %v3124
      %v3137 = vadd.f32 %v3064, %v3129
      %v3138 = vadd.f32 %v3067, %v3132
      %s3139 = scalar_lea.vmem [#allocation2], 24
      %v3140 = vld [vmem:[%s3139] sm:$0xff]
      %v3141 = vld [vmem:[%s3139 + $0x8] sm:$0xff]
      %v3142 = vld [vmem:[%s3139 + $0x18] sm:$0xff]
      %v3143 = vld [vmem:[%s3139 + $0x20] sm:$0xff]
      %v3144 = vpack.c.bf16 %v3141, %v3140
      %v3145 = vpack.c.bf16 %v3143, %v3142
      %v3146 = vld [vmem:[%s1120] sm:$0x3]
      %v3148 = vsel %vm326, %v3144, 0
      %v3151 = vsel %vm326, %v3145, 0
      %v3154 = vsel %vm476, %v3146, 0
      %3156 = vmatprep.subr.bf16.mxu0 0
      %3157 = vmatpush1.bf16.msra.mxu0 %v3154
      %3158 = vmatprep.subr.bf16.mxu0 0
      %3159 = vmatpush1.bf16.msra.mxu0 0
      %3160 = vmatprep.subr.bf16.mxu0 0
      %3161 = vmatpush1.bf16.msra.mxu0 0
      %3162 = vmatprep.subr.bf16.mxu0 0
      %3163 = vmatpush1.bf16.msra.mxu0 0
      %3164 = vmatprep.subr.bf16.mxu0 0
      %3165 = vmatpush1.bf16.msra.mxu0 0
      %3166 = vmatprep.subr.bf16.mxu0 0
      %3167 = vmatpush1.bf16.msra.mxu0 0
      %3168 = vmatprep.subr.bf16.mxu0 0
      %3169 = vmatpush1.bf16.msra.mxu0 0
      %3170 = vmatprep.subr.bf16.mxu0 0
      %3171 = vmatpush1.bf16.msra.mxu0 0
      %3172 = vmatprep.subr.bf16.mxu0 0
      %3173 = vmatpush1.bf16.msra.mxu0 0
      %3174 = vmatprep.subr.bf16.mxu0 0
      %3175 = vmatpush1.bf16.msra.mxu0 0
      %3176 = vmatprep.subr.bf16.mxu0 0
      %3177 = vmatpush1.bf16.msra.mxu0 0
      %3178 = vmatprep.subr.bf16.mxu0 0
      %3179 = vmatpush1.bf16.msra.mxu0 0
      %3180 = vmatprep.subr.bf16.mxu0 0
      %3181 = vmatpush1.bf16.msra.mxu0 0
      %3182 = vmatprep.subr.bf16.mxu0 0
      %3183 = vmatpush1.bf16.msra.mxu0 0
      %3184 = vmatprep.subr.bf16.mxu0 0
      %3185 = vmatpush1.bf16.msra.mxu0 0
      %3186 = vmatprep.subr.bf16.mxu0 0
      %3187 = vmatpush1.bf16.msra.mxu0 0
      %3188 = vmatprep.mubr.bf16.mxu0 0
      %3189 = vmatmul.mubr.bf16.gmra.mrb[0].mxu0 %v3148
      %v3190 = vpop.f32.mrb[0].mxu0
      %v3191 = vadd.f32 0.0, %v3190
      %v3192 = vpop.f32.mrb[0].mxu0
      %v3193 = vpop.f32.mrb[0].mxu0
      %v3194 = vadd.f32 0.0, %v3193
      %v3195 = vpop.f32.mrb[0].mxu0
      %3196 = vmatprep.mubr.bf16.mxu0 0
      %3197 = vmatmul.mubr.bf16.gmra.mrb[0].mxu0 %v3151
      %v3198 = vpop.f32.mrb[0].mxu0
      %v3199 = vadd.f32 0.0, %v3198
      %v3200 = vpop.f32.mrb[0].mxu0
      %v3201 = vpop.f32.mrb[0].mxu0
      %v3202 = vadd.f32 0.0, %v3201
      %v3203 = vpop.f32.mrb[0].mxu0
      %3204 = vdwg.mxu0
      %v3205 = vadd.f32 %v3135, %v3191
      %v3206 = vadd.f32 %v3136, %v3194
      %v3207 = vadd.f32 %v3137, %v3199
      %v3208 = vadd.f32 %v3138, %v3202
      %v3209 = vld [vmem:[%s3139 + $0x1] sm:$0xff]
      %v3210 = vld [vmem:[%s3139 + $0x9] sm:$0xff]
      %v3211 = vld [vmem:[%s3139 + $0x19] sm:$0xff]
      %v3212 = vld [vmem:[%s3139 + $0x21] sm:$0xff]
      %v3213 = vpack.c.bf16 %v3210, %v3209
      %v3214 = vpack.c.bf16 %v3212, %v3211
      %v3215 = vld [vmem:[%s1382] sm:$0x3]
      %v3217 = vsel %vm326, %v3213, 0
      %v3220 = vsel %vm326, %v3214, 0
      %v3223 = vsel %vm476, %v3215, 0
      %3225 = vmatprep.subr.bf16.mxu0 0
      %3226 = vmatpush1.bf16.msra.mxu0 %v3223
      %3227 = vmatprep.subr.bf16.mxu0 0
      %3228 = vmatpush1.bf16.msra.mxu0 0
      %3229 = vmatprep.subr.bf16.mxu0 0
      %3230 = vmatpush1.bf16.msra.mxu0 0
      %3231 = vmatprep.subr.bf16.mxu0 0
      %3232 = vmatpush1.bf16.msra.mxu0 0
      %3233 = vmatprep.subr.bf16.mxu0 0
      %3234 = vmatpush1.bf16.msra.mxu0 0
      %3235 = vmatprep.subr.bf16.mxu0 0
      %3236 = vmatpush1.bf16.msra.mxu0 0
      %3237 = vmatprep.subr.bf16.mxu0 0
      %3238 = vmatpush1.bf16.msra.mxu0 0
      %3239 = vmatprep.subr.bf16.mxu0 0
      %3240 = vmatpush1.bf16.msra.mxu0 0
      %3241 = vmatprep.subr.bf16.mxu0 0
      %3242 = vmatpush1.bf16.msra.mxu0 0
      %3243 = vmatprep.subr.bf16.mxu0 0
      %3244 = vmatpush1.bf16.msra.mxu0 0
      %3245 = vmatprep.subr.bf16.mxu0 0
      %3246 = vmatpush1.bf16.msra.mxu0 0
      %3247 = vmatprep.subr.bf16.mxu0 0
      %3248 = vmatpush1.bf16.msra.mxu0 0
      %3249 = vmatprep.subr.bf16.mxu0 0
      %3250 = vmatpush1.bf16.msra.mxu0 0
      %3251 = vmatprep.subr.bf16.mxu0 0
      %3252 = vmatpush1.bf16.msra.mxu0 0
      %3253 = vmatprep.subr.bf16.mxu0 0
      %3254 = vmatpush1.bf16.msra.mxu0 0
      %3255 = vmatprep.subr.bf16.mxu0 0
      %3256 = vmatpush1.bf16.msra.mxu0 0
      %3257 = vmatprep.mubr.bf16.mxu0 0
      %3258 = vmatmul.mubr.bf16.gmra.mrb[0].mxu0 %v3217
      %v3259 = vpop.f32.mrb[0].mxu0
      %v3260 = vadd.f32 0.0, %v3259
      %v3261 = vpop.f32.mrb[0].mxu0
      %v3262 = vpop.f32.mrb[0].mxu0
      %v3263 = vadd.f32 0.0, %v3262
      %v3264 = vpop.f32.mrb[0].mxu0
      %3265 = vmatprep.mubr.bf16.mxu0 0
      %3266 = vmatmul.mubr.bf16.gmra.mrb[0].mxu0 %v3220
      %v3267 = vpop.f32.mrb[0].mxu0
      %v3268 = vadd.f32 0.0, %v3267
      %v3269 = vpop.f32.mrb[0].mxu0
      %v3270 = vpop.f32.mrb[0].mxu0
      %v3271 = vadd.f32 0.0, %v3270
      %v3272 = vpop.f32.mrb[0].mxu0
      %3273 = vdwg.mxu0
      %v3274 = vadd.f32 %v3205, %v3260
      %v3275 = vadd.f32 %v3206, %v3263
      %v3276 = vadd.f32 %v3207, %v3268
      %v3277 = vadd.f32 %v3208, %v3271
      %v3278 = vld [vmem:[%s3139 + $0x2] sm:$0xff]
      %v3279 = vld [vmem:[%s3139 + $0xa] sm:$0xff]
      %v3280 = vld [vmem:[%s3139 + $0x1a] sm:$0xff]
      %v3281 = vld [vmem:[%s3139 + $0x22] sm:$0xff]
      %v3282 = vpack.c.bf16 %v3279, %v3278
      %v3283 = vpack.c.bf16 %v3281, %v3280
      %v3284 = vld [vmem:[%s1644] sm:$0x3]
      %v3286 = vsel %vm326, %v3282, 0
      %v3289 = vsel %vm326, %v3283, 0
      %v3292 = vsel %vm476, %v3284, 0
      %3294 = vmatprep.subr.bf16.mxu0 0
      %3295 = vmatpush1.bf16.msra.mxu0 %v3292
      %3296 = vmatprep.subr.bf16.mxu0 0
      %3297 = vmatpush1.bf16.msra.mxu0 0
      %3298 = vmatprep.subr.bf16.mxu0 0
      %3299 = vmatpush1.bf16.msra.mxu0 0
      %3300 = vmatprep.subr.bf16.mxu0 0
      %3301 = vmatpush1.bf16.msra.mxu0 0
      %3302 = vmatprep.subr.bf16.mxu0 0
      %3303 = vmatpush1.bf16.msra.mxu0 0
      %3304 = vmatprep.subr.bf16.mxu0 0
      %3305 = vmatpush1.bf16.msra.mxu0 0
      %3306 = vmatprep.subr.bf16.mxu0 0
      %3307 = vmatpush1.bf16.msra.mxu0 0
      %3308 = vmatprep.subr.bf16.mxu0 0
      %3309 = vmatpush1.bf16.msra.mxu0 0
      %3310 = vmatprep.subr.bf16.mxu0 0
      %3311 = vmatpush1.bf16.msra.mxu0 0
      %3312 = vmatprep.subr.bf16.mxu0 0
      %3313 = vmatpush1.bf16.msra.mxu0 0
      %3314 = vmatprep.subr.bf16.mxu0 0
      %3315 = vmatpush1.bf16.msra.mxu0 0
      %3316 = vmatprep.subr.bf16.mxu0 0
      %3317 = vmatpush1.bf16.msra.mxu0 0
      %3318 = vmatprep.subr.bf16.mxu0 0
      %3319 = vmatpush1.bf16.msra.mxu0 0
      %3320 = vmatprep.subr.bf16.mxu0 0
      %3321 = vmatpush1.bf16.msra.mxu0 0
      %3322 = vmatprep.subr.bf16.mxu0 0
      %3323 = vmatpush1.bf16.msra.mxu0 0
      %3324 = vmatprep.subr.bf16.mxu0 0
      %3325 = vmatpush1.bf16.msra.mxu0 0
      %3326 = vmatprep.mubr.bf16.mxu0 0
      %3327 = vmatmul.mubr.bf16.gmra.mrb[0].mxu0 %v3286
      %v3328 = vpop.f32.mrb[0].mxu0
      %v3329 = vadd.f32 0.0, %v3328
      %v3330 = vpop.f32.mrb[0].mxu0
      %v3331 = vpop.f32.mrb[0].mxu0
      %v3332 = vadd.f32 0.0, %v3331
      %v3333 = vpop.f32.mrb[0].mxu0
      %3334 = vmatprep.mubr.bf16.mxu0 0
      %3335 = vmatmul.mubr.bf16.gmra.mrb[0].mxu0 %v3289
      %v3336 = vpop.f32.mrb[0].mxu0
      %v3337 = vadd.f32 0.0, %v3336
      %v3338 = vpop.f32.mrb[0].mxu0
      %v3339 = vpop.f32.mrb[0].mxu0
      %v3340 = vadd.f32 0.0, %v3339
      %v3341 = vpop.f32.mrb[0].mxu0
      %3342 = vdwg.mxu0
      %v3343 = vadd.f32 %v3274, %v3329
      %v3344 = vadd.f32 %v3275, %v3332
      %v3345 = vadd.f32 %v3276, %v3337
      %v3346 = vadd.f32 %v3277, %v3340
      %v3347 = vld [vmem:[%s340] sm:$0xff]
      %v3348 = vld [vmem:[%s340 + $0x8] sm:$0xff]
      %v3349 = vld [vmem:[%s340 + $0x18] sm:$0xff]
      %v3350 = vld [vmem:[%s340 + $0x20] sm:$0xff]
      %v3351 = vpack.c.bf16 %v3348, %v3347
      %v3352 = vpack.c.bf16 %v3350, %v3349
      %v3353 = vld [vmem:[%s1907] sm:$0x3]
      %v3355 = vsel %vm326, %v3351, 0
      %v3358 = vsel %vm326, %v3352, 0
      %v3361 = vsel %vm476, %v3353, 0
      %3363 = vmatprep.subr.bf16.mxu0 0
      %3364 = vmatpush1.bf16.msra.mxu0 %v3361
      %3365 = vmatprep.subr.bf16.mxu0 0
      %3366 = vmatpush1.bf16.msra.mxu0 0
      %3367 = vmatprep.subr.bf16.mxu0 0
      %3368 = vmatpush1.bf16.msra.mxu0 0
      %3369 = vmatprep.subr.bf16.mxu0 0
      %3370 = vmatpush1.bf16.msra.mxu0 0
      %3371 = vmatprep.subr.bf16.mxu0 0
      %3372 = vmatpush1.bf16.msra.mxu0 0
      %3373 = vmatprep.subr.bf16.mxu0 0
      %3374 = vmatpush1.bf16.msra.mxu0 0
      %3375 = vmatprep.subr.bf16.mxu0 0
      %3376 = vmatpush1.bf16.msra.mxu0 0
      %3377 = vmatprep.subr.bf16.mxu0 0
      %3378 = vmatpush1.bf16.msra.mxu0 0
      %3379 = vmatprep.subr.bf16.mxu0 0
      %3380 = vmatpush1.bf16.msra.mxu0 0
      %3381 = vmatprep.subr.bf16.mxu0 0
      %3382 = vmatpush1.bf16.msra.mxu0 0
      %3383 = vmatprep.subr.bf16.mxu0 0
      %3384 = vmatpush1.bf16.msra.mxu0 0
      %3385 = vmatprep.subr.bf16.mxu0 0
      %3386 = vmatpush1.bf16.msra.mxu0 0
      %3387 = vmatprep.subr.bf16.mxu0 0
      %3388 = vmatpush1.bf16.msra.mxu0 0
      %3389 = vmatprep.subr.bf16.mxu0 0
      %3390 = vmatpush1.bf16.msra.mxu0 0
      %3391 = vmatprep.subr.bf16.mxu0 0
      %3392 = vmatpush1.bf16.msra.mxu0 0
      %3393 = vmatprep.subr.bf16.mxu0 0
      %3394 = vmatpush1.bf16.msra.mxu0 0
      %3395 = vmatprep.mubr.bf16.mxu0 0
      %3396 = vmatmul.mubr.bf16.gmra.mrb[0].mxu0 %v3355
      %v3397 = vpop.f32.mrb[0].mxu0
      %v3398 = vadd.f32 0.0, %v3397
      %v3399 = vpop.f32.mrb[0].mxu0
      %v3400 = vpop.f32.mrb[0].mxu0
      %v3401 = vadd.f32 0.0, %v3400
      %v3402 = vpop.f32.mrb[0].mxu0
      %3403 = vmatprep.mubr.bf16.mxu0 0
      %3404 = vmatmul.mubr.bf16.gmra.mrb[0].mxu0 %v3358
      %v3405 = vpop.f32.mrb[0].mxu0
      %v3406 = vadd.f32 0.0, %v3405
      %v3407 = vpop.f32.mrb[0].mxu0
      %v3408 = vpop.f32.mrb[0].mxu0
      %v3409 = vadd.f32 0.0, %v3408
      %v3410 = vpop.f32.mrb[0].mxu0
      %3411 = vdwg.mxu0
      %v3412 = vadd.f32 %v3343, %v3398
      %v3413 = vadd.f32 %v3344, %v3401
      %v3414 = vadd.f32 %v3345, %v3406
      %v3415 = vadd.f32 %v3346, %v3409
      %v3416 = vld [vmem:[%s340 + $0x1] sm:$0xff]
      %v3417 = vld [vmem:[%s340 + $0x9] sm:$0xff]
      %v3418 = vld [vmem:[%s340 + $0x19] sm:$0xff]
      %v3419 = vld [vmem:[%s340 + $0x21] sm:$0xff]
      %v3420 = vpack.c.bf16 %v3417, %v3416
      %v3421 = vpack.c.bf16 %v3419, %v3418
      %v3422 = vld [vmem:[%s2169] sm:$0x3]
      %v3424 = vsel %vm326, %v3420, 0
      %v3427 = vsel %vm326, %v3421, 0
      %v3430 = vsel %vm476, %v3422, 0
      %3432 = vmatprep.subr.bf16.mxu0 0
      %3433 = vmatpush1.bf16.msra.mxu0 %v3430
      %3434 = vmatprep.subr.bf16.mxu0 0
      %3435 = vmatpush1.bf16.msra.mxu0 0
      %3436 = vmatprep.subr.bf16.mxu0 0
      %3437 = vmatpush1.bf16.msra.mxu0 0
      %3438 = vmatprep.subr.bf16.mxu0 0
      %3439 = vmatpush1.bf16.msra.mxu0 0
      %3440 = vmatprep.subr.bf16.mxu0 0
      %3441 = vmatpush1.bf16.msra.mxu0 0
      %3442 = vmatprep.subr.bf16.mxu0 0
      %3443 = vmatpush1.bf16.msra.mxu0 0
      %3444 = vmatprep.subr.bf16.mxu0 0
      %3445 = vmatpush1.bf16.msra.mxu0 0
      %3446 = vmatprep.subr.bf16.mxu0 0
      %3447 = vmatpush1.bf16.msra.mxu0 0
      %3448 = vmatprep.subr.bf16.mxu0 0
      %3449 = vmatpush1.bf16.msra.mxu0 0
      %3450 = vmatprep.subr.bf16.mxu0 0
      %3451 = vmatpush1.bf16.msra.mxu0 0
      %3452 = vmatprep.subr.bf16.mxu0 0
      %3453 = vmatpush1.bf16.msra.mxu0 0
      %3454 = vmatprep.subr.bf16.mxu0 0
      %3455 = vmatpush1.bf16.msra.mxu0 0
      %3456 = vmatprep.subr.bf16.mxu0 0
      %3457 = vmatpush1.bf16.msra.mxu0 0
      %3458 = vmatprep.subr.bf16.mxu0 0
      %3459 = vmatpush1.bf16.msra.mxu0 0
      %3460 = vmatprep.subr.bf16.mxu0 0
      %3461 = vmatpush1.bf16.msra.mxu0 0
      %3462 = vmatprep.subr.bf16.mxu0 0
      %3463 = vmatpush1.bf16.msra.mxu0 0
      %3464 = vmatprep.mubr.bf16.mxu0 0
      %3465 = vmatmul.mubr.bf16.gmra.mrb[0].mxu0 %v3424
      %v3466 = vpop.f32.mrb[0].mxu0
      %v3467 = vadd.f32 0.0, %v3466
      %v3468 = vpop.f32.mrb[0].mxu0
      %v3469 = vpop.f32.mrb[0].mxu0
      %v3470 = vadd.f32 0.0, %v3469
      %v3471 = vpop.f32.mrb[0].mxu0
      %3472 = vmatprep.mubr.bf16.mxu0 0
      %3473 = vmatmul.mubr.bf16.gmra.mrb[0].mxu0 %v3427
      %v3474 = vpop.f32.mrb[0].mxu0
      %v3475 = vadd.f32 0.0, %v3474
      %v3476 = vpop.f32.mrb[0].mxu0
      %v3477 = vpop.f32.mrb[0].mxu0
      %v3478 = vadd.f32 0.0, %v3477
      %v3479 = vpop.f32.mrb[0].mxu0
      %3480 = vdwg.mxu0
      %v3481 = vadd.f32 %v3412, %v3467
      %v3482 = vadd.f32 %v3413, %v3470
      %v3483 = vadd.f32 %v3414, %v3475
      %v3484 = vadd.f32 %v3415, %v3478
      %v3485 = vld [vmem:[%s340 + $0x2] sm:$0xff]
      %v3486 = vld [vmem:[%s340 + $0xa] sm:$0xff]
      %v3487 = vld [vmem:[%s340 + $0x1a] sm:$0xff]
      %v3488 = vld [vmem:[%s340 + $0x22] sm:$0xff]
      %v3489 = vpack.c.bf16 %v3486, %v3485
      %v3490 = vpack.c.bf16 %v3488, %v3487
      %v3491 = vld [vmem:[%s2431] sm:$0x3]
      %v3493 = vsel %vm326, %v3489, 0
      %v3496 = vsel %vm326, %v3490, 0
      %v3499 = vsel %vm476, %v3491, 0
      %3501 = vmatprep.subr.bf16.mxu0 0
      %3502 = vmatpush1.bf16.msra.mxu0 %v3499
      %3503 = vmatprep.subr.bf16.mxu0 0
      %3504 = vmatpush1.bf16.msra.mxu0 0
      %3505 = vmatprep.subr.bf16.mxu0 0
      %3506 = vmatpush1.bf16.msra.mxu0 0
      %3507 = vmatprep.subr.bf16.mxu0 0
      %3508 = vmatpush1.bf16.msra.mxu0 0
      %3509 = vmatprep.subr.bf16.mxu0 0
      %3510 = vmatpush1.bf16.msra.mxu0 0
      %3511 = vmatprep.subr.bf16.mxu0 0
      %3512 = vmatpush1.bf16.msra.mxu0 0
      %3513 = vmatprep.subr.bf16.mxu0 0
      %3514 = vmatpush1.bf16.msra.mxu0 0
      %3515 = vmatprep.subr.bf16.mxu0 0
      %3516 = vmatpush1.bf16.msra.mxu0 0
      %3517 = vmatprep.subr.bf16.mxu0 0
      %3518 = vmatpush1.bf16.msra.mxu0 0
      %3519 = vmatprep.subr.bf16.mxu0 0
      %3520 = vmatpush1.bf16.msra.mxu0 0
      %3521 = vmatprep.subr.bf16.mxu0 0
      %3522 = vmatpush1.bf16.msra.mxu0 0
      %3523 = vmatprep.subr.bf16.mxu0 0
      %3524 = vmatpush1.bf16.msra.mxu0 0
      %3525 = vmatprep.subr.bf16.mxu0 0
      %3526 = vmatpush1.bf16.msra.mxu0 0
      %3527 = vmatprep.subr.bf16.mxu0 0
      %3528 = vmatpush1.bf16.msra.mxu0 0
      %3529 = vmatprep.subr.bf16.mxu0 0
      %3530 = vmatpush1.bf16.msra.mxu0 0
      %3531 = vmatprep.subr.bf16.mxu0 0
      %3532 = vmatpush1.bf16.msra.mxu0 0
      %3533 = vmatprep.mubr.bf16.mxu0 0
      %3534 = vmatmul.mubr.bf16.gmra.mrb[0].mxu0 %v3493
      %v3535 = vpop.f32.mrb[0].mxu0
      %v3536 = vadd.f32 0.0, %v3535
      %v3537 = vpop.f32.mrb[0].mxu0
      %v3538 = vpop.f32.mrb[0].mxu0
      %v3539 = vadd.f32 0.0, %v3538
      %v3540 = vpop.f32.mrb[0].mxu0
      %3541 = vmatprep.mubr.bf16.mxu0 0
      %3542 = vmatmul.mubr.bf16.gmra.mrb[0].mxu0 %v3496
      %v3543 = vpop.f32.mrb[0].mxu0
      %v3544 = vadd.f32 0.0, %v3543
      %v3545 = vpop.f32.mrb[0].mxu0
      %v3546 = vpop.f32.mrb[0].mxu0
      %v3547 = vadd.f32 0.0, %v3546
      %v3548 = vpop.f32.mrb[0].mxu0
      %3549 = vdwg.mxu0
      %v3550 = vadd.f32 %v3481, %v3536
      %v3551 = vadd.f32 %v3482, %v3539
      %v3552 = vadd.f32 %v3483, %v3544
      %v3553 = vadd.f32 %v3484, %v3547
      %v3554 = vmax.f32 %v3550, 0.0
      %v3555 = vmax.f32 %v3551, 0.0
      %v3556 = vmax.f32 %v3552, 0.0
      %v3557 = vmax.f32 %v3553, 0.0
      %v3558 = vpack.c.bf16 %v3555, %v3554
      %v3559 = vpack.c.bf16 %v3557, %v3556
      %v3560 = vld [vmem:[%s3] sm:$0x3]
      %v3562 = vsel %vm326, %v3558, 0
      %v3565 = vsel %vm326, %v3559, 0
      %v3568 = vsel %vm476, %v3560, 0
      %3570 = vmatprep.subr.bf16.mxu0 0
      %3571 = vmatpush1.bf16.msra.mxu0 %v3568
      %3572 = vmatprep.subr.bf16.mxu0 0
      %3573 = vmatpush1.bf16.msra.mxu0 0
      %3574 = vmatprep.subr.bf16.mxu0 0
      %3575 = vmatpush1.bf16.msra.mxu0 0
      %3576 = vmatprep.subr.bf16.mxu0 0
      %3577 = vmatpush1.bf16.msra.mxu0 0
      %3578 = vmatprep.subr.bf16.mxu0 0
      %3579 = vmatpush1.bf16.msra.mxu0 0
      %3580 = vmatprep.subr.bf16.mxu0 0
      %3581 = vmatpush1.bf16.msra.mxu0 0
      %3582 = vmatprep.subr.bf16.mxu0 0
      %3583 = vmatpush1.bf16.msra.mxu0 0
      %3584 = vmatprep.subr.bf16.mxu0 0
      %3585 = vmatpush1.bf16.msra.mxu0 0
      %3586 = vmatprep.subr.bf16.mxu0 0
      %3587 = vmatpush1.bf16.msra.mxu0 0
      %3588 = vmatprep.subr.bf16.mxu0 0
      %3589 = vmatpush1.bf16.msra.mxu0 0
      %3590 = vmatprep.subr.bf16.mxu0 0
      %3591 = vmatpush1.bf16.msra.mxu0 0
      %3592 = vmatprep.subr.bf16.mxu0 0
      %3593 = vmatpush1.bf16.msra.mxu0 0
      %3594 = vmatprep.subr.bf16.mxu0 0
      %3595 = vmatpush1.bf16.msra.mxu0 0
      %3596 = vmatprep.subr.bf16.mxu0 0
      %3597 = vmatpush1.bf16.msra.mxu0 0
      %3598 = vmatprep.subr.bf16.mxu0 0
      %3599 = vmatpush1.bf16.msra.mxu0 0
      %3600 = vmatprep.subr.bf16.mxu0 0
      %3601 = vmatpush1.bf16.msra.mxu0 0
      %3602 = vmatprep.mubr.bf16.mxu0 0
      %3603 = vmatmul.mubr.bf16.gmra.mrb[0].mxu0 %v3562
      %v3604 = vpop.f32.mrb[0].mxu0
      %v3605 = vadd.f32 0.0, %v3604
      %v3606 = vpop.f32.mrb[0].mxu0
      %v3607 = vpop.f32.mrb[0].mxu0
      %v3608 = vadd.f32 0.0, %v3607
      %v3609 = vpop.f32.mrb[0].mxu0
      %3610 = vmatprep.mubr.bf16.mxu0 0
      %3611 = vmatmul.mubr.bf16.gmra.mrb[0].mxu0 %v3565
      %v3612 = vpop.f32.mrb[0].mxu0
      %v3613 = vadd.f32 0.0, %v3612
      %v3614 = vpop.f32.mrb[0].mxu0
      %v3615 = vpop.f32.mrb[0].mxu0
      %v3616 = vadd.f32 0.0, %v3615
      %v3617 = vpop.f32.mrb[0].mxu0
      %3618 = vdwg.mxu0
      %v3619 = vadd.f32 %v3209, %v3605
      %v3620 = vadd.f32 %v3210, %v3608
      %v3621 = vadd.f32 %v3211, %v3613
      %v3622 = vadd.f32 %v3212, %v3616
      %3623 = vst.msk [vmem:[%s316 + $0xe0] sm:$0xff] %vm326, %v3619
      %3624 = vst.msk [vmem:[%s316 + $0xe8] sm:$0xff] %vm326, %v3620
      %3625 = vst.msk [vmem:[%s316 + $0xf0] sm:$0xff] %vm326, %v3621
      %3626 = vst.msk [vmem:[%s316 + $0xf8] sm:$0xff] %vm326, %v3622
      %s3627 = smul.u32 32, %s20
      %p3628 = scmp.lt.s32.totalorder %s19, 1
      %s3629 = scalar_select %p3628, %s19, 1
      %p3630 = scmp.lt.s32.totalorder %s3627, 31
      %s3631 = scalar_select %p3630, %s3627, 31
      %s3632 = smul.addr %s3629, 32
      %s3633 = sadd.s32 %s3631, %s3632
      %s3634 = smul.addr %s3633, 8
      %s3635 = scalar_lea.vmem %s4, %s3634
      // Predicated region
      $region37: #{tpu_custom_call.1} parent=35 // pred_check
        %p3636 = pneg %p149
      $region38: #{tpu_custom_call.1} parent=35 // pred_check_branch
        %3638 = sbr.rel (%p3636) target = $region40
      $region39: #{tpu_custom_call.1} parent=35 // pred_region
        %s3639 = smul.u32 32, %s20
      $region40: #{tpu_custom_call.1} parent=35 // pred_fallthru
        _
    $region36: #{tpu_custom_call.1} parent=5 // pred_fallthru
      _
    %p3640 = scmp.le.s32.totalorder 2, %s10
    // Predicated region
    $region41: #{tpu_custom_call.1} parent=5 // pred_check
      %p3641 = pneg %p3640
    $region42: #{tpu_custom_call.1} parent=5 // pred_check_branch
      %3643 = sbr.rel (%p3641) target = $region44
    $region43: #{tpu_custom_call.1} parent=5 // pred_region
      %s3644 = ssub.s32 %s10, 2
      // Predicated region
      $region45: #{tpu_custom_call.1} parent=43 // pred_check
        %p3645 = pneg %p155
      $region46: #{tpu_custom_call.1} parent=43 // pred_check_branch
        %3647 = sbr.rel (%p3645) target = $region48
      $region47: #{tpu_custom_call.1} parent=43 // pred_region
        %s3648 = smul.u32 32, %s22
        %p3649 = scmp.lt.s32.totalorder %s21, 1
        %s3650 = scalar_select %p3649, %s21, 1
        %p3651 = scmp.lt.s32.totalorder %s3648, 31
        %s3652 = scalar_select %p3651, %s3648, 31
        %s3653 = smul.addr %s3650, 32
        %s3654 = sadd.s32 %s3652, %s3653
        %s3655 = smul.addr %s3654, 8
        %s3656 = scalar_lea.vmem %s4, %s3655
      $region48: #{tpu_custom_call.1} parent=43 // pred_fallthru
        _
    $region44: #{tpu_custom_call.1} parent=5 // pred_fallthru
      _
  $region6: #{tpu_custom_call.1} parent=0 // loop_footer
    %s14 = sadd.s32 1, %s10
  $region7: #{tpu_custom_call.1} parent=0 // loop_footer_branch
    %9 = sbr.rel target = $region3
  $region8: #{tpu_custom_call.1} parent=0 // loop_exit
    _

</llo_original>
